<compile_context>
chip_gen: v5e
topology: v5e:2x2
jax: 0.10.0
libtpu: 0.0.40
codegen_flags: <defaults>
</compile_context>

<pallas_src>
import jax
import jax.numpy as jnp
from jax.experimental import pallas as pl
from jax.experimental.pallas import tpu as pltpu

BN_EPS = 1e-5
_LANE = 128


def _round_up(n, m):
    return ((n + m - 1) // m) * m


def _vmem_budget():
    """(tile working-set budget, scoped VMEM limit) derived from the chip's VMEM size."""
    try:
        cap = int(pltpu.get_tpu_info().vmem_capacity_bytes)
    except Exception:
        cap = 64 * 1024 * 1024                 # conservative fallback (v7x physical VMEM)
    limit = min(cap * 3 // 4, 100 * 1024 * 1024)   # ~96 MiB on v5e/v6e, 48 MiB on v7x
    return (limit * 3) // 5, limit


def _conv_row_tile(hp, wp, ci, co, budget):
    """Largest row tile TH dividing hp whose conv working set fits the VMEM budget."""
    fixed = 2 * 9 * ci * co * 2                      # double-buffered bf16 weights
    per_row = (2 * wp * ci * 2                       # input tile (double-buffered, bf16)
               + 2 * wp * co * 2                     # z output tile (double-buffered, bf16)
               + (wp + 2) * ci * 2                   # window scratch row (bf16)
               + wp * ci * 2                         # shifted-patch temporary (bf16)
               + 2 * wp * co * 4)                    # f32 accumulator + headroom
    avail = max(budget - fixed, per_row)
    th = int(max(1, min(hp, avail // per_row)))
    while hp % th:
        th -= 1
    return th


def _affine_row_tile(hp, wp, cp, cout, budget):
    per_row = 2 * wp * cp * 2 + 2 * wp * cout * 4 + wp * cp * 4
    th = int(max(1, min(hp, budget // max(per_row, 1))))
    while hp % th:
        th -= 1
    return th


# ---------------------------------------------------------------------------
# Kernel: [optional fused BN-affine + ReLU prologue] -> 3x3 conv
#         -> bf16 conv output + per-tile BN partial statistics.
# ---------------------------------------------------------------------------
def _make_conv_kernel(TH, Wp, Ci, Co, nT, apply_prologue):
    def kernel(xm_ref, xt_ref, xb_ref, w_ref, sc_ref, sh_ref, z_ref, st_ref, win_ref):
        t = pl.program_id(1)

        def prologue(v):
            if apply_prologue:               # previous layer's BN affine + ReLU, f32 math
                return jnp.maximum(v.astype(jnp.float32) * sc_ref[...] + sh_ref[...],
                                   0.0).astype(jnp.bfloat16)
            return v                         # conv1 input is already bf16: no f32 round trip

        # Conv zero-padding columns (only 2 columns rewritten per step; scratch is
        # per-core under "parallel" semantics so a once-per-grid init is unsafe).
        zero_col = jnp.zeros((TH + 2, 1, Ci), jnp.bfloat16)
        win_ref[pl.ds(0, TH + 2), pl.ds(0, 1), :] = zero_col
        win_ref[pl.ds(0, TH + 2), pl.ds(Wp + 1, 1), :] = zero_col

        # Interior rows: fused prologue (conv2) or straight bf16 copy (conv1).
        win_ref[pl.ds(1, TH), pl.ds(1, Wp), :] = prologue(xm_ref[...])

        # Halo rows: real data inside the image, zeros (conv padding) at the edges;
        # the prologue is skipped entirely on rows that are masked anyway.
        zero_row = jnp.zeros((1, Wp, Ci), jnp.bfloat16)

        @pl.when(t > 0)
        def _():
            win_ref[pl.ds(0, 1), pl.ds(1, Wp), :] = prologue(xt_ref[...])

        @pl.when(t == 0)
        def _():
            win_ref[pl.ds(0, 1), pl.ds(1, Wp), :] = zero_row

        @pl.when(t < nT - 1)
        def _():
            win_ref[pl.ds(TH + 1, 1), pl.ds(1, Wp), :] = prologue(xb_ref[...])

        @pl.when(t == nT - 1)
        def _():
            win_ref[pl.ds(TH + 1, 1), pl.ds(1, Wp), :] = zero_row

        # 3x3 conv: 9 flattened (TH*Wp, Ci) x (Ci, Co) MXU dots with f32 accumulation.
        acc = jnp.zeros((TH * Wp, Co), jnp.float32)
        for ky in range(3):
            for kx in range(3):
                patch = win_ref[pl.ds(ky, TH), pl.ds(kx, Wp), :]       # (TH, Wp, Ci) bf16
                acc = acc + jnp.dot(patch.reshape(TH * Wp, Ci),
                                    w_ref[3 * ky + kx],
                                    preferred_element_type=jnp.float32)

        z_ref[...] = acc.reshape(TH, Wp, Co).astype(jnp.bfloat16)      # lane-dense bf16 store
        st_ref[pl.ds(0, 1), :] = jnp.sum(acc, axis=0, keepdims=True)         # per-tile sum
        st_ref[pl.ds(1, 1), :] = jnp.sum(acc * acc, axis=0, keepdims=True)   # per-tile sumsq

    return kernel


def _conv3x3_bn_stats(x, w, scale, shift, apply_prologue, budget, vmem_limit):
    """x: (B, Hp, Wp, Ci) NHWC bf16; w: (9, Ci, Co) bf16; scale/shift: (Ci,) f32.
    Returns z (B, Hp, Wp, Co) bf16 pre-BN conv output and per-row-tile stats
    (B, nT, 2, Co) f32 (sum, sumsq)."""
    B, Hp, Wp, Ci = x.shape
    Co = w.shape[-1]
    TH = _conv_row_tile(Hp, Wp, Ci, Co, budget)
    nT = Hp // TH

    sc = scale.reshape(1, 1, Ci).astype(jnp.float32)
    sh = shift.reshape(1, 1, Ci).astype(jnp.float32)
    kernel = _make_conv_kernel(TH, Wp, Ci, Co, nT, apply_prologue)

    in_specs = [
        # main row tile (full W, full C -> satisfies the (8,128) block rule via full dims)
        pl.BlockSpec((None, TH, Wp, Ci), lambda b, t: (b, t, 0, 0)),
        # 1-row halo above / below (clamped; masked to the conv zero padding in-kernel)
        pl.BlockSpec((None, 1, Wp, Ci),
                     lambda b, t: (b, jnp.maximum(t * TH - 1, 0), 0, 0)),
        pl.BlockSpec((None, 1, Wp, Ci),
                     lambda b, t: (b, jnp.minimum((t + 1) * TH, Hp - 1), 0, 0)),
        # weights + prologue affine params, resident across the grid.
        # TODO(synk): single-buffer the grid-invariant weight slab (pipeline_mode) for the
        # deep blocks on v7x; left at the default buffering here for lowering safety.
        pl.BlockSpec((9, Ci, Co), lambda b, t: (0, 0, 0)),
        pl.BlockSpec((1, 1, Ci), lambda b, t: (0, 0, 0)),
        pl.BlockSpec((1, 1, Ci), lambda b, t: (0, 0, 0)),
    ]
    out_specs = (
        pl.BlockSpec((None, TH, Wp, Co), lambda b, t: (b, t, 0, 0)),
        pl.BlockSpec((None, None, 2, Co), lambda b, t: (b, t, 0, 0)),
    )
    out_shape = (
        jax.ShapeDtypeStruct((B, Hp, Wp, Co), jnp.bfloat16),
        jax.ShapeDtypeStruct((B, nT, 2, Co), jnp.float32),
    )
    # TODO(synk): when nT*B is small (deep blocks) add a Co-tile grid axis so both v7x
    # TensorCores stay busy; unnecessary at these test shapes.
    z, st = pl.pallas_call(
        kernel,
        grid=(B, nT),
        in_specs=in_specs,
        out_specs=out_specs,
        out_shape=out_shape,
        scratch_shapes=[pltpu.VMEM((TH + 2, Wp + 2, Ci), jnp.bfloat16)],
        compiler_params=pltpu.CompilerParams(
            dimension_semantics=("parallel", "parallel"),
            vmem_limit_bytes=vmem_limit),
    )(x, x, x, w, sc, sh)
    return z, st


# ---------------------------------------------------------------------------
# Kernel: final BN affine + ReLU (pass 2 of the last BatchNorm), channel-unpad fused.
# ---------------------------------------------------------------------------
def _make_affine_kernel(cout):
    def kernel(z_ref, sc_ref, sh_ref, o_ref):
        z = z_ref[...][..., :cout].astype(jnp.float32)
        o_ref[...] = jnp.maximum(z * sc_ref[...] + sh_ref[...], 0.0)
    return kernel


def _affine_relu(z, scale, shift, cout, budget, vmem_limit):
    B, Hp, Wp, Cp = z.shape
    TH = _affine_row_tile(Hp, Wp, Cp, cout, budget)
    nT = Hp // TH
    sc = scale[:cout].reshape(1, 1, cout).astype(jnp.float32)
    sh = shift[:cout].reshape(1, 1, cout).astype(jnp.float32)
    return pl.pallas_call(
        _make_affine_kernel(cout),
        grid=(B, nT),
        in_specs=[
            pl.BlockSpec((None, TH, Wp, Cp), lambda b, t: (b, t, 0, 0)),
            pl.BlockSpec((1, 1, cout), lambda b, t: (0, 0, 0)),
            pl.BlockSpec((1, 1, cout), lambda b, t: (0, 0, 0)),
        ],
        out_specs=pl.BlockSpec((None, TH, Wp, cout), lambda b, t: (b, t, 0, 0)),
        out_shape=jax.ShapeDtypeStruct((B, Hp, Wp, cout), jnp.float32),
        compiler_params=pltpu.CompilerParams(
            dimension_semantics=("parallel", "parallel"),
            vmem_limit_bytes=vmem_limit),
    )(z, sc, sh)


# ---------------------------------------------------------------------------
# Wrapper-level glue (layout only) + BN statistic combination.
# ---------------------------------------------------------------------------
def _finalize_bn(st, hw, gamma, beta):
    """Combine per-tile (sum, sumsq) into BN scale/shift via Chan's parallel formula."""
    B, nT = st.shape[0], st.shape[1]
    n_t = hw // nT                                   # pixels per tile
    N = B * hw
    s = st[:, :, 0, :]                               # (B, nT, Co)
    q = st[:, :, 1, :]
    mean_t = s / n_t
    m2_t = q - n_t * mean_t * mean_t                 # within-tile M2
    mean = jnp.sum(s, axis=(0, 1)) / N
    m2 = jnp.sum(m2_t, axis=(0, 1)) + n_t * jnp.sum((mean_t - mean) ** 2, axis=(0, 1))
    var = jnp.maximum(m2 / N, 0.0)                   # biased variance (matches torch BN)
    scale = gamma * jax.lax.rsqrt(var + BN_EPS)
    shift = beta - mean * scale
    return scale, shift


def _pad_weights(w_hwio, ci_pad, co_pad):
    kh, kw, ci, co = w_hwio.shape
    w = jnp.zeros((kh * kw, ci_pad, co_pad), jnp.float32)
    w = w.at[:, :ci, :co].set(w_hwio.reshape(kh * kw, ci, co))
    return w.astype(jnp.bfloat16)


def _pad_channels(v, c_pad):
    return jnp.zeros((c_pad,), jnp.float32).at[:v.shape[0]].set(v.astype(jnp.float32))


def down_forward(params, x_nchw):
    """Pallas Down.forward: (B, Cin, H, W) -> (B, Cout, H//2, W//2)."""
    B, Cin, H, W = x_nchw.shape
    assert H % 2 == 0 and W % 2 == 0
    Hp, Wp = H // 2, W // 2
    Cmid = params["w1"].shape[-1]
    Cout = params["w2"].shape[-1]
    Cin_p = _round_up(Cin, _LANE)
    C1p = _round_up(Cmid, _LANE)
    C2p = _round_up(Cout, _LANE)
    budget, vmem_limit = _vmem_budget()

    # MaxPool2d(2) in NCHW first (4x fewer bytes than transposing at full resolution),
    # then NCHW -> NHWC, lane-pad the channel axis, and cast bf16 for the MXU.
    # TODO(synk): the 2x2 max-pool could be fused into conv1's in-kernel prologue with a
    # full-resolution halo load to remove this XLA pass entirely.
    pooled = jax.lax.reduce_window(x_nchw, -jnp.inf, jax.lax.max,
                                   (1, 1, 2, 2), (1, 1, 2, 2), "VALID")
    pooled = jnp.transpose(pooled, (0, 2, 3, 1))
    pooled = jnp.pad(pooled, ((0, 0), (0, 0), (0, 0), (0, Cin_p - Cin)))
    pooled = pooled.astype(jnp.bfloat16)                        # (B, Hp, Wp, Cin_p)

    w1 = _pad_weights(params["w1"], Cin_p, C1p)                 # (9, Cin_p, C1p) bf16
    w2 = _pad_weights(params["w2"], C1p, C2p)                   # (9, C1p, C2p) bf16
    g1, bt1 = _pad_channels(params["g1"], C1p), _pad_channels(params["bt1"], C1p)
    g2, bt2 = _pad_channels(params["g2"], C2p), _pad_channels(params["bt2"], C2p)
    # NOTE: conv biases b1/b2 are not applied in the kernels - training-mode BatchNorm
    # subtracts the per-channel mean immediately after the conv, so they cancel exactly.

    dummy = jnp.zeros((Cin_p,), jnp.float32)

    # conv1 (+ partial BN stats); prologue = identity (input already bf16).
    z1, st1 = _conv3x3_bn_stats(pooled, w1, dummy, dummy, False, budget, vmem_limit)
    sc1, sh1 = _finalize_bn(st1, Hp * Wp, g1, bt1)

    # conv2 (+ partial BN stats); BN1 affine + ReLU fused as the in-kernel prologue,
    # so y1 never round-trips HBM.
    z2, st2 = _conv3x3_bn_stats(z1, w2, sc1, sh1, True, budget, vmem_limit)
    sc2, sh2 = _finalize_bn(st2, Hp * Wp, g2, bt2)

    # final BN2 affine + ReLU (pass 2) with the channel-unpad fused into its out_spec;
    # only the real Cout channels are transposed back to NCHW.
    # TODO(synk): keep NHWC between UNet blocks to drop this transpose entirely.
    y2 = _affine_relu(z2, sc2, sh2, Cout, budget, vmem_limit)   # (B, Hp, Wp, Cout) f32
    return jnp.transpose(y2, (0, 3, 1, 2))


# ---------------------------------------------------------------------------
# Pure-JAX reference (in-script verification only)
# ---------------------------------------------------------------------------
def down_reference(params, x_nchw):
    pooled = jax.lax.reduce_window(x_nchw, -jnp.inf, jax.lax.max,
                                   (1, 1, 2, 2), (1, 1, 2, 2), "VALID")

    def conv_bn_relu(x, w_hwio, b, g, bt):
        w_oihw = jnp.transpose(w_hwio, (3, 2, 0, 1))
        z = jax.lax.conv_general_dilated(
            x, w_oihw, (1, 1), "SAME",
            dimension_numbers=("NCHW", "OIHW", "NCHW"),
            precision=jax.lax.Precision.HIGHEST) + b.reshape(1, -1, 1, 1)
        mu = jnp.mean(z, axis=(0, 2, 3), keepdims=True)
        var = jnp.mean((z - mu) ** 2, axis=(0, 2, 3), keepdims=True)
        zn = (z - mu) * jax.lax.rsqrt(var + BN_EPS) * g.reshape(1, -1, 1, 1) + bt.reshape(1, -1, 1, 1)
        return jnp.maximum(zn, 0.0)

    h = conv_bn_relu(pooled, params["w1"], params["b1"], params["g1"], params["bt1"])
    return conv_bn_relu(h, params["w2"], params["b2"], params["g2"], params["bt2"])


# ---------------------------------------------------------------------------
if __name__ == "__main__":
    B, Cin, H, W = 2, 4, 16, 16
    Cout = 8
    Cmid = Cout          # DoubleConv default: mid_channels = out_channels

    key = jax.random.PRNGKey(0)
    ks = jax.random.split(key, 9)

    def bf16_repr(a):    # bf16-representable test data -> tight comparison vs f32 reference
        return a.astype(jnp.bfloat16).astype(jnp.float32)

    x = bf16_repr(jax.random.normal(ks[0], (B, Cin, H, W), jnp.float32))
    params = {
        # conv weights stored HWIO: (3, 3, Cin, Cout)
        "w1": bf16_repr(0.2 * jax.random.normal(ks[1], (3, 3, Cin, Cmid), jnp.float32)),
        "b1": 0.1 * jax.random.normal(ks[2], (Cmid,), jnp.float32),
        "g1": 1.0 + 0.1 * jax.random.normal(ks[3], (Cmid,), jnp.float32),
        "bt1": 0.1 * jax.random.normal(ks[4], (Cmid,), jnp.float32),
        "w2": bf16_repr(0.2 * jax.random.normal(ks[5], (3, 3, Cmid, Cout), jnp.float32)),
        "b2": 0.1 * jax.random.normal(ks[6], (Cout,), jnp.float32),
        "g2": 1.0 + 0.1 * jax.random.normal(ks[7], (Cout,), jnp.float32),
        "bt2": 0.1 * jax.random.normal(ks[8], (Cout,), jnp.float32),
    }
    # TODO(synk): training-mode BatchNorm also updates running_mean/running_var buffers as
    # a side effect; that stateful update does not affect the forward output and is not modeled.

    out = jax.block_until_ready(jax.jit(down_forward)(params, x))
    ref = jax.block_until_ready(down_reference(params, x))

    assert out.shape == (B, Cout, H // 2, W // 2), out.shape
    assert bool(jnp.all(jnp.isfinite(out)))
    # Tolerance covers the bf16 storage of z1/z2 and bf16 activations feeding the MXU.
    err = float(jnp.max(jnp.abs(out - ref)))
    assert bool(jnp.allclose(out, ref, atol=3e-2, rtol=3e-2)), f"mismatch, max abs diff = {err}"

    print("KERNEL_OK")
</pallas_src>

<mosaic_0001>
module attributes {stable_mosaic.version = 11 : i64} {
  func.func @kernel(%arg0: i32, %arg1: i32, %arg2: memref<1x8x8x128xbf16, #tpu.memory_space<vmem>>, %arg3: memref<1x1x8x128xbf16, #tpu.memory_space<vmem>>, %arg4: memref<1x1x8x128xbf16, #tpu.memory_space<vmem>>, %arg5: memref<9x128x128xbf16, #tpu.memory_space<vmem>>, %arg6: memref<1x1x128xf32, #tpu.memory_space<vmem>>, %arg7: memref<1x1x128xf32, #tpu.memory_space<vmem>>, %arg8: memref<1x8x8x128xbf16, #tpu.memory_space<vmem>>, %arg9: memref<1x1x2x128xf32, #tpu.memory_space<vmem>>, %arg10: memref<10x10x128xbf16, #tpu.memory_space<vmem>>) attributes {dimension_semantics = [#tpu.dimension_semantics<parallel>, #tpu.dimension_semantics<parallel>], iteration_bounds = array<i64: 2, 1>, scalar_prefetch = 0 : i64, scratch_operands = 1 : i64, tpu.core_type = #tpu.core_type<tc>, window_params = [{transform_indices = @transform_0, window_bounds = array<i64: 1, 8, 8, 128>}, {transform_indices = @transform_1, window_bounds = array<i64: 1, 1, 8, 128>}, {transform_indices = @transform_2, window_bounds = array<i64: 1, 1, 8, 128>}, {pipeline_mode = #tpu.pipeline_mode<synchronous>, transform_indices = @transform_3, window_bounds = array<i64: 9, 128, 128>}, {pipeline_mode = #tpu.pipeline_mode<synchronous>, transform_indices = @transform_4, window_bounds = array<i64: 1, 1, 128>}, {pipeline_mode = #tpu.pipeline_mode<synchronous>, transform_indices = @transform_5, window_bounds = array<i64: 1, 1, 128>}, {transform_indices = @transform_6, window_bounds = array<i64: 1, 8, 8, 128>}, {transform_indices = @transform_7, window_bounds = array<i64: 1, 1, 2, 128>}]} {
    %cst = arith.constant 0.000000e+00 : bf16
    %0 = vector.broadcast %cst : bf16 to vector<10x1x128xbf16>
    %c0 = arith.constant 0 : index
    %c0_0 = arith.constant 0 : index
    %c0_1 = arith.constant 0 : index
    %1 = vector.load %arg10[%c0, %c0_0, %c0_1] : memref<10x10x128xbf16, #tpu.memory_space<vmem>>, vector<10x1x128xbf16>
    tpu.vector_store %arg10[%c0, %c0_0, %c0_1], %0 {strides = array<i32>} : memref<10x10x128xbf16, #tpu.memory_space<vmem>>, vector<10x1x128xbf16>,
    %c0_2 = arith.constant 0 : index
    %c9 = arith.constant 9 : index
    %c0_3 = arith.constant 0 : index
    %2 = vector.load %arg10[%c0_2, %c9, %c0_3] : memref<10x10x128xbf16, #tpu.memory_space<vmem>>, vector<10x1x128xbf16>
    tpu.vector_store %arg10[%c0_2, %c9, %c0_3], %0 {strides = array<i32>} : memref<10x10x128xbf16, #tpu.memory_space<vmem>>, vector<10x1x128xbf16>,
    %c0_4 = arith.constant 0 : index
    %c0_5 = arith.constant 0 : index
    %c0_6 = arith.constant 0 : index
    %c0_7 = arith.constant 0 : index
    %3 = vector.load %arg2[%c0_4, %c0_5, %c0_6, %c0_7] : memref<1x8x8x128xbf16, #tpu.memory_space<vmem>>, vector<1x8x8x128xbf16>
    %4 = vector.shape_cast %3 : vector<1x8x8x128xbf16> to vector<8x8x128xbf16>
    %c1 = arith.constant 1 : index
    %c1_8 = arith.constant 1 : index
    %c0_9 = arith.constant 0 : index
    %5 = vector.load %arg10[%c1, %c1_8, %c0_9] : memref<10x10x128xbf16, #tpu.memory_space<vmem>>, vector<8x8x128xbf16>
    tpu.vector_store %arg10[%c1, %c1_8, %c0_9], %4 {strides = array<i32>} : memref<10x10x128xbf16, #tpu.memory_space<vmem>>, vector<8x8x128xbf16>,
    %cst_10 = arith.constant 0.000000e+00 : bf16
    %6 = vector.broadcast %cst_10 : bf16 to vector<1x8x128xbf16>
    %c0_i32 = arith.constant 0 : i32
    %7 = arith.cmpi sgt, %arg1, %c0_i32 : i32
    %8 = arith.extui %7 : i1 to i32
    %c0_i32_11 = arith.constant 0 : i32
    %9 = arith.cmpi ne, %8, %c0_i32_11 : i32
    scf.if %9 {
      %c0_89 = arith.constant 0 : index
      %c0_90 = arith.constant 0 : index
      %c0_91 = arith.constant 0 : index
      %c0_92 = arith.constant 0 : index
      %90 = vector.load %arg3[%c0_89, %c0_90, %c0_91, %c0_92] : memref<1x1x8x128xbf16, #tpu.memory_space<vmem>>, vector<1x1x8x128xbf16>
      %91 = vector.shape_cast %90 : vector<1x1x8x128xbf16> to vector<1x8x128xbf16>
      %c0_93 = arith.constant 0 : index
      %c1_94 = arith.constant 1 : index
      %c0_95 = arith.constant 0 : index
      %92 = vector.load %arg10[%c0_93, %c1_94, %c0_95] : memref<10x10x128xbf16, #tpu.memory_space<vmem>>, vector<1x8x128xbf16>
      tpu.vector_store %arg10[%c0_93, %c1_94, %c0_95], %91 {strides = array<i32>} : memref<10x10x128xbf16, #tpu.memory_space<vmem>>, vector<1x8x128xbf16>,
    } else {
    }
    %c0_i32_12 = arith.constant 0 : i32
    %10 = arith.cmpi eq, %arg1, %c0_i32_12 : i32
    %11 = arith.extui %10 : i1 to i32
    %c0_i32_13 = arith.constant 0 : i32
    %12 = arith.cmpi ne, %11, %c0_i32_13 : i32
    scf.if %12 {
      %c0_89 = arith.constant 0 : index
      %c1_90 = arith.constant 1 : index
      %c0_91 = arith.constant 0 : index
      %90 = vector.load %arg10[%c0_89, %c1_90, %c0_91] : memref<10x10x128xbf16, #tpu.memory_space<vmem>>, vector<1x8x128xbf16>
      tpu.vector_store %arg10[%c0_89, %c1_90, %c0_91], %6 {strides = array<i32>} : memref<10x10x128xbf16, #tpu.memory_space<vmem>>, vector<1x8x128xbf16>,
    } else {
    }
    %c0_i32_14 = arith.constant 0 : i32
    %13 = arith.cmpi slt, %arg1, %c0_i32_14 : i32
    %14 = arith.extui %13 : i1 to i32
    %c0_i32_15 = arith.constant 0 : i32
    %15 = arith.cmpi ne, %14, %c0_i32_15 : i32
    scf.if %15 {
      %c0_89 = arith.constant 0 : index
      %c0_90 = arith.constant 0 : index
      %c0_91 = arith.constant 0 : index
      %c0_92 = arith.constant 0 : index
      %90 = vector.load %arg4[%c0_89, %c0_90, %c0_91, %c0_92] : memref<1x1x8x128xbf16, #tpu.memory_space<vmem>>, vector<1x1x8x128xbf16>
      %91 = vector.shape_cast %90 : vector<1x1x8x128xbf16> to vector<1x8x128xbf16>
      %c9_93 = arith.constant 9 : index
      %c1_94 = arith.constant 1 : index
      %c0_95 = arith.constant 0 : index
      %92 = vector.load %arg10[%c9_93, %c1_94, %c0_95] : memref<10x10x128xbf16, #tpu.memory_space<vmem>>, vector<1x8x128xbf16>
      tpu.vector_store %arg10[%c9_93, %c1_94, %c0_95], %91 {strides = array<i32>} : memref<10x10x128xbf16, #tpu.memory_space<vmem>>, vector<1x8x128xbf16>,
    } else {
    }
    %c0_i32_16 = arith.constant 0 : i32
    %16 = arith.cmpi eq, %arg1, %c0_i32_16 : i32
    %17 = arith.extui %16 : i1 to i32
    %c0_i32_17 = arith.constant 0 : i32
    %18 = arith.cmpi ne, %17, %c0_i32_17 : i32
    scf.if %18 {
      %c9_89 = arith.constant 9 : index
      %c1_90 = arith.constant 1 : index
      %c0_91 = arith.constant 0 : index
      %90 = vector.load %arg10[%c9_89, %c1_90, %c0_91] : memref<10x10x128xbf16, #tpu.memory_space<vmem>>, vector<1x8x128xbf16>
      tpu.vector_store %arg10[%c9_89, %c1_90, %c0_91], %6 {strides = array<i32>} : memref<10x10x128xbf16, #tpu.memory_space<vmem>>, vector<1x8x128xbf16>,
    } else {
    }
    %cst_18 = arith.constant 0.000000e+00 : f32
    %19 = vector.broadcast %cst_18 : f32 to vector<64x128xf32>
    %c0_19 = arith.constant 0 : index
    %c0_20 = arith.constant 0 : index
    %c0_21 = arith.constant 0 : index
    %20 = vector.load %arg10[%c0_19, %c0_20, %c0_21] : memref<10x10x128xbf16, #tpu.memory_space<vmem>>, vector<8x8x128xbf16>
    %21 = vector.shape_cast %20 : vector<8x8x128xbf16> to vector<64x128xbf16>
    %c0_22 = arith.constant 0 : index
    %c0_23 = arith.constant 0 : index
    %c0_24 = arith.constant 0 : index
    %22 = vector.load %arg5[%c0_22, %c0_23, %c0_24] : memref<9x128x128xbf16, #tpu.memory_space<vmem>>, vector<1x128x128xbf16>
    %23 = vector.shape_cast %22 : vector<1x128x128xbf16> to vector<128x128xbf16>
    %cst_25 = arith.constant dense<0.000000e+00> : vector<64x128xf32>
    %24 = tpu.matmul %21, %23, %cst_25 {dimension_numbers = #tpu.dot_dimension_numbers<[1], [0], [0], [1], [0, 0, 1, 1], [], []>} : vector<64x128xbf16>, vector<128x128xbf16>, vector<64x128xf32> -> vector<64x128xf32>
    %25 = arith.addf %19, %24 : vector<64x128xf32>
    %c0_26 = arith.constant 0 : index
    %c1_27 = arith.constant 1 : index
    %c0_28 = arith.constant 0 : index
    %26 = vector.load %arg10[%c0_26, %c1_27, %c0_28] : memref<10x10x128xbf16, #tpu.memory_space<vmem>>, vector<8x8x128xbf16>
    %27 = vector.shape_cast %26 : vector<8x8x128xbf16> to vector<64x128xbf16>
    %c1_29 = arith.constant 1 : index
    %c0_30 = arith.constant 0 : index
    %c0_31 = arith.constant 0 : index
    %28 = vector.load %arg5[%c1_29, %c0_30, %c0_31] : memref<9x128x128xbf16, #tpu.memory_space<vmem>>, vector<1x128x128xbf16>
    %29 = vector.shape_cast %28 : vector<1x128x128xbf16> to vector<128x128xbf16>
    %cst_32 = arith.constant dense<0.000000e+00> : vector<64x128xf32>
    %30 = tpu.matmul %27, %29, %cst_32 {dimension_numbers = #tpu.dot_dimension_numbers<[1], [0], [0], [1], [0, 0, 1, 1], [], []>} : vector<64x128xbf16>, vector<128x128xbf16>, vector<64x128xf32> -> vector<64x128xf32>
    %31 = arith.addf %25, %30 : vector<64x128xf32>
    %c0_33 = arith.constant 0 : index
    %c2 = arith.constant 2 : index
    %c0_34 = arith.constant 0 : index
    %32 = vector.load %arg10[%c0_33, %c2, %c0_34] : memref<10x10x128xbf16, #tpu.memory_space<vmem>>, vector<8x8x128xbf16>
    %33 = vector.shape_cast %32 : vector<8x8x128xbf16> to vector<64x128xbf16>
    %c2_35 = arith.constant 2 : index
    %c0_36 = arith.constant 0 : index
    %c0_37 = arith.constant 0 : index
    %34 = vector.load %arg5[%c2_35, %c0_36, %c0_37] : memref<9x128x128xbf16, #tpu.memory_space<vmem>>, vector<1x128x128xbf16>
    %35 = vector.shape_cast %34 : vector<1x128x128xbf16> to vector<128x128xbf16>
    %cst_38 = arith.constant dense<0.000000e+00> : vector<64x128xf32>
    %36 = tpu.matmul %33, %35, %cst_38 {dimension_numbers = #tpu.dot_dimension_numbers<[1], [0], [0], [1], [0, 0, 1, 1], [], []>} : vector<64x128xbf16>, vector<128x128xbf16>, vector<64x128xf32> -> vector<64x128xf32>
    %37 = arith.addf %31, %36 : vector<64x128xf32>
    %c1_39 = arith.constant 1 : index
    %c0_40 = arith.constant 0 : index
    %c0_41 = arith.constant 0 : index
    %38 = vector.load %arg10[%c1_39, %c0_40, %c0_41] : memref<10x10x128xbf16, #tpu.memory_space<vmem>>, vector<8x8x128xbf16>
    %39 = vector.shape_cast %38 : vector<8x8x128xbf16> to vector<64x128xbf16>
    %c3 = arith.constant 3 : index
    %c0_42 = arith.constant 0 : index
    %c0_43 = arith.constant 0 : index
    %40 = vector.load %arg5[%c3, %c0_42, %c0_43] : memref<9x128x128xbf16, #tpu.memory_space<vmem>>, vector<1x128x128xbf16>
    %41 = vector.shape_cast %40 : vector<1x128x128xbf16> to vector<128x128xbf16>
    %cst_44 = arith.constant dense<0.000000e+00> : vector<64x128xf32>
    %42 = tpu.matmul %39, %41, %cst_44 {dimension_numbers = #tpu.dot_dimension_numbers<[1], [0], [0], [1], [0, 0, 1, 1], [], []>} : vector<64x128xbf16>, vector<128x128xbf16>, vector<64x128xf32> -> vector<64x128xf32>
    %43 = arith.addf %37, %42 : vector<64x128xf32>
    %c1_45 = arith.constant 1 : index
    %c1_46 = arith.constant 1 : index
    %c0_47 = arith.constant 0 : index
    %44 = vector.load %arg10[%c1_45, %c1_46, %c0_47] : memref<10x10x128xbf16, #tpu.memory_space<vmem>>, vector<8x8x128xbf16>
    %45 = vector.shape_cast %44 : vector<8x8x128xbf16> to vector<64x128xbf16>
    %c4 = arith.constant 4 : index
    %c0_48 = arith.constant 0 : index
    %c0_49 = arith.constant 0 : index
    %46 = vector.load %arg5[%c4, %c0_48, %c0_49] : memref<9x128x128xbf16, #tpu.memory_space<vmem>>, vector<1x128x128xbf16>
    %47 = vector.shape_cast %46 : vector<1x128x128xbf16> to vector<128x128xbf16>
    %cst_50 = arith.constant dense<0.000000e+00> : vector<64x128xf32>
    %48 = tpu.matmul %45, %47, %cst_50 {dimension_numbers = #tpu.dot_dimension_numbers<[1], [0], [0], [1], [0, 0, 1, 1], [], []>} : vector<64x128xbf16>, vector<128x128xbf16>, vector<64x128xf32> -> vector<64x128xf32>
    %49 = arith.addf %43, %48 : vector<64x128xf32>
    %c1_51 = arith.constant 1 : index
    %c2_52 = arith.constant 2 : index
    %c0_53 = arith.constant 0 : index
    %50 = vector.load %arg10[%c1_51, %c2_52, %c0_53] : memref<10x10x128xbf16, #tpu.memory_space<vmem>>, vector<8x8x128xbf16>
    %51 = vector.shape_cast %50 : vector<8x8x128xbf16> to vector<64x128xbf16>
    %c5 = arith.constant 5 : index
    %c0_54 = arith.constant 0 : index
    %c0_55 = arith.constant 0 : index
    %52 = vector.load %arg5[%c5, %c0_54, %c0_55] : memref<9x128x128xbf16, #tpu.memory_space<vmem>>, vector<1x128x128xbf16>
    %53 = vector.shape_cast %52 : vector<1x128x128xbf16> to vector<128x128xbf16>
    %cst_56 = arith.constant dense<0.000000e+00> : vector<64x128xf32>
    %54 = tpu.matmul %51, %53, %cst_56 {dimension_numbers = #tpu.dot_dimension_numbers<[1], [0], [0], [1], [0, 0, 1, 1], [], []>} : vector<64x128xbf16>, vector<128x128xbf16>, vector<64x128xf32> -> vector<64x128xf32>
    %55 = arith.addf %49, %54 : vector<64x128xf32>
    %c2_57 = arith.constant 2 : index
    %c0_58 = arith.constant 0 : index
    %c0_59 = arith.constant 0 : index
    %56 = vector.load %arg10[%c2_57, %c0_58, %c0_59] : memref<10x10x128xbf16, #tpu.memory_space<vmem>>, vector<8x8x128xbf16>
    %57 = vector.shape_cast %56 : vector<8x8x128xbf16> to vector<64x128xbf16>
    %c6 = arith.constant 6 : index
    %c0_60 = arith.constant 0 : index
    %c0_61 = arith.constant 0 : index
    %58 = vector.load %arg5[%c6, %c0_60, %c0_61] : memref<9x128x128xbf16, #tpu.memory_space<vmem>>, vector<1x128x128xbf16>
    %59 = vector.shape_cast %58 : vector<1x128x128xbf16> to vector<128x128xbf16>
    %cst_62 = arith.constant dense<0.000000e+00> : vector<64x128xf32>
    %60 = tpu.matmul %57, %59, %cst_62 {dimension_numbers = #tpu.dot_dimension_numbers<[1], [0], [0], [1], [0, 0, 1, 1], [], []>} : vector<64x128xbf16>, vector<128x128xbf16>, vector<64x128xf32> -> vector<64x128xf32>
    %61 = arith.addf %55, %60 : vector<64x128xf32>
    %c2_63 = arith.constant 2 : index
    %c1_64 = arith.constant 1 : index
    %c0_65 = arith.constant 0 : index
    %62 = vector.load %arg10[%c2_63, %c1_64, %c0_65] : memref<10x10x128xbf16, #tpu.memory_space<vmem>>, vector<8x8x128xbf16>
    %63 = vector.shape_cast %62 : vector<8x8x128xbf16> to vector<64x128xbf16>
    %c7 = arith.constant 7 : index
    %c0_66 = arith.constant 0 : index
    %c0_67 = arith.constant 0 : index
    %64 = vector.load %arg5[%c7, %c0_66, %c0_67] : memref<9x128x128xbf16, #tpu.memory_space<vmem>>, vector<1x128x128xbf16>
    %65 = vector.shape_cast %64 : vector<1x128x128xbf16> to vector<128x128xbf16>
    %cst_68 = arith.constant dense<0.000000e+00> : vector<64x128xf32>
    %66 = tpu.matmul %63, %65, %cst_68 {dimension_numbers = #tpu.dot_dimension_numbers<[1], [0], [0], [1], [0, 0, 1, 1], [], []>} : vector<64x128xbf16>, vector<128x128xbf16>, vector<64x128xf32> -> vector<64x128xf32>
    %67 = arith.addf %61, %66 : vector<64x128xf32>
    %c2_69 = arith.constant 2 : index
    %c2_70 = arith.constant 2 : index
    %c0_71 = arith.constant 0 : index
    %68 = vector.load %arg10[%c2_69, %c2_70, %c0_71] : memref<10x10x128xbf16, #tpu.memory_space<vmem>>, vector<8x8x128xbf16>
    %69 = vector.shape_cast %68 : vector<8x8x128xbf16> to vector<64x128xbf16>
    %c8 = arith.constant 8 : index
    %c0_72 = arith.constant 0 : index
    %c0_73 = arith.constant 0 : index
    %70 = vector.load %arg5[%c8, %c0_72, %c0_73] : memref<9x128x128xbf16, #tpu.memory_space<vmem>>, vector<1x128x128xbf16>
    %71 = vector.shape_cast %70 : vector<1x128x128xbf16> to vector<128x128xbf16>
    %cst_74 = arith.constant dense<0.000000e+00> : vector<64x128xf32>
    %72 = tpu.matmul %69, %71, %cst_74 {dimension_numbers = #tpu.dot_dimension_numbers<[1], [0], [0], [1], [0, 0, 1, 1], [], []>} : vector<64x128xbf16>, vector<128x128xbf16>, vector<64x128xf32> -> vector<64x128xf32>
    %73 = arith.addf %67, %72 : vector<64x128xf32>
    %74 = vector.shape_cast %73 : vector<64x128xf32> to vector<8x8x128xf32>
    %75 = arith.truncf %74 : vector<8x8x128xf32> to vector<8x8x128xbf16>
    %c0_75 = arith.constant 0 : index
    %c0_76 = arith.constant 0 : index
    %c0_77 = arith.constant 0 : index
    %c0_78 = arith.constant 0 : index
    %76 = vector.load %arg8[%c0_75, %c0_76, %c0_77, %c0_78] : memref<1x8x8x128xbf16, #tpu.memory_space<vmem>>, vector<1x8x8x128xbf16>
    %77 = vector.shape_cast %76 : vector<1x8x8x128xbf16> to vector<8x8x128xbf16>
    %78 = vector.shape_cast %75 : vector<8x8x128xbf16> to vector<1x8x8x128xbf16>
    tpu.vector_store %arg8[%c0_75, %c0_76, %c0_77, %c0_78], %78 {strides = array<i32>} : memref<1x8x8x128xbf16, #tpu.memory_space<vmem>>, vector<1x8x8x128xbf16>,
    %cst_79 = arith.constant dense<0.000000e+00> : vector<128xf32>
    %79 = vector.multi_reduction <add>, %73, %cst_79 [0] : vector<64x128xf32> to vector<128xf32>
    %80 = vector.shape_cast %79 : vector<128xf32> to vector<1x128xf32>
    %c0_80 = arith.constant 0 : index
    %c0_81 = arith.constant 0 : index
    %c0_82 = arith.constant 0 : index
    %c0_83 = arith.constant 0 : index
    %81 = vector.load %arg9[%c0_80, %c0_81, %c0_82, %c0_83] : memref<1x1x2x128xf32, #tpu.memory_space<vmem>>, vector<1x1x1x128xf32>
    %82 = vector.shape_cast %81 : vector<1x1x1x128xf32> to vector<1x128xf32>
    %83 = vector.shape_cast %80 : vector<1x128xf32> to vector<1x1x1x128xf32>
    tpu.vector_store %arg9[%c0_80, %c0_81, %c0_82, %c0_83], %83 {strides = array<i32>} : memref<1x1x2x128xf32, #tpu.memory_space<vmem>>, vector<1x1x1x128xf32>,
    %84 = arith.mulf %73, %73 : vector<64x128xf32>
    %cst_84 = arith.constant dense<0.000000e+00> : vector<128xf32>
    %85 = vector.multi_reduction <add>, %84, %cst_84 [0] : vector<64x128xf32> to vector<128xf32>
    %86 = vector.shape_cast %85 : vector<128xf32> to vector<1x128xf32>
    %c0_85 = arith.constant 0 : index
    %c0_86 = arith.constant 0 : index
    %c1_87 = arith.constant 1 : index
    %c0_88 = arith.constant 0 : index
    %87 = vector.load %arg9[%c0_85, %c0_86, %c1_87, %c0_88] : memref<1x1x2x128xf32, #tpu.memory_space<vmem>>, vector<1x1x1x128xf32>
    %88 = vector.shape_cast %87 : vector<1x1x1x128xf32> to vector<1x128xf32>
    %89 = vector.shape_cast %86 : vector<1x128xf32> to vector<1x1x1x128xf32>
    tpu.vector_store %arg9[%c0_85, %c0_86, %c1_87, %c0_88], %89 {strides = array<i32>} : memref<1x1x2x128xf32, #tpu.memory_space<vmem>>, vector<1x1x1x128xf32>,
    return
  }
  func.func @transform_0(%arg0: i32, %arg1: i32) -> (i32, i32, i32, i32) {
    %c0_i32 = arith.constant 0 : i32
    %c0_i32_0 = arith.constant 0 : i32
    %c0_i32_1 = arith.constant 0 : i32
    return %arg0, %arg1, %c0_i32, %c0_i32_0 : i32, i32, i32, i32
  }
  func.func @transform_1(%arg0: i32, %arg1: i32) -> (i32, i32, i32, i32) {
    %c8_i32 = arith.constant 8 : i32
    %0 = arith.muli %arg1, %c8_i32 : i32
    %c1_i32 = arith.constant 1 : i32
    %1 = arith.subi %0, %c1_i32 : i32
    %c0_i32 = arith.constant 0 : i32
    %2 = arith.maxsi %1, %c0_i32 : i32
    %c0_i32_0 = arith.constant 0 : i32
    %c0_i32_1 = arith.constant 0 : i32
    %c0_i32_2 = arith.constant 0 : i32
    return %arg0, %2, %c0_i32_0, %c0_i32_1 : i32, i32, i32, i32
  }
  func.func @transform_2(%arg0: i32, %arg1: i32) -> (i32, i32, i32, i32) {
    %c1_i32 = arith.constant 1 : i32
    %0 = arith.addi %arg1, %c1_i32 : i32
    %c8_i32 = arith.constant 8 : i32
    %1 = arith.muli %0, %c8_i32 : i32
    %c7_i32 = arith.constant 7 : i32
    %2 = arith.minsi %1, %c7_i32 : i32
    %c0_i32 = arith.constant 0 : i32
    %c0_i32_0 = arith.constant 0 : i32
    %c0_i32_1 = arith.constant 0 : i32
    return %arg0, %2, %c0_i32, %c0_i32_0 : i32, i32, i32, i32
  }
  func.func @transform_3(%arg0: i32, %arg1: i32) -> (i32, i32, i32) {
    %c0_i32 = arith.constant 0 : i32
    %c0_i32_0 = arith.constant 0 : i32
    %c0_i32_1 = arith.constant 0 : i32
    %c0_i32_2 = arith.constant 0 : i32
    return %c0_i32, %c0_i32_0, %c0_i32_1 : i32, i32, i32
  }
  func.func @transform_4(%arg0: i32, %arg1: i32) -> (i32, i32, i32) {
    %c0_i32 = arith.constant 0 : i32
    %c0_i32_0 = arith.constant 0 : i32
    %c0_i32_1 = arith.constant 0 : i32
    %c0_i32_2 = arith.constant 0 : i32
    return %c0_i32, %c0_i32_0, %c0_i32_1 : i32, i32, i32
  }
  func.func @transform_5(%arg0: i32, %arg1: i32) -> (i32, i32, i32) {
    %c0_i32 = arith.constant 0 : i32
    %c0_i32_0 = arith.constant 0 : i32
    %c0_i32_1 = arith.constant 0 : i32
    %c0_i32_2 = arith.constant 0 : i32
    return %c0_i32, %c0_i32_0, %c0_i32_1 : i32, i32, i32
  }
  func.func @transform_6(%arg0: i32, %arg1: i32) -> (i32, i32, i32, i32) {
    %c0_i32 = arith.constant 0 : i32
    %c0_i32_0 = arith.constant 0 : i32
    %c0_i32_1 = arith.constant 0 : i32
    return %arg0, %arg1, %c0_i32, %c0_i32_0 : i32, i32, i32, i32
  }
  func.func @transform_7(%arg0: i32, %arg1: i32) -> (i32, i32, i32, i32) {
    %c0_i32 = arith.constant 0 : i32
    %c0_i32_0 = arith.constant 0 : i32
    %c0_i32_1 = arith.constant 0 : i32
    return %arg0, %arg1, %c0_i32, %c0_i32_0 : i32, i32, i32, i32
  }
}

module attributes {stable_mosaic.version = 11 : i64} {
  func.func @kernel(%arg0: i32, %arg1: i32, %arg2: memref<1x8x8x128xbf16, #tpu.memory_space<vmem>>, %arg3: memref<1x1x8x128xbf16, #tpu.memory_space<vmem>>, %arg4: memref<1x1x8x128xbf16, #tpu.memory_space<vmem>>, %arg5: memref<9x128x128xbf16, #tpu.memory_space<vmem>>, %arg6: memref<1x1x128xf32, #tpu.memory_space<vmem>>, %arg7: memref<1x1x128xf32, #tpu.memory_space<vmem>>, %arg8: memref<1x8x8x128xbf16, #tpu.memory_space<vmem>>, %arg9: memref<1x1x2x128xf32, #tpu.memory_space<vmem>>, %arg10: memref<10x10x128xbf16, #tpu.memory_space<vmem>>) attributes {dimension_semantics = [#tpu.dimension_semantics<parallel>, #tpu.dimension_semantics<parallel>], iteration_bounds = array<i64: 2, 1>, scalar_prefetch = 0 : i64, scratch_operands = 1 : i64, tpu.core_type = #tpu.core_type<tc>, window_params = [{transform_indices = @transform_0, window_bounds = array<i64: 1, 8, 8, 128>}, {transform_indices = @transform_1, window_bounds = array<i64: 1, 1, 8, 128>}, {transform_indices = @transform_2, window_bounds = array<i64: 1, 1, 8, 128>}, {pipeline_mode = #tpu.pipeline_mode<synchronous>, transform_indices = @transform_3, window_bounds = array<i64: 9, 128, 128>}, {pipeline_mode = #tpu.pipeline_mode<synchronous>, transform_indices = @transform_4, window_bounds = array<i64: 1, 1, 128>}, {pipeline_mode = #tpu.pipeline_mode<synchronous>, transform_indices = @transform_5, window_bounds = array<i64: 1, 1, 128>}, {transform_indices = @transform_6, window_bounds = array<i64: 1, 8, 8, 128>}, {transform_indices = @transform_7, window_bounds = array<i64: 1, 1, 2, 128>}]} {
    %cst = arith.constant 0.000000e+00 : bf16
    %0 = vector.broadcast %cst : bf16 to vector<10x1x128xbf16>
    %c0 = arith.constant 0 : index
    %c0_0 = arith.constant 0 : index
    %c0_1 = arith.constant 0 : index
    %1 = vector.load %arg10[%c0, %c0_0, %c0_1] : memref<10x10x128xbf16, #tpu.memory_space<vmem>>, vector<10x1x128xbf16>
    tpu.vector_store %arg10[%c0, %c0_0, %c0_1], %0 {strides = array<i32>} : memref<10x10x128xbf16, #tpu.memory_space<vmem>>, vector<10x1x128xbf16>,
    %c0_2 = arith.constant 0 : index
    %c9 = arith.constant 9 : index
    %c0_3 = arith.constant 0 : index
    %2 = vector.load %arg10[%c0_2, %c9, %c0_3] : memref<10x10x128xbf16, #tpu.memory_space<vmem>>, vector<10x1x128xbf16>
    tpu.vector_store %arg10[%c0_2, %c9, %c0_3], %0 {strides = array<i32>} : memref<10x10x128xbf16, #tpu.memory_space<vmem>>, vector<10x1x128xbf16>,
    %c0_4 = arith.constant 0 : index
    %c0_5 = arith.constant 0 : index
    %c0_6 = arith.constant 0 : index
    %c0_7 = arith.constant 0 : index
    %3 = vector.load %arg2[%c0_4, %c0_5, %c0_6, %c0_7] : memref<1x8x8x128xbf16, #tpu.memory_space<vmem>>, vector<1x8x8x128xbf16>
    %4 = vector.shape_cast %3 : vector<1x8x8x128xbf16> to vector<8x8x128xbf16>
    %5 = arith.extf %4 : vector<8x8x128xbf16> to vector<8x8x128xf32>
    %c0_8 = arith.constant 0 : index
    %c0_9 = arith.constant 0 : index
    %c0_10 = arith.constant 0 : index
    %6 = vector.load %arg6[%c0_8, %c0_9, %c0_10] : memref<1x1x128xf32, #tpu.memory_space<vmem>>, vector<1x1x128xf32>
    %7 = vector.broadcast %6 : vector<1x1x128xf32> to vector<8x8x128xf32>
    %8 = arith.mulf %5, %7 : vector<8x8x128xf32>
    %c0_11 = arith.constant 0 : index
    %c0_12 = arith.constant 0 : index
    %c0_13 = arith.constant 0 : index
    %9 = vector.load %arg7[%c0_11, %c0_12, %c0_13] : memref<1x1x128xf32, #tpu.memory_space<vmem>>, vector<1x1x128xf32>
    %10 = vector.broadcast %9 : vector<1x1x128xf32> to vector<8x8x128xf32>
    %11 = arith.addf %8, %10 : vector<8x8x128xf32>
    %cst_14 = arith.constant 0.000000e+00 : f32
    %12 = vector.broadcast %cst_14 : f32 to vector<8x8x128xf32>
    %13 = arith.maximumf %11, %12 : vector<8x8x128xf32>
    %14 = arith.truncf %13 : vector<8x8x128xf32> to vector<8x8x128xbf16>
    %c1 = arith.constant 1 : index
    %c1_15 = arith.constant 1 : index
    %c0_16 = arith.constant 0 : index
    %15 = vector.load %arg10[%c1, %c1_15, %c0_16] : memref<10x10x128xbf16, #tpu.memory_space<vmem>>, vector<8x8x128xbf16>
    tpu.vector_store %arg10[%c1, %c1_15, %c0_16], %14 {strides = array<i32>} : memref<10x10x128xbf16, #tpu.memory_space<vmem>>, vector<8x8x128xbf16>,
    %cst_17 = arith.constant 0.000000e+00 : bf16
    %16 = vector.broadcast %cst_17 : bf16 to vector<1x8x128xbf16>
    %c0_i32 = arith.constant 0 : i32
    %17 = arith.cmpi sgt, %arg1, %c0_i32 : i32
    %18 = arith.extui %17 : i1 to i32
    %c0_i32_18 = arith.constant 0 : i32
    %19 = arith.cmpi ne, %18, %c0_i32_18 : i32
    scf.if %19 {
      %c0_96 = arith.constant 0 : index
      %c0_97 = arith.constant 0 : index
      %c0_98 = arith.constant 0 : index
      %c0_99 = arith.constant 0 : index
      %100 = vector.load %arg3[%c0_96, %c0_97, %c0_98, %c0_99] : memref<1x1x8x128xbf16, #tpu.memory_space<vmem>>, vector<1x1x8x128xbf16>
      %101 = vector.shape_cast %100 : vector<1x1x8x128xbf16> to vector<1x8x128xbf16>
      %102 = arith.extf %101 : vector<1x8x128xbf16> to vector<1x8x128xf32>
      %c0_100 = arith.constant 0 : index
      %c0_101 = arith.constant 0 : index
      %c0_102 = arith.constant 0 : index
      %103 = vector.load %arg6[%c0_100, %c0_101, %c0_102] : memref<1x1x128xf32, #tpu.memory_space<vmem>>, vector<1x1x128xf32>
      %104 = vector.broadcast %103 : vector<1x1x128xf32> to vector<1x8x128xf32>
      %105 = arith.mulf %102, %104 : vector<1x8x128xf32>
      %c0_103 = arith.constant 0 : index
      %c0_104 = arith.constant 0 : index
      %c0_105 = arith.constant 0 : index
      %106 = vector.load %arg7[%c0_103, %c0_104, %c0_105] : memref<1x1x128xf32, #tpu.memory_space<vmem>>, vector<1x1x128xf32>
      %107 = vector.broadcast %106 : vector<1x1x128xf32> to vector<1x8x128xf32>
      %108 = arith.addf %105, %107 : vector<1x8x128xf32>
      %cst_106 = arith.constant 0.000000e+00 : f32
      %109 = vector.broadcast %cst_106 : f32 to vector<1x8x128xf32>
      %110 = arith.maximumf %108, %109 : vector<1x8x128xf32>
      %111 = arith.truncf %110 : vector<1x8x128xf32> to vector<1x8x128xbf16>
      %c0_107 = arith.constant 0 : index
      %c1_108 = arith.constant 1 : index
      %c0_109 = arith.constant 0 : index
      %112 = vector.load %arg10[%c0_107, %c1_108, %c0_109] : memref<10x10x128xbf16, #tpu.memory_space<vmem>>, vector<1x8x128xbf16>
      tpu.vector_store %arg10[%c0_107, %c1_108, %c0_109], %111 {strides = array<i32>} : memref<10x10x128xbf16, #tpu.memory_space<vmem>>, vector<1x8x128xbf16>,
    } else {
    }
    %c0_i32_19 = arith.constant 0 : i32
    %20 = arith.cmpi eq, %arg1, %c0_i32_19 : i32
    %21 = arith.extui %20 : i1 to i32
    %c0_i32_20 = arith.constant 0 : i32
    %22 = arith.cmpi ne, %21, %c0_i32_20 : i32
    scf.if %22 {
      %c0_96 = arith.constant 0 : index
      %c1_97 = arith.constant 1 : index
      %c0_98 = arith.constant 0 : index
      %100 = vector.load %arg10[%c0_96, %c1_97, %c0_98] : memref<10x10x128xbf16, #tpu.memory_space<vmem>>, vector<1x8x128xbf16>
      tpu.vector_store %arg10[%c0_96, %c1_97, %c0_98], %16 {strides = array<i32>} : memref<10x10x128xbf16, #tpu.memory_space<vmem>>, vector<1x8x128xbf16>,
    } else {
    }
    %c0_i32_21 = arith.constant 0 : i32
    %23 = arith.cmpi slt, %arg1, %c0_i32_21 : i32
    %24 = arith.extui %23 : i1 to i32
    %c0_i32_22 = arith.constant 0 : i32
    %25 = arith.cmpi ne, %24, %c0_i32_22 : i32
    scf.if %25 {
      %c0_96 = arith.constant 0 : index
      %c0_97 = arith.constant 0 : index
      %c0_98 = arith.constant 0 : index
      %c0_99 = arith.constant 0 : index
      %100 = vector.load %arg4[%c0_96, %c0_97, %c0_98, %c0_99] : memref<1x1x8x128xbf16, #tpu.memory_space<vmem>>, vector<1x1x8x128xbf16>
      %101 = vector.shape_cast %100 : vector<1x1x8x128xbf16> to vector<1x8x128xbf16>
      %102 = arith.extf %101 : vector<1x8x128xbf16> to vector<1x8x128xf32>
      %c0_100 = arith.constant 0 : index
      %c0_101 = arith.constant 0 : index
      %c0_102 = arith.constant 0 : index
      %103 = vector.load %arg6[%c0_100, %c0_101, %c0_102] : memref<1x1x128xf32, #tpu.memory_space<vmem>>, vector<1x1x128xf32>
      %104 = vector.broadcast %103 : vector<1x1x128xf32> to vector<1x8x128xf32>
      %105 = arith.mulf %102, %104 : vector<1x8x128xf32>
      %c0_103 = arith.constant 0 : index
      %c0_104 = arith.constant 0 : index
      %c0_105 = arith.constant 0 : index
      %106 = vector.load %arg7[%c0_103, %c0_104, %c0_105] : memref<1x1x128xf32, #tpu.memory_space<vmem>>, vector<1x1x128xf32>
      %107 = vector.broadcast %106 : vector<1x1x128xf32> to vector<1x8x128xf32>
      %108 = arith.addf %105, %107 : vector<1x8x128xf32>
      %cst_106 = arith.constant 0.000000e+00 : f32
      %109 = vector.broadcast %cst_106 : f32 to vector<1x8x128xf32>
      %110 = arith.maximumf %108, %109 : vector<1x8x128xf32>
      %111 = arith.truncf %110 : vector<1x8x128xf32> to vector<1x8x128xbf16>
      %c9_107 = arith.constant 9 : index
      %c1_108 = arith.constant 1 : index
      %c0_109 = arith.constant 0 : index
      %112 = vector.load %arg10[%c9_107, %c1_108, %c0_109] : memref<10x10x128xbf16, #tpu.memory_space<vmem>>, vector<1x8x128xbf16>
      tpu.vector_store %arg10[%c9_107, %c1_108, %c0_109], %111 {strides = array<i32>} : memref<10x10x128xbf16, #tpu.memory_space<vmem>>, vector<1x8x128xbf16>,
    } else {
    }
    %c0_i32_23 = arith.constant 0 : i32
    %26 = arith.cmpi eq, %arg1, %c0_i32_23 : i32
    %27 = arith.extui %26 : i1 to i32
    %c0_i32_24 = arith.constant 0 : i32
    %28 = arith.cmpi ne, %27, %c0_i32_24 : i32
    scf.if %28 {
      %c9_96 = arith.constant 9 : index
      %c1_97 = arith.constant 1 : index
      %c0_98 = arith.constant 0 : index
      %100 = vector.load %arg10[%c9_96, %c1_97, %c0_98] : memref<10x10x128xbf16, #tpu.memory_space<vmem>>, vector<1x8x128xbf16>
      tpu.vector_store %arg10[%c9_96, %c1_97, %c0_98], %16 {strides = array<i32>} : memref<10x10x128xbf16, #tpu.memory_space<vmem>>, vector<1x8x128xbf16>,
    } else {
    }
    %cst_25 = arith.constant 0.000000e+00 : f32
    %29 = vector.broadcast %cst_25 : f32 to vector<64x128xf32>
    %c0_26 = arith.constant 0 : index
    %c0_27 = arith.constant 0 : index
    %c0_28 = arith.constant 0 : index
    %30 = vector.load %arg10[%c0_26, %c0_27, %c0_28] : memref<10x10x128xbf16, #tpu.memory_space<vmem>>, vector<8x8x128xbf16>
    %31 = vector.shape_cast %30 : vector<8x8x128xbf16> to vector<64x128xbf16>
    %c0_29 = arith.constant 0 : index
    %c0_30 = arith.constant 0 : index
    %c0_31 = arith.constant 0 : index
    %32 = vector.load %arg5[%c0_29, %c0_30, %c0_31] : memref<9x128x128xbf16, #tpu.memory_space<vmem>>, vector<1x128x128xbf16>
    %33 = vector.shape_cast %32 : vector<1x128x128xbf16> to vector<128x128xbf16>
    %cst_32 = arith.constant dense<0.000000e+00> : vector<64x128xf32>
    %34 = tpu.matmul %31, %33, %cst_32 {dimension_numbers = #tpu.dot_dimension_numbers<[1], [0], [0], [1], [0, 0, 1, 1], [], []>} : vector<64x128xbf16>, vector<128x128xbf16>, vector<64x128xf32> -> vector<64x128xf32>
    %35 = arith.addf %29, %34 : vector<64x128xf32>
    %c0_33 = arith.constant 0 : index
    %c1_34 = arith.constant 1 : index
    %c0_35 = arith.constant 0 : index
    %36 = vector.load %arg10[%c0_33, %c1_34, %c0_35] : memref<10x10x128xbf16, #tpu.memory_space<vmem>>, vector<8x8x128xbf16>
    %37 = vector.shape_cast %36 : vector<8x8x128xbf16> to vector<64x128xbf16>
    %c1_36 = arith.constant 1 : index
    %c0_37 = arith.constant 0 : index
    %c0_38 = arith.constant 0 : index
    %38 = vector.load %arg5[%c1_36, %c0_37, %c0_38] : memref<9x128x128xbf16, #tpu.memory_space<vmem>>, vector<1x128x128xbf16>
    %39 = vector.shape_cast %38 : vector<1x128x128xbf16> to vector<128x128xbf16>
    %cst_39 = arith.constant dense<0.000000e+00> : vector<64x128xf32>
    %40 = tpu.matmul %37, %39, %cst_39 {dimension_numbers = #tpu.dot_dimension_numbers<[1], [0], [0], [1], [0, 0, 1, 1], [], []>} : vector<64x128xbf16>, vector<128x128xbf16>, vector<64x128xf32> -> vector<64x128xf32>
    %41 = arith.addf %35, %40 : vector<64x128xf32>
    %c0_40 = arith.constant 0 : index
    %c2 = arith.constant 2 : index
    %c0_41 = arith.constant 0 : index
    %42 = vector.load %arg10[%c0_40, %c2, %c0_41] : memref<10x10x128xbf16, #tpu.memory_space<vmem>>, vector<8x8x128xbf16>
    %43 = vector.shape_cast %42 : vector<8x8x128xbf16> to vector<64x128xbf16>
    %c2_42 = arith.constant 2 : index
    %c0_43 = arith.constant 0 : index
    %c0_44 = arith.constant 0 : index
    %44 = vector.load %arg5[%c2_42, %c0_43, %c0_44] : memref<9x128x128xbf16, #tpu.memory_space<vmem>>, vector<1x128x128xbf16>
    %45 = vector.shape_cast %44 : vector<1x128x128xbf16> to vector<128x128xbf16>
    %cst_45 = arith.constant dense<0.000000e+00> : vector<64x128xf32>
    %46 = tpu.matmul %43, %45, %cst_45 {dimension_numbers = #tpu.dot_dimension_numbers<[1], [0], [0], [1], [0, 0, 1, 1], [], []>} : vector<64x128xbf16>, vector<128x128xbf16>, vector<64x128xf32> -> vector<64x128xf32>
    %47 = arith.addf %41, %46 : vector<64x128xf32>
    %c1_46 = arith.constant 1 : index
    %c0_47 = arith.constant 0 : index
    %c0_48 = arith.constant 0 : index
    %48 = vector.load %arg10[%c1_46, %c0_47, %c0_48] : memref<10x10x128xbf16, #tpu.memory_space<vmem>>, vector<8x8x128xbf16>
    %49 = vector.shape_cast %48 : vector<8x8x128xbf16> to vector<64x128xbf16>
    %c3 = arith.constant 3 : index
    %c0_49 = arith.constant 0 : index
    %c0_50 = arith.constant 0 : index
    %50 = vector.load %arg5[%c3, %c0_49, %c0_50] : memref<9x128x128xbf16, #tpu.memory_space<vmem>>, vector<1x128x128xbf16>
    %51 = vector.shape_cast %50 : vector<1x128x128xbf16> to vector<128x128xbf16>
    %cst_51 = arith.constant dense<0.000000e+00> : vector<64x128xf32>
    %52 = tpu.matmul %49, %51, %cst_51 {dimension_numbers = #tpu.dot_dimension_numbers<[1], [0], [0], [1], [0, 0, 1, 1], [], []>} : vector<64x128xbf16>, vector<128x128xbf16>, vector<64x128xf32> -> vector<64x128xf32>
    %53 = arith.addf %47, %52 : vector<64x128xf32>
    %c1_52 = arith.constant 1 : index
    %c1_53 = arith.constant 1 : index
    %c0_54 = arith.constant 0 : index
    %54 = vector.load %arg10[%c1_52, %c1_53, %c0_54] : memref<10x10x128xbf16, #tpu.memory_space<vmem>>, vector<8x8x128xbf16>
    %55 = vector.shape_cast %54 : vector<8x8x128xbf16> to vector<64x128xbf16>
    %c4 = arith.constant 4 : index
    %c0_55 = arith.constant 0 : index
    %c0_56 = arith.constant 0 : index
    %56 = vector.load %arg5[%c4, %c0_55, %c0_56] : memref<9x128x128xbf16, #tpu.memory_space<vmem>>, vector<1x128x128xbf16>
    %57 = vector.shape_cast %56 : vector<1x128x128xbf16> to vector<128x128xbf16>
    %cst_57 = arith.constant dense<0.000000e+00> : vector<64x128xf32>
    %58 = tpu.matmul %55, %57, %cst_57 {dimension_numbers = #tpu.dot_dimension_numbers<[1], [0], [0], [1], [0, 0, 1, 1], [], []>} : vector<64x128xbf16>, vector<128x128xbf16>, vector<64x128xf32> -> vector<64x128xf32>
    %59 = arith.addf %53, %58 : vector<64x128xf32>
    %c1_58 = arith.constant 1 : index
    %c2_59 = arith.constant 2 : index
    %c0_60 = arith.constant 0 : index
    %60 = vector.load %arg10[%c1_58, %c2_59, %c0_60] : memref<10x10x128xbf16, #tpu.memory_space<vmem>>, vector<8x8x128xbf16>
    %61 = vector.shape_cast %60 : vector<8x8x128xbf16> to vector<64x128xbf16>
    %c5 = arith.constant 5 : index
    %c0_61 = arith.constant 0 : index
    %c0_62 = arith.constant 0 : index
    %62 = vector.load %arg5[%c5, %c0_61, %c0_62] : memref<9x128x128xbf16, #tpu.memory_space<vmem>>, vector<1x128x128xbf16>
    %63 = vector.shape_cast %62 : vector<1x128x128xbf16> to vector<128x128xbf16>
    %cst_63 = arith.constant dense<0.000000e+00> : vector<64x128xf32>
    %64 = tpu.matmul %61, %63, %cst_63 {dimension_numbers = #tpu.dot_dimension_numbers<[1], [0], [0], [1], [0, 0, 1, 1], [], []>} : vector<64x128xbf16>, vector<128x128xbf16>, vector<64x128xf32> -> vector<64x128xf32>
    %65 = arith.addf %59, %64 : vector<64x128xf32>
    %c2_64 = arith.constant 2 : index
    %c0_65 = arith.constant 0 : index
    %c0_66 = arith.constant 0 : index
    %66 = vector.load %arg10[%c2_64, %c0_65, %c0_66] : memref<10x10x128xbf16, #tpu.memory_space<vmem>>, vector<8x8x128xbf16>
    %67 = vector.shape_cast %66 : vector<8x8x128xbf16> to vector<64x128xbf16>
    %c6 = arith.constant 6 : index
    %c0_67 = arith.constant 0 : index
    %c0_68 = arith.constant 0 : index
    %68 = vector.load %arg5[%c6, %c0_67, %c0_68] : memref<9x128x128xbf16, #tpu.memory_space<vmem>>, vector<1x128x128xbf16>
    %69 = vector.shape_cast %68 : vector<1x128x128xbf16> to vector<128x128xbf16>
    %cst_69 = arith.constant dense<0.000000e+00> : vector<64x128xf32>
    %70 = tpu.matmul %67, %69, %cst_69 {dimension_numbers = #tpu.dot_dimension_numbers<[1], [0], [0], [1], [0, 0, 1, 1], [], []>} : vector<64x128xbf16>, vector<128x128xbf16>, vector<64x128xf32> -> vector<64x128xf32>
    %71 = arith.addf %65, %70 : vector<64x128xf32>
    %c2_70 = arith.constant 2 : index
    %c1_71 = arith.constant 1 : index
    %c0_72 = arith.constant 0 : index
    %72 = vector.load %arg10[%c2_70, %c1_71, %c0_72] : memref<10x10x128xbf16, #tpu.memory_space<vmem>>, vector<8x8x128xbf16>
    %73 = vector.shape_cast %72 : vector<8x8x128xbf16> to vector<64x128xbf16>
    %c7 = arith.constant 7 : index
    %c0_73 = arith.constant 0 : index
    %c0_74 = arith.constant 0 : index
    %74 = vector.load %arg5[%c7, %c0_73, %c0_74] : memref<9x128x128xbf16, #tpu.memory_space<vmem>>, vector<1x128x128xbf16>
    %75 = vector.shape_cast %74 : vector<1x128x128xbf16> to vector<128x128xbf16>
    %cst_75 = arith.constant dense<0.000000e+00> : vector<64x128xf32>
    %76 = tpu.matmul %73, %75, %cst_75 {dimension_numbers = #tpu.dot_dimension_numbers<[1], [0], [0], [1], [0, 0, 1, 1], [], []>} : vector<64x128xbf16>, vector<128x128xbf16>, vector<64x128xf32> -> vector<64x128xf32>
    %77 = arith.addf %71, %76 : vector<64x128xf32>
    %c2_76 = arith.constant 2 : index
    %c2_77 = arith.constant 2 : index
    %c0_78 = arith.constant 0 : index
    %78 = vector.load %arg10[%c2_76, %c2_77, %c0_78] : memref<10x10x128xbf16, #tpu.memory_space<vmem>>, vector<8x8x128xbf16>
    %79 = vector.shape_cast %78 : vector<8x8x128xbf16> to vector<64x128xbf16>
    %c8 = arith.constant 8 : index
    %c0_79 = arith.constant 0 : index
    %c0_80 = arith.constant 0 : index
    %80 = vector.load %arg5[%c8, %c0_79, %c0_80] : memref<9x128x128xbf16, #tpu.memory_space<vmem>>, vector<1x128x128xbf16>
    %81 = vector.shape_cast %80 : vector<1x128x128xbf16> to vector<128x128xbf16>
    %cst_81 = arith.constant dense<0.000000e+00> : vector<64x128xf32>
    %82 = tpu.matmul %79, %81, %cst_81 {dimension_numbers = #tpu.dot_dimension_numbers<[1], [0], [0], [1], [0, 0, 1, 1], [], []>} : vector<64x128xbf16>, vector<128x128xbf16>, vector<64x128xf32> -> vector<64x128xf32>
    %83 = arith.addf %77, %82 : vector<64x128xf32>
    %84 = vector.shape_cast %83 : vector<64x128xf32> to vector<8x8x128xf32>
    %85 = arith.truncf %84 : vector<8x8x128xf32> to vector<8x8x128xbf16>
    %c0_82 = arith.constant 0 : index
    %c0_83 = arith.constant 0 : index
    %c0_84 = arith.constant 0 : index
    %c0_85 = arith.constant 0 : index
    %86 = vector.load %arg8[%c0_82, %c0_83, %c0_84, %c0_85] : memref<1x8x8x128xbf16, #tpu.memory_space<vmem>>, vector<1x8x8x128xbf16>
    %87 = vector.shape_cast %86 : vector<1x8x8x128xbf16> to vector<8x8x128xbf16>
    %88 = vector.shape_cast %85 : vector<8x8x128xbf16> to vector<1x8x8x128xbf16>
    tpu.vector_store %arg8[%c0_82, %c0_83, %c0_84, %c0_85], %88 {strides = array<i32>} : memref<1x8x8x128xbf16, #tpu.memory_space<vmem>>, vector<1x8x8x128xbf16>,
    %cst_86 = arith.constant dense<0.000000e+00> : vector<128xf32>
    %89 = vector.multi_reduction <add>, %83, %cst_86 [0] : vector<64x128xf32> to vector<128xf32>
    %90 = vector.shape_cast %89 : vector<128xf32> to vector<1x128xf32>
    %c0_87 = arith.constant 0 : index
    %c0_88 = arith.constant 0 : index
    %c0_89 = arith.constant 0 : index
    %c0_90 = arith.constant 0 : index
    %91 = vector.load %arg9[%c0_87, %c0_88, %c0_89, %c0_90] : memref<1x1x2x128xf32, #tpu.memory_space<vmem>>, vector<1x1x1x128xf32>
    %92 = vector.shape_cast %91 : vector<1x1x1x128xf32> to vector<1x128xf32>
    %93 = vector.shape_cast %90 : vector<1x128xf32> to vector<1x1x1x128xf32>
    tpu.vector_store %arg9[%c0_87, %c0_88, %c0_89, %c0_90], %93 {strides = array<i32>} : memref<1x1x2x128xf32, #tpu.memory_space<vmem>>, vector<1x1x1x128xf32>,
    %94 = arith.mulf %83, %83 : vector<64x128xf32>
    %cst_91 = arith.constant dense<0.000000e+00> : vector<128xf32>
    %95 = vector.multi_reduction <add>, %94, %cst_91 [0] : vector<64x128xf32> to vector<128xf32>
    %96 = vector.shape_cast %95 : vector<128xf32> to vector<1x128xf32>
    %c0_92 = arith.constant 0 : index
    %c0_93 = arith.constant 0 : index
    %c1_94 = arith.constant 1 : index
    %c0_95 = arith.constant 0 : index
    %97 = vector.load %arg9[%c0_92, %c0_93, %c1_94, %c0_95] : memref<1x1x2x128xf32, #tpu.memory_space<vmem>>, vector<1x1x1x128xf32>
    %98 = vector.shape_cast %97 : vector<1x1x1x128xf32> to vector<1x128xf32>
    %99 = vector.shape_cast %96 : vector<1x128xf32> to vector<1x1x1x128xf32>
    tpu.vector_store %arg9[%c0_92, %c0_93, %c1_94, %c0_95], %99 {strides = array<i32>} : memref<1x1x2x128xf32, #tpu.memory_space<vmem>>, vector<1x1x1x128xf32>,
    return
  }
  func.func @transform_0(%arg0: i32, %arg1: i32) -> (i32, i32, i32, i32) {
    %c0_i32 = arith.constant 0 : i32
    %c0_i32_0 = arith.constant 0 : i32
    %c0_i32_1 = arith.constant 0 : i32
    return %arg0, %arg1, %c0_i32, %c0_i32_0 : i32, i32, i32, i32
  }
  func.func @transform_1(%arg0: i32, %arg1: i32) -> (i32, i32, i32, i32) {
    %c8_i32 = arith.constant 8 : i32
    %0 = arith.muli %arg1, %c8_i32 : i32
    %c1_i32 = arith.constant 1 : i32
    %1 = arith.subi %0, %c1_i32 : i32
    %c0_i32 = arith.constant 0 : i32
    %2 = arith.maxsi %1, %c0_i32 : i32
    %c0_i32_0 = arith.constant 0 : i32
    %c0_i32_1 = arith.constant 0 : i32
    %c0_i32_2 = arith.constant 0 : i32
    return %arg0, %2, %c0_i32_0, %c0_i32_1 : i32, i32, i32, i32
  }
  func.func @transform_2(%arg0: i32, %arg1: i32) -> (i32, i32, i32, i32) {
    %c1_i32 = arith.constant 1 : i32
    %0 = arith.addi %arg1, %c1_i32 : i32
    %c8_i32 = arith.constant 8 : i32
    %1 = arith.muli %0, %c8_i32 : i32
    %c7_i32 = arith.constant 7 : i32
    %2 = arith.minsi %1, %c7_i32 : i32
    %c0_i32 = arith.constant 0 : i32
    %c0_i32_0 = arith.constant 0 : i32
    %c0_i32_1 = arith.constant 0 : i32
    return %arg0, %2, %c0_i32, %c0_i32_0 : i32, i32, i32, i32
  }
  func.func @transform_3(%arg0: i32, %arg1: i32) -> (i32, i32, i32) {
    %c0_i32 = arith.constant 0 : i32
    %c0_i32_0 = arith.constant 0 : i32
    %c0_i32_1 = arith.constant 0 : i32
    %c0_i32_2 = arith.constant 0 : i32
    return %c0_i32, %c0_i32_0, %c0_i32_1 : i32, i32, i32
  }
  func.func @transform_4(%arg0: i32, %arg1: i32) -> (i32, i32, i32) {
    %c0_i32 = arith.constant 0 : i32
    %c0_i32_0 = arith.constant 0 : i32
    %c0_i32_1 = arith.constant 0 : i32
    %c0_i32_2 = arith.constant 0 : i32
    return %c0_i32, %c0_i32_0, %c0_i32_1 : i32, i32, i32
  }
  func.func @transform_5(%arg0: i32, %arg1: i32) -> (i32, i32, i32) {
    %c0_i32 = arith.constant 0 : i32
    %c0_i32_0 = arith.constant 0 : i32
    %c0_i32_1 = arith.constant 0 : i32
    %c0_i32_2 = arith.constant 0 : i32
    return %c0_i32, %c0_i32_0, %c0_i32_1 : i32, i32, i32
  }
  func.func @transform_6(%arg0: i32, %arg1: i32) -> (i32, i32, i32, i32) {
    %c0_i32 = arith.constant 0 : i32
    %c0_i32_0 = arith.constant 0 : i32
    %c0_i32_1 = arith.constant 0 : i32
    return %arg0, %arg1, %c0_i32, %c0_i32_0 : i32, i32, i32, i32
  }
  func.func @transform_7(%arg0: i32, %arg1: i32) -> (i32, i32, i32, i32) {
    %c0_i32 = arith.constant 0 : i32
    %c0_i32_0 = arith.constant 0 : i32
    %c0_i32_1 = arith.constant 0 : i32
    return %arg0, %arg1, %c0_i32, %c0_i32_0 : i32, i32, i32, i32
  }
}

module attributes {stable_mosaic.version = 11 : i64} {
  func.func @kernel(%arg0: i32, %arg1: i32, %arg2: memref<1x8x8x128xbf16, #tpu.memory_space<vmem>>, %arg3: memref<1x1x8xf32, #tpu.memory_space<vmem>>, %arg4: memref<1x1x8xf32, #tpu.memory_space<vmem>>, %arg5: memref<1x8x8x8xf32, #tpu.memory_space<vmem>>) attributes {dimension_semantics = [#tpu.dimension_semantics<parallel>, #tpu.dimension_semantics<parallel>], iteration_bounds = array<i64: 2, 1>, scalar_prefetch = 0 : i64, scratch_operands = 0 : i64, tpu.core_type = #tpu.core_type<tc>, window_params = [{transform_indices = @transform_0, window_bounds = array<i64: 1, 8, 8, 128>}, {pipeline_mode = #tpu.pipeline_mode<synchronous>, transform_indices = @transform_1, window_bounds = array<i64: 1, 1, 8>}, {pipeline_mode = #tpu.pipeline_mode<synchronous>, transform_indices = @transform_2, window_bounds = array<i64: 1, 1, 8>}, {transform_indices = @transform_3, window_bounds = array<i64: 1, 8, 8, 8>}]} {
    %c0 = arith.constant 0 : index
    %c0_0 = arith.constant 0 : index
    %c0_1 = arith.constant 0 : index
    %c0_2 = arith.constant 0 : index
    %0 = vector.load %arg2[%c0, %c0_0, %c0_1, %c0_2] : memref<1x8x8x128xbf16, #tpu.memory_space<vmem>>, vector<1x8x8x128xbf16>
    %1 = vector.shape_cast %0 : vector<1x8x8x128xbf16> to vector<8x8x128xbf16>
    %2 = vector.extract_strided_slice %1 {offsets = [0, 0, 0], sizes = [8, 8, 8], strides = [1, 1, 1]} : vector<8x8x128xbf16> to vector<8x8x8xbf16>
    %3 = arith.extf %2 : vector<8x8x8xbf16> to vector<8x8x8xf32>
    %c0_3 = arith.constant 0 : index
    %c0_4 = arith.constant 0 : index
    %c0_5 = arith.constant 0 : index
    %4 = vector.load %arg3[%c0_3, %c0_4, %c0_5] : memref<1x1x8xf32, #tpu.memory_space<vmem>>, vector<1x1x8xf32>
    %5 = vector.broadcast %4 : vector<1x1x8xf32> to vector<8x8x8xf32>
    %6 = arith.mulf %3, %5 : vector<8x8x8xf32>
    %c0_6 = arith.constant 0 : index
    %c0_7 = arith.constant 0 : index
    %c0_8 = arith.constant 0 : index
    %7 = vector.load %arg4[%c0_6, %c0_7, %c0_8] : memref<1x1x8xf32, #tpu.memory_space<vmem>>, vector<1x1x8xf32>
    %8 = vector.broadcast %7 : vector<1x1x8xf32> to vector<8x8x8xf32>
    %9 = arith.addf %6, %8 : vector<8x8x8xf32>
    %cst = arith.constant 0.000000e+00 : f32
    %10 = vector.broadcast %cst : f32 to vector<8x8x8xf32>
    %11 = arith.maximumf %9, %10 : vector<8x8x8xf32>
    %c0_9 = arith.constant 0 : index
    %c0_10 = arith.constant 0 : index
    %c0_11 = arith.constant 0 : index
    %c0_12 = arith.constant 0 : index
    %12 = vector.load %arg5[%c0_9, %c0_10, %c0_11, %c0_12] : memref<1x8x8x8xf32, #tpu.memory_space<vmem>>, vector<1x8x8x8xf32>
    %13 = vector.shape_cast %12 : vector<1x8x8x8xf32> to vector<8x8x8xf32>
    %14 = vector.shape_cast %11 : vector<8x8x8xf32> to vector<1x8x8x8xf32>
    tpu.vector_store %arg5[%c0_9, %c0_10, %c0_11, %c0_12], %14 {strides = array<i32>} : memref<1x8x8x8xf32, #tpu.memory_space<vmem>>, vector<1x8x8x8xf32>,
    return
  }
  func.func @transform_0(%arg0: i32, %arg1: i32) -> (i32, i32, i32, i32) {
    %c0_i32 = arith.constant 0 : i32
    %c0_i32_0 = arith.constant 0 : i32
    %c0_i32_1 = arith.constant 0 : i32
    return %arg0, %arg1, %c0_i32, %c0_i32_0 : i32, i32, i32, i32
  }
  func.func @transform_1(%arg0: i32, %arg1: i32) -> (i32, i32, i32) {
    %c0_i32 = arith.constant 0 : i32
    %c0_i32_0 = arith.constant 0 : i32
    %c0_i32_1 = arith.constant 0 : i32
    %c0_i32_2 = arith.constant 0 : i32
    return %c0_i32, %c0_i32_0, %c0_i32_1 : i32, i32, i32
  }
  func.func @transform_2(%arg0: i32, %arg1: i32) -> (i32, i32, i32) {
    %c0_i32 = arith.constant 0 : i32
    %c0_i32_0 = arith.constant 0 : i32
    %c0_i32_1 = arith.constant 0 : i32
    %c0_i32_2 = arith.constant 0 : i32
    return %c0_i32, %c0_i32_0, %c0_i32_1 : i32, i32, i32
  }
  func.func @transform_3(%arg0: i32, %arg1: i32) -> (i32, i32, i32, i32) {
    %c0_i32 = arith.constant 0 : i32
    %c0_i32_0 = arith.constant 0 : i32
    %c0_i32_1 = arith.constant 0 : i32
    return %arg0, %arg1, %c0_i32, %c0_i32_0 : i32, i32, i32, i32
  }
}

</mosaic_0001>

<llo_original>
// kernel: down_forward.5
$region0: #{down_forward.5}
  #allocation0 [shape = 'u32[]', space=smem, size = 0x4, offset = 0x4, fixed_abs, tag = 'smem constant byte address 0x4 - core index']
  #allocation1 [shape = 'u32[72,128]{1,0:T(1,128)}', space=vmem, size = 0x9000, scoped, tag = 'internal scratch']
  %s0 = inlined_call_operand.vmem [shape: bf16[2,8,8,128], index: 0, kind: input, shape index: {}]
  %s1 = inlined_call_operand.vmem [shape: f32[1,1,8], index: 1, kind: input, shape index: {}]
  %s2 = inlined_call_operand.vmem [shape: f32[1,1,8], index: 2, kind: input, shape index: {}]
  %s3 = inlined_call_operand.vmem [shape: f32[2,8,8,8], index: 3, kind: output, shape index: {}]
  %s4 = sld [smem:[#allocation0]]
  $region45: #{down_forward.5} parent=0
    _
  %s6 = ssub.s32 1, %s4
  %s7 = scalar_select 0, %s6, %s4
  loop: start=0, step=1, limit=4
  $region2: #{down_forward.5} parent=0 // loop_pre_header
    _
  $region3: #{down_forward.5} parent=0 // loop_header
    %s9 = sphi 0, %s13
    %p10 = scmp.ge.s32.totalorder %s9, 4
    %s16 = sphi 0, %s28
    %s17 = sphi 0, %s24
    %s18 = sphi 0, %s16
    %s19 = sphi 0, %s17
    %s20 = sphi 0, %s18
    %s21 = sphi 0, %s19
    %s33 = sphi 0, %s35
    %s36 = sphi 0, %s33
    %s37 = sphi 0, %s36
    %s53 = sphi 0, %s37
    %s57 = sphi 0, %s57
    %s59 = sphi 0, %s57
    %s60 = sphi 0, %s59
    %s74 = sphi 0, %s60
    %s78 = sphi 0, %s78
    %s80 = sphi 0, %s78
    %s81 = sphi 0, %s80
    %s95 = sphi 0, %s81
    %s103 = sphi 0, %s105
    %s106 = sphi 0, %s103
    %s107 = sphi 0, %s106
    %s123 = sphi 0, %s107
  $region4: #{down_forward.5} parent=0 // loop_header_branch
    %12 = sbr.rel (%p10) target = $region8
  $region5: #{down_forward.5} parent=0 // loop_body
    %s14 = ssub.s32 %s9, 1
    %s15 = ssub.s32 %s9, 2
    %s22 = sadd.s32 1, %s17
    %p23 = scmp.ge.s32.totalorder %s22, 1
    %s24 = scalar_select %p23, 0, %s22
    %s25 = sadd.s32 1, %s16
    %s26 = scalar_select %p23, %s25, %s16
    %p27 = scmp.ge.s32.totalorder %s26, 2
    %s28 = scalar_select %p27, 0, %s26
    %s29 = ssub.s32 %s16, %s28
    %s30 = ssub.s32 %s17, %s24
    %s31 = sor.u32 %s29, %s30
    %p32 = scmp.eq.s32.totalorder %s31, 0
    %s34 = sadd.s32 %s33, 1
    %s35 = scalar_select %p32, %s33, %s34
    %p38 = pneg %p32
    %p39 = scmp.eq.s32.totalorder %s9, 1
    %p40 = por %p38, %p39
    %p41 = scmp.ne.s32.totalorder %s33, %s36
    %p42 = scmp.eq.s32.totalorder %s9, 0
    %p43 = por %p41, %p42
    %p44 = scmp.ne.s32.totalorder %s33, %s36
    %p45 = scmp.eq.s32.totalorder %s14, 1
    %p46 = por %p44, %p45
    %p47 = scmp.ne.s32.totalorder %s36, %s37
    %p48 = scmp.eq.s32.totalorder %s14, 0
    %p49 = por %p47, %p48
    %p50 = scmp.ne.s32.totalorder %s36, %s37
    %p51 = scmp.eq.s32.totalorder %s15, 1
    %p52 = por %p50, %p51
    %p54 = scmp.ne.s32.totalorder %s37, %s53
    %p55 = scmp.eq.s32.totalorder %s15, 0
    %p56 = por %p54, %p55
    %s58 = sadd.s32 %s57, 1
    %p61 = scmp.eq.s32.totalorder %s9, 1
    %p62 = scmp.ne.s32.totalorder %s57, %s59
    %p63 = scmp.eq.s32.totalorder %s9, 0
    %p64 = por %p62, %p63
    %p65 = scmp.ne.s32.totalorder %s57, %s59
    %p66 = scmp.eq.s32.totalorder %s14, 1
    %p67 = por %p65, %p66
    %p68 = scmp.ne.s32.totalorder %s59, %s60
    %p69 = scmp.eq.s32.totalorder %s14, 0
    %p70 = por %p68, %p69
    %p71 = scmp.ne.s32.totalorder %s59, %s60
    %p72 = scmp.eq.s32.totalorder %s15, 1
    %p73 = por %p71, %p72
    %p75 = scmp.ne.s32.totalorder %s60, %s74
    %p76 = scmp.eq.s32.totalorder %s15, 0
    %p77 = por %p75, %p76
    %s79 = sadd.s32 %s78, 1
    %p82 = scmp.eq.s32.totalorder %s9, 1
    %p83 = scmp.ne.s32.totalorder %s78, %s80
    %p84 = scmp.eq.s32.totalorder %s9, 0
    %p85 = por %p83, %p84
    %p86 = scmp.ne.s32.totalorder %s78, %s80
    %p87 = scmp.eq.s32.totalorder %s14, 1
    %p88 = por %p86, %p87
    %p89 = scmp.ne.s32.totalorder %s80, %s81
    %p90 = scmp.eq.s32.totalorder %s14, 0
    %p91 = por %p89, %p90
    %p92 = scmp.ne.s32.totalorder %s80, %s81
    %p93 = scmp.eq.s32.totalorder %s15, 1
    %p94 = por %p92, %p93
    %p96 = scmp.ne.s32.totalorder %s81, %s95
    %p97 = scmp.eq.s32.totalorder %s15, 0
    %p98 = por %p96, %p97
    %s99 = ssub.s32 %s16, %s28
    %s100 = ssub.s32 %s17, %s24
    %s101 = sor.u32 %s99, %s100
    %p102 = scmp.eq.s32.totalorder %s101, 0
    %s104 = sadd.s32 %s103, 1
    %s105 = scalar_select %p102, %s103, %s104
    %p108 = pneg %p102
    %p109 = scmp.eq.s32.totalorder %s9, 1
    %p110 = por %p108, %p109
    %p111 = scmp.ne.s32.totalorder %s103, %s106
    %p112 = scmp.eq.s32.totalorder %s9, 0
    %p113 = por %p111, %p112
    %p114 = scmp.ne.s32.totalorder %s103, %s106
    %p115 = scmp.eq.s32.totalorder %s14, 1
    %p116 = por %p114, %p115
    %p117 = scmp.ne.s32.totalorder %s106, %s107
    %p118 = scmp.eq.s32.totalorder %s14, 0
    %p119 = por %p117, %p118
    %p120 = scmp.ne.s32.totalorder %s106, %s107
    %p121 = scmp.eq.s32.totalorder %s15, 1
    %p122 = por %p120, %p121
    %p124 = scmp.ne.s32.totalorder %s107, %s123
    %p125 = scmp.eq.s32.totalorder %s15, 0
    %p126 = por %p124, %p125
    %p127 = scmp.le.s32.totalorder 1, %s9
    %p128 = scmp.lt.s32.totalorder %s9, 3
    %p129 = pnand %p127, %p128
    %p130 = pneg %p129
    // Predicated region
    $region9: #{down_forward.5} parent=5 // pred_check
      _
    $region10: #{down_forward.5} parent=5 // pred_check_branch
      %132 = sbr.rel (%p129) target = $region12
    $region11: #{down_forward.5} parent=5 // pred_region
      %s133 = ssub.s32 %s9, 1
      // Predicated region
      $region13: #{down_forward.5} parent=11 // pred_check
        %p134 = pneg %p70
      $region14: #{down_forward.5} parent=11 // pred_check_branch
        %136 = sbr.rel (%p134) target = $region16
      $region15: #{down_forward.5} parent=11 // pred_region
        _
      $region16: #{down_forward.5} parent=11 // pred_fallthru
        _
      // Predicated region
      $region17: #{down_forward.5} parent=11 // pred_check
        %p137 = pneg %p91
      $region18: #{down_forward.5} parent=11 // pred_check_branch
        %139 = sbr.rel (%p137) target = $region20
      $region19: #{down_forward.5} parent=11 // pred_region
        _
      $region20: #{down_forward.5} parent=11 // pred_fallthru
        _
    $region12: #{down_forward.5} parent=5 // pred_fallthru
      _
    %p140 = scmp.lt.s32.totalorder %s9, 2
    // Predicated region
    $region21: #{down_forward.5} parent=5 // pred_check
      %p141 = pneg %p140
    $region22: #{down_forward.5} parent=5 // pred_check_branch
      %143 = sbr.rel (%p141) target = $region24
    $region23: #{down_forward.5} parent=5 // pred_region
      // Predicated region
      $region25: #{down_forward.5} parent=23 // pred_check
        %p144 = pneg %p43
      $region26: #{down_forward.5} parent=23 // pred_check_branch
        %146 = sbr.rel (%p144) target = $region28
      $region27: #{down_forward.5} parent=23 // pred_region
        %s147 = smul.u32 8, %s17
        %p148 = scmp.lt.s32.totalorder %s16, 1
        %s149 = scalar_select %p148, %s16, 1
        %p150 = scmp.lt.s32.totalorder %s147, 7
        %s151 = scalar_select %p150, %s147, 7
        %s152 = smul.addr %s149, 8
        %s153 = sadd.s32 %s151, %s152
        %s154 = smul.addr %s153, 4
        %s155 = scalar_lea.vmem %s0, %s154
        %s156 = smul.u32 8, %s17
      $region28: #{down_forward.5} parent=23 // pred_fallthru
        _
    $region24: #{down_forward.5} parent=5 // pred_fallthru
      _
    %p157 = scmp.le.s32.totalorder 1, %s9
    %p158 = scmp.lt.s32.totalorder %s9, 3
    %p159 = pnand %p157, %p158
    %p160 = pneg %p159
    // Predicated region
    $region29: #{down_forward.5} parent=5 // pred_check
      _
    $region30: #{down_forward.5} parent=5 // pred_check_branch
      %162 = sbr.rel (%p159) target = $region32
    $region31: #{down_forward.5} parent=5 // pred_region
      %s163 = ssub.s32 %s9, 1
      %s164 = smul.u32 8, %s19
      %p165 = scmp.lt.s32.totalorder %s18, 1
      %s166 = scalar_select %p165, %s18, 1
      %p167 = scmp.lt.s32.totalorder %s164, 7
      %s168 = scalar_select %p167, %s164, 7
      %s169 = smul.addr %s166, 8
      %s170 = sadd.s32 %s168, %s169
      %s171 = smul.addr %s170, 4
      %s172 = scalar_lea.vmem %s0, %s171
      %p173 = pneg %p49
      %p174 = pneg %p46
      %p175 = pneg %p70
      %p176 = pneg %p67
      %p177 = pneg %p91
      %p178 = pneg %p88
      %p179 = pneg %p119
      %p180 = pneg %p116
      %s181 = smul.u32 8, %s19
      %p182 = scmp.lt.s32.totalorder %s18, 1
      %s183 = scalar_select %p182, %s18, 1
      %p184 = scmp.lt.s32.totalorder %s181, 7
      %s185 = scalar_select %p184, %s181, 7
      %s186 = smul.addr %s183, 8
      %s187 = sadd.s32 %s185, %s186
      %s188 = smul.addr %s187, 8
      %s189 = scalar_lea.vmem %s3, %s188
      %s190 = smul.u32 8, %s19
      %p191 = scmp.lt.s32.totalorder %s18, 1
      %s192 = scalar_select %p191, %s18, 1
      %p193 = scmp.lt.s32.totalorder %s190, 7
      %s194 = scalar_select %p193, %s190, 7
      %s195 = smul.addr %s192, 8
      %s196 = sadd.s32 %s194, %s195
      %s197 = smul.addr %s196, 4
      %s198 = scalar_lea.vmem %s0, %s197
      %s199 = smul.u32 8, %s19
      %s200 = smul.u32 8, %s19
      %p201 = scmp.lt.s32.totalorder %s18, 1
      %s202 = scalar_select %p201, %s18, 1
      %p203 = scmp.lt.s32.totalorder %s200, 7
      %s204 = scalar_select %p203, %s200, 7
      %s205 = smul.addr %s202, 8
      %s206 = sadd.s32 %s204, %s205
      %s207 = smul.addr %s206, 8
      %s208 = scalar_lea.vmem %s3, %s207
      %s209 = smul.u32 8, %s19
      %v210 = vld [vmem:[%s198] sm:$0xf]
      %v211 = vld [vmem:[%s198 + $0x4] sm:$0xf]
      %v212 = vld [vmem:[%s198 + $0x8] sm:$0xf]
      %v213 = vld [vmem:[%s198 + $0xc] sm:$0xf]
      %v214 = vld [vmem:[%s198 + $0x10] sm:$0xf]
      %v215 = vld [vmem:[%s198 + $0x14] sm:$0xf]
      %v216 = vld [vmem:[%s198 + $0x18] sm:$0xf]
      %v217 = vld [vmem:[%s198 + $0x1c] sm:$0xf]
      %v218 = vunpack.c.l.bf16 %v210
      %v219 = vunpack.c.l.bf16 %v211
      %v220 = vunpack.c.l.bf16 %v212
      %v221 = vunpack.c.l.bf16 %v213
      %v222 = vunpack.c.l.bf16 %v214
      %v223 = vunpack.c.l.bf16 %v215
      %v224 = vunpack.c.l.bf16 %v216
      %v225 = vunpack.c.l.bf16 %v217
      %v226 = vld [vmem:[%s1] sm:$0x1]
      %v228 = vperm.slane %v226, 0
      %v230 = vmul.f32 %v218, %v228
      %v231 = vmul.f32 %v219, %v228
      %v232 = vmul.f32 %v220, %v228
      %v233 = vmul.f32 %v221, %v228
      %v234 = vmul.f32 %v222, %v228
      %v235 = vmul.f32 %v223, %v228
      %v236 = vmul.f32 %v224, %v228
      %v237 = vmul.f32 %v225, %v228
      %v238 = vld [vmem:[%s2] sm:$0x1]
      %v240 = vperm.slane %v238, 0
      %v242 = vadd.f32 %v230, %v240
      %v243 = vadd.f32 %v231, %v240
      %v244 = vadd.f32 %v232, %v240
      %v245 = vadd.f32 %v233, %v240
      %v246 = vadd.f32 %v234, %v240
      %v247 = vadd.f32 %v235, %v240
      %v248 = vadd.f32 %v236, %v240
      %v249 = vadd.f32 %v237, %v240
      %v250 = vmax.f32 %v242, 0.0
      %v251 = vmax.f32 %v243, 0.0
      %v252 = vmax.f32 %v244, 0.0
      %v253 = vmax.f32 %v245, 0.0
      %v254 = vmax.f32 %v246, 0.0
      %v255 = vmax.f32 %v247, 0.0
      %v256 = vmax.f32 %v248, 0.0
      %v257 = vmax.f32 %v249, 0.0
      %vm258 = vcmask 64512
      %259 = vst.msk [vmem:[%s208] sm:$0xff] %vm258, %v250
      %260 = vst.msk [vmem:[%s208 + $0x8] sm:$0xff] %vm258, %v251
      %261 = vst.msk [vmem:[%s208 + $0x10] sm:$0xff] %vm258, %v252
      %262 = vst.msk [vmem:[%s208 + $0x18] sm:$0xff] %vm258, %v253
      %263 = vst.msk [vmem:[%s208 + $0x20] sm:$0xff] %vm258, %v254
      %264 = vst.msk [vmem:[%s208 + $0x28] sm:$0xff] %vm258, %v255
      %265 = vst.msk [vmem:[%s208 + $0x30] sm:$0xff] %vm258, %v256
      %266 = vst.msk [vmem:[%s208 + $0x38] sm:$0xff] %vm258, %v257
      %s267 = smul.u32 8, %s19
      %p268 = scmp.lt.s32.totalorder %s18, 1
      %s269 = scalar_select %p268, %s18, 1
      %p270 = scmp.lt.s32.totalorder %s267, 7
      %s271 = scalar_select %p270, %s267, 7
      %s272 = smul.addr %s269, 8
      %s273 = sadd.s32 %s271, %s272
      %s274 = smul.addr %s273, 8
      %s275 = scalar_lea.vmem %s3, %s274
      // Predicated region
      $region33: #{down_forward.5} parent=31 // pred_check
        %p276 = pneg %p116
      $region34: #{down_forward.5} parent=31 // pred_check_branch
        %278 = sbr.rel (%p276) target = $region36
      $region35: #{down_forward.5} parent=31 // pred_region
        %s279 = smul.u32 8, %s19
      $region36: #{down_forward.5} parent=31 // pred_fallthru
        _
    $region32: #{down_forward.5} parent=5 // pred_fallthru
      _
    %p280 = scmp.le.s32.totalorder 2, %s9
    // Predicated region
    $region37: #{down_forward.5} parent=5 // pred_check
      %p281 = pneg %p280
    $region38: #{down_forward.5} parent=5 // pred_check_branch
      %283 = sbr.rel (%p281) target = $region40
    $region39: #{down_forward.5} parent=5 // pred_region
      %s284 = ssub.s32 %s9, 2
      // Predicated region
      $region41: #{down_forward.5} parent=39 // pred_check
        %p285 = pneg %p122
      $region42: #{down_forward.5} parent=39 // pred_check_branch
        %287 = sbr.rel (%p285) target = $region44
      $region43: #{down_forward.5} parent=39 // pred_region
        %s288 = smul.u32 8, %s21
        %p289 = scmp.lt.s32.totalorder %s20, 1
        %s290 = scalar_select %p289, %s20, 1
        %p291 = scmp.lt.s32.totalorder %s288, 7
        %s292 = scalar_select %p291, %s288, 7
        %s293 = smul.addr %s290, 8
        %s294 = sadd.s32 %s292, %s293
        %s295 = smul.addr %s294, 8
        %s296 = scalar_lea.vmem %s3, %s295
      $region44: #{down_forward.5} parent=39 // pred_fallthru
        _
    $region40: #{down_forward.5} parent=5 // pred_fallthru
      _
  $region6: #{down_forward.5} parent=0 // loop_footer
    %s13 = sadd.s32 1, %s9
  $region7: #{down_forward.5} parent=0 // loop_footer_branch
    %8 = sbr.rel target = $region3
  $region8: #{down_forward.5} parent=0 // loop_exit
    _

// kernel: down_forward.3
$region0: #{down_forward.3}
  #allocation0 [shape = 'u32[]', space=smem, size = 0x4, offset = 0x4, fixed_abs, tag = 'smem constant byte address 0x4 - core index']
  #allocation1 [shape = 'u32[72,128]{1,0:T(1,128)}', space=vmem, size = 0x9000, scoped, tag = 'internal scratch']
  #allocation2 [shape = 'bf16[10,10,128]{2,1,0:T(8,128)(2,1)}', space=vmem, size = 0xa000, scoped, tag = 'scratch operand']
  %s0 = inlined_call_operand.vmem [shape: bf16[2,8,8,128], index: 0, kind: input, shape index: {}, may-alias: {0,1,2}]
  %s1 = inlined_call_operand.vmem [shape: bf16[2,8,8,128], index: 1, kind: input, shape index: {}, may-alias: {0,1,2}]
  %s2 = inlined_call_operand.vmem [shape: bf16[2,8,8,128], index: 2, kind: input, shape index: {}, may-alias: {0,1,2}]
  %s3 = inlined_call_operand.vmem [shape: bf16[9,128,128], index: 3, kind: input, shape index: {}]
  %s4 = inlined_call_operand.vmem [shape: f32[1,1,128], index: 4, kind: input, shape index: {}, may-alias: {4,5}]
  %s5 = inlined_call_operand.vmem [shape: f32[1,1,128], index: 5, kind: input, shape index: {}, may-alias: {4,5}]
  %s6 = inlined_call_operand.vmem [shape: bf16[2,8,8,128], index: 6, kind: output, shape index: {0}]
  %s7 = inlined_call_operand.vmem [shape: f32[2,1,2,128], index: 7, kind: output, shape index: {1}]
  %8 = xla_tuple %s6, %s7
  %s9 = sld [smem:[#allocation0]]
  $region81: #{down_forward.3} parent=0
    _
  %s11 = ssub.s32 1, %s9
  %s12 = scalar_select 0, %s11, %s9
  loop: start=0, step=1, limit=4
  $region2: #{down_forward.3} parent=0 // loop_pre_header
    _
  $region3: #{down_forward.3} parent=0 // loop_header
    %s14 = sphi 0, %s18
    %p15 = scmp.ge.s32.totalorder %s14, 4
    %s21 = sphi 0, %s33
    %s22 = sphi 0, %s29
    %s23 = sphi 0, %s21
    %s24 = sphi 0, %s22
    %s25 = sphi 0, %s23
    %s26 = sphi 0, %s24
    %s38 = sphi 0, %s40
    %s41 = sphi 0, %s38
    %s42 = sphi 0, %s41
    %s58 = sphi 0, %s42
    %s74 = sphi 0, %s76
    %s77 = sphi 0, %s74
    %s78 = sphi 0, %s77
    %s94 = sphi 0, %s78
    %s110 = sphi 0, %s112
    %s113 = sphi 0, %s110
    %s114 = sphi 0, %s113
    %s130 = sphi 0, %s114
    %s134 = sphi 0, %s134
    %s136 = sphi 0, %s134
    %s137 = sphi 0, %s136
    %s151 = sphi 0, %s137
    %s155 = sphi 0, %s155
    %s157 = sphi 0, %s155
    %s158 = sphi 0, %s157
    %s172 = sphi 0, %s158
    %s176 = sphi 0, %s176
    %s178 = sphi 0, %s176
    %s179 = sphi 0, %s178
    %s193 = sphi 0, %s179
    %s201 = sphi 0, %s203
    %s204 = sphi 0, %s201
    %s205 = sphi 0, %s204
    %s221 = sphi 0, %s205
    %s229 = sphi 0, %s231
    %s232 = sphi 0, %s229
    %s233 = sphi 0, %s232
    %s249 = sphi 0, %s233
  $region4: #{down_forward.3} parent=0 // loop_header_branch
    %17 = sbr.rel (%p15) target = $region8
  $region5: #{down_forward.3} parent=0 // loop_body
    %s19 = ssub.s32 %s14, 1
    %s20 = ssub.s32 %s14, 2
    %s27 = sadd.s32 1, %s22
    %p28 = scmp.ge.s32.totalorder %s27, 1
    %s29 = scalar_select %p28, 0, %s27
    %s30 = sadd.s32 1, %s21
    %s31 = scalar_select %p28, %s30, %s21
    %p32 = scmp.ge.s32.totalorder %s31, 2
    %s33 = scalar_select %p32, 0, %s31
    %s34 = ssub.s32 %s21, %s33
    %s35 = ssub.s32 %s22, %s29
    %s36 = sor.u32 %s34, %s35
    %p37 = scmp.eq.s32.totalorder %s36, 0
    %s39 = sadd.s32 %s38, 1
    %s40 = scalar_select %p37, %s38, %s39
    %p43 = pneg %p37
    %p44 = scmp.eq.s32.totalorder %s14, 1
    %p45 = por %p43, %p44
    %p46 = scmp.ne.s32.totalorder %s38, %s41
    %p47 = scmp.eq.s32.totalorder %s14, 0
    %p48 = por %p46, %p47
    %p49 = scmp.ne.s32.totalorder %s38, %s41
    %p50 = scmp.eq.s32.totalorder %s19, 1
    %p51 = por %p49, %p50
    %p52 = scmp.ne.s32.totalorder %s41, %s42
    %p53 = scmp.eq.s32.totalorder %s19, 0
    %p54 = por %p52, %p53
    %p55 = scmp.ne.s32.totalorder %s41, %s42
    %p56 = scmp.eq.s32.totalorder %s20, 1
    %p57 = por %p55, %p56
    %p59 = scmp.ne.s32.totalorder %s42, %s58
    %p60 = scmp.eq.s32.totalorder %s20, 0
    %p61 = por %p59, %p60
    %s62 = smul.u32 %s22, 8
    %s63 = ssub.s32 %s62, 1
    %p64 = scmp.gt.s32.totalorder %s63, 0
    %s65 = scalar_select %p64, %s63, 0
    %s66 = smul.u32 %s29, 8
    %s67 = ssub.s32 %s66, 1
    %p68 = scmp.gt.s32.totalorder %s67, 0
    %s69 = scalar_select %p68, %s67, 0
    %s70 = ssub.s32 %s21, %s33
    %s71 = ssub.s32 %s65, %s69
    %s72 = sor.u32 %s70, %s71
    %p73 = scmp.eq.s32.totalorder %s72, 0
    %s75 = sadd.s32 %s74, 1
    %s76 = scalar_select %p73, %s74, %s75
    %p79 = pneg %p73
    %p80 = scmp.eq.s32.totalorder %s14, 1
    %p81 = por %p79, %p80
    %p82 = scmp.ne.s32.totalorder %s74, %s77
    %p83 = scmp.eq.s32.totalorder %s14, 0
    %p84 = por %p82, %p83
    %p85 = scmp.ne.s32.totalorder %s74, %s77
    %p86 = scmp.eq.s32.totalorder %s19, 1
    %p87 = por %p85, %p86
    %p88 = scmp.ne.s32.totalorder %s77, %s78
    %p89 = scmp.eq.s32.totalorder %s19, 0
    %p90 = por %p88, %p89
    %p91 = scmp.ne.s32.totalorder %s77, %s78
    %p92 = scmp.eq.s32.totalorder %s20, 1
    %p93 = por %p91, %p92
    %p95 = scmp.ne.s32.totalorder %s78, %s94
    %p96 = scmp.eq.s32.totalorder %s20, 0
    %p97 = por %p95, %p96
    %s98 = sadd.s32 %s22, 1
    %s99 = smul.u32 %s98, 8
    %p100 = scmp.lt.s32.totalorder %s99, 7
    %s101 = scalar_select %p100, %s99, 7
    %s102 = sadd.s32 %s29, 1
    %s103 = smul.u32 %s102, 8
    %p104 = scmp.lt.s32.totalorder %s103, 7
    %s105 = scalar_select %p104, %s103, 7
    %s106 = ssub.s32 %s21, %s33
    %s107 = ssub.s32 %s101, %s105
    %s108 = sor.u32 %s106, %s107
    %p109 = scmp.eq.s32.totalorder %s108, 0
    %s111 = sadd.s32 %s110, 1
    %s112 = scalar_select %p109, %s110, %s111
    %p115 = pneg %p109
    %p116 = scmp.eq.s32.totalorder %s14, 1
    %p117 = por %p115, %p116
    %p118 = scmp.ne.s32.totalorder %s110, %s113
    %p119 = scmp.eq.s32.totalorder %s14, 0
    %p120 = por %p118, %p119
    %p121 = scmp.ne.s32.totalorder %s110, %s113
    %p122 = scmp.eq.s32.totalorder %s19, 1
    %p123 = por %p121, %p122
    %p124 = scmp.ne.s32.totalorder %s113, %s114
    %p125 = scmp.eq.s32.totalorder %s19, 0
    %p126 = por %p124, %p125
    %p127 = scmp.ne.s32.totalorder %s113, %s114
    %p128 = scmp.eq.s32.totalorder %s20, 1
    %p129 = por %p127, %p128
    %p131 = scmp.ne.s32.totalorder %s114, %s130
    %p132 = scmp.eq.s32.totalorder %s20, 0
    %p133 = por %p131, %p132
    %s135 = sadd.s32 %s134, 1
    %p138 = scmp.eq.s32.totalorder %s14, 1
    %p139 = scmp.ne.s32.totalorder %s134, %s136
    %p140 = scmp.eq.s32.totalorder %s14, 0
    %p141 = por %p139, %p140
    %p142 = scmp.ne.s32.totalorder %s134, %s136
    %p143 = scmp.eq.s32.totalorder %s19, 1
    %p144 = por %p142, %p143
    %p145 = scmp.ne.s32.totalorder %s136, %s137
    %p146 = scmp.eq.s32.totalorder %s19, 0
    %p147 = por %p145, %p146
    %p148 = scmp.ne.s32.totalorder %s136, %s137
    %p149 = scmp.eq.s32.totalorder %s20, 1
    %p150 = por %p148, %p149
    %p152 = scmp.ne.s32.totalorder %s137, %s151
    %p153 = scmp.eq.s32.totalorder %s20, 0
    %p154 = por %p152, %p153
    %s156 = sadd.s32 %s155, 1
    %p159 = scmp.eq.s32.totalorder %s14, 1
    %p160 = scmp.ne.s32.totalorder %s155, %s157
    %p161 = scmp.eq.s32.totalorder %s14, 0
    %p162 = por %p160, %p161
    %p163 = scmp.ne.s32.totalorder %s155, %s157
    %p164 = scmp.eq.s32.totalorder %s19, 1
    %p165 = por %p163, %p164
    %p166 = scmp.ne.s32.totalorder %s157, %s158
    %p167 = scmp.eq.s32.totalorder %s19, 0
    %p168 = por %p166, %p167
    %p169 = scmp.ne.s32.totalorder %s157, %s158
    %p170 = scmp.eq.s32.totalorder %s20, 1
    %p171 = por %p169, %p170
    %p173 = scmp.ne.s32.totalorder %s158, %s172
    %p174 = scmp.eq.s32.totalorder %s20, 0
    %p175 = por %p173, %p174
    %s177 = sadd.s32 %s176, 1
    %p180 = scmp.eq.s32.totalorder %s14, 1
    %p181 = scmp.ne.s32.totalorder %s176, %s178
    %p182 = scmp.eq.s32.totalorder %s14, 0
    %p183 = por %p181, %p182
    %p184 = scmp.ne.s32.totalorder %s176, %s178
    %p185 = scmp.eq.s32.totalorder %s19, 1
    %p186 = por %p184, %p185
    %p187 = scmp.ne.s32.totalorder %s178, %s179
    %p188 = scmp.eq.s32.totalorder %s19, 0
    %p189 = por %p187, %p188
    %p190 = scmp.ne.s32.totalorder %s178, %s179
    %p191 = scmp.eq.s32.totalorder %s20, 1
    %p192 = por %p190, %p191
    %p194 = scmp.ne.s32.totalorder %s179, %s193
    %p195 = scmp.eq.s32.totalorder %s20, 0
    %p196 = por %p194, %p195
    %s197 = ssub.s32 %s21, %s33
    %s198 = ssub.s32 %s22, %s29
    %s199 = sor.u32 %s197, %s198
    %p200 = scmp.eq.s32.totalorder %s199, 0
    %s202 = sadd.s32 %s201, 1
    %s203 = scalar_select %p200, %s201, %s202
    %p206 = pneg %p200
    %p207 = scmp.eq.s32.totalorder %s14, 1
    %p208 = por %p206, %p207
    %p209 = scmp.ne.s32.totalorder %s201, %s204
    %p210 = scmp.eq.s32.totalorder %s14, 0
    %p211 = por %p209, %p210
    %p212 = scmp.ne.s32.totalorder %s201, %s204
    %p213 = scmp.eq.s32.totalorder %s19, 1
    %p214 = por %p212, %p213
    %p215 = scmp.ne.s32.totalorder %s204, %s205
    %p216 = scmp.eq.s32.totalorder %s19, 0
    %p217 = por %p215, %p216
    %p218 = scmp.ne.s32.totalorder %s204, %s205
    %p219 = scmp.eq.s32.totalorder %s20, 1
    %p220 = por %p218, %p219
    %p222 = scmp.ne.s32.totalorder %s205, %s221
    %p223 = scmp.eq.s32.totalorder %s20, 0
    %p224 = por %p222, %p223
    %s225 = ssub.s32 %s21, %s33
    %s226 = ssub.s32 %s22, %s29
    %s227 = sor.u32 %s225, %s226
    %p228 = scmp.eq.s32.totalorder %s227, 0
    %s230 = sadd.s32 %s229, 1
    %s231 = scalar_select %p228, %s229, %s230
    %p234 = pneg %p228
    %p235 = scmp.eq.s32.totalorder %s14, 1
    %p236 = por %p234, %p235
    %p237 = scmp.ne.s32.totalorder %s229, %s232
    %p238 = scmp.eq.s32.totalorder %s14, 0
    %p239 = por %p237, %p238
    %p240 = scmp.ne.s32.totalorder %s229, %s232
    %p241 = scmp.eq.s32.totalorder %s19, 1
    %p242 = por %p240, %p241
    %p243 = scmp.ne.s32.totalorder %s232, %s233
    %p244 = scmp.eq.s32.totalorder %s19, 0
    %p245 = por %p243, %p244
    %p246 = scmp.ne.s32.totalorder %s232, %s233
    %p247 = scmp.eq.s32.totalorder %s20, 1
    %p248 = por %p246, %p247
    %p250 = scmp.ne.s32.totalorder %s233, %s249
    %p251 = scmp.eq.s32.totalorder %s20, 0
    %p252 = por %p250, %p251
    %p253 = scmp.le.s32.totalorder 1, %s14
    %p254 = scmp.lt.s32.totalorder %s14, 3
    %p255 = pnand %p253, %p254
    %p256 = pneg %p255
    // Predicated region
    $region9: #{down_forward.3} parent=5 // pred_check
      _
    $region10: #{down_forward.3} parent=5 // pred_check_branch
      %258 = sbr.rel (%p255) target = $region12
    $region11: #{down_forward.3} parent=5 // pred_region
      %s259 = ssub.s32 %s14, 1
      // Predicated region
      $region13: #{down_forward.3} parent=11 // pred_check
        %p260 = pneg %p147
      $region14: #{down_forward.3} parent=11 // pred_check_branch
        %262 = sbr.rel (%p260) target = $region16
      $region15: #{down_forward.3} parent=11 // pred_region
        _
      $region16: #{down_forward.3} parent=11 // pred_fallthru
        _
      // Predicated region
      $region17: #{down_forward.3} parent=11 // pred_check
        %p263 = pneg %p168
      $region18: #{down_forward.3} parent=11 // pred_check_branch
        %265 = sbr.rel (%p263) target = $region20
      $region19: #{down_forward.3} parent=11 // pred_region
        _
      $region20: #{down_forward.3} parent=11 // pred_fallthru
        _
      // Predicated region
      $region21: #{down_forward.3} parent=11 // pred_check
        %p266 = pneg %p189
      $region22: #{down_forward.3} parent=11 // pred_check_branch
        %268 = sbr.rel (%p266) target = $region24
      $region23: #{down_forward.3} parent=11 // pred_region
        _
      $region24: #{down_forward.3} parent=11 // pred_fallthru
        _
    $region12: #{down_forward.3} parent=5 // pred_fallthru
      _
    %p269 = scmp.lt.s32.totalorder %s14, 2
    // Predicated region
    $region25: #{down_forward.3} parent=5 // pred_check
      %p270 = pneg %p269
    $region26: #{down_forward.3} parent=5 // pred_check_branch
      %272 = sbr.rel (%p270) target = $region28
    $region27: #{down_forward.3} parent=5 // pred_region
      // Predicated region
      $region29: #{down_forward.3} parent=27 // pred_check
        %p273 = pneg %p48
      $region30: #{down_forward.3} parent=27 // pred_check_branch
        %275 = sbr.rel (%p273) target = $region32
      $region31: #{down_forward.3} parent=27 // pred_region
        %s276 = smul.u32 8, %s22
        %p277 = scmp.lt.s32.totalorder %s21, 1
        %s278 = scalar_select %p277, %s21, 1
        %p279 = scmp.lt.s32.totalorder %s276, 7
        %s280 = scalar_select %p279, %s276, 7
        %s281 = smul.addr %s278, 8
        %s282 = sadd.s32 %s280, %s281
        %s283 = smul.addr %s282, 4
        %s284 = scalar_lea.vmem %s0, %s283
        %s285 = smul.u32 8, %s22
      $region32: #{down_forward.3} parent=27 // pred_fallthru
        _
      // Predicated region
      $region33: #{down_forward.3} parent=27 // pred_check
        %p286 = pneg %p84
      $region34: #{down_forward.3} parent=27 // pred_check_branch
        %288 = sbr.rel (%p286) target = $region36
      $region35: #{down_forward.3} parent=27 // pred_region
        %s289 = smul.u32 %s22, 8
        %s290 = ssub.s32 %s289, 1
        %p291 = scmp.gt.s32.totalorder %s290, 0
        %s292 = scalar_select %p291, %s290, 0
        %p293 = scmp.lt.s32.totalorder %s21, 1
        %s294 = scalar_select %p293, %s21, 1
        %p295 = scmp.lt.s32.totalorder %s292, 7
        %s296 = scalar_select %p295, %s292, 7
        %s297 = smul.addr %s294, 8
        %s298 = sadd.s32 %s296, %s297
        %s299 = smul.addr %s298, 4
        %s300 = scalar_lea.vmem %s1, %s299
        %s301 = smul.u32 %s22, 8
        %s302 = ssub.s32 %s301, 1
        %p303 = scmp.gt.s32.totalorder %s302, 0
        %s304 = scalar_select %p303, %s302, 0
      $region36: #{down_forward.3} parent=27 // pred_fallthru
        _
      // Predicated region
      $region37: #{down_forward.3} parent=27 // pred_check
        %p305 = pneg %p120
      $region38: #{down_forward.3} parent=27 // pred_check_branch
        %307 = sbr.rel (%p305) target = $region40
      $region39: #{down_forward.3} parent=27 // pred_region
        %s308 = sadd.s32 %s22, 1
        %s309 = smul.u32 %s308, 8
        %p310 = scmp.lt.s32.totalorder %s309, 7
        %s311 = scalar_select %p310, %s309, 7
        %p312 = scmp.lt.s32.totalorder %s21, 1
        %s313 = scalar_select %p312, %s21, 1
        %p314 = scmp.lt.s32.totalorder %s311, 7
        %s315 = scalar_select %p314, %s311, 7
        %s316 = smul.addr %s313, 8
        %s317 = sadd.s32 %s315, %s316
        %s318 = smul.addr %s317, 4
        %s319 = scalar_lea.vmem %s2, %s318
        %s320 = sadd.s32 %s22, 1
        %s321 = smul.u32 %s320, 8
        %p322 = scmp.lt.s32.totalorder %s321, 7
        %s323 = scalar_select %p322, %s321, 7
      $region40: #{down_forward.3} parent=27 // pred_fallthru
        _
    $region28: #{down_forward.3} parent=5 // pred_fallthru
      _
    %p324 = scmp.le.s32.totalorder 1, %s14
    %p325 = scmp.lt.s32.totalorder %s14, 3
    %p326 = pnand %p324, %p325
    %p327 = pneg %p326
    // Predicated region
    $region41: #{down_forward.3} parent=5 // pred_check
      _
    $region42: #{down_forward.3} parent=5 // pred_check_branch
      %329 = sbr.rel (%p326) target = $region44
    $region43: #{down_forward.3} parent=5 // pred_region
      %s330 = ssub.s32 %s14, 1
      %s331 = smul.u32 8, %s24
      %p332 = scmp.lt.s32.totalorder %s23, 1
      %s333 = scalar_select %p332, %s23, 1
      %p334 = scmp.lt.s32.totalorder %s331, 7
      %s335 = scalar_select %p334, %s331, 7
      %s336 = smul.addr %s333, 8
      %s337 = sadd.s32 %s335, %s336
      %s338 = smul.addr %s337, 4
      %s339 = scalar_lea.vmem %s0, %s338
      %p340 = pneg %p54
      %p341 = pneg %p51
      %s342 = smul.u32 %s24, 8
      %s343 = ssub.s32 %s342, 1
      %p344 = scmp.gt.s32.totalorder %s343, 0
      %s345 = scalar_select %p344, %s343, 0
      %p346 = scmp.lt.s32.totalorder %s23, 1
      %s347 = scalar_select %p346, %s23, 1
      %p348 = scmp.lt.s32.totalorder %s345, 7
      %s349 = scalar_select %p348, %s345, 7
      %s350 = smul.addr %s347, 8
      %s351 = sadd.s32 %s349, %s350
      %s352 = smul.addr %s351, 4
      %s353 = scalar_lea.vmem %s1, %s352
      %p354 = pneg %p90
      %p355 = pneg %p87
      %s356 = sadd.s32 %s24, 1
      %s357 = smul.u32 %s356, 8
      %p358 = scmp.lt.s32.totalorder %s357, 7
      %s359 = scalar_select %p358, %s357, 7
      %p360 = scmp.lt.s32.totalorder %s23, 1
      %s361 = scalar_select %p360, %s23, 1
      %p362 = scmp.lt.s32.totalorder %s359, 7
      %s363 = scalar_select %p362, %s359, 7
      %s364 = smul.addr %s361, 8
      %s365 = sadd.s32 %s363, %s364
      %s366 = smul.addr %s365, 4
      %s367 = scalar_lea.vmem %s2, %s366
      %p368 = pneg %p126
      %p369 = pneg %p123
      %p370 = pneg %p147
      %p371 = pneg %p144
      %p372 = pneg %p168
      %p373 = pneg %p165
      %p374 = pneg %p189
      %p375 = pneg %p186
      %p376 = pneg %p217
      %p377 = pneg %p214
      %s378 = smul.u32 8, %s24
      %p379 = scmp.lt.s32.totalorder %s23, 1
      %s380 = scalar_select %p379, %s23, 1
      %p381 = scmp.lt.s32.totalorder %s378, 7
      %s382 = scalar_select %p381, %s378, 7
      %s383 = smul.addr %s380, 8
      %s384 = sadd.s32 %s382, %s383
      %s385 = smul.addr %s384, 4
      %s386 = scalar_lea.vmem %s6, %s385
      %p387 = pneg %p245
      %p388 = pneg %p242
      %p389 = scmp.lt.s32.totalorder %s23, 1
      %s390 = scalar_select %p389, %s23, 1
      %p391 = scmp.lt.s32.totalorder %s24, 0
      %s392 = scalar_select %p391, %s24, 0
      %s393 = sadd.s32 %s392, %s390
      %s394 = smul.addr %s393, 2
      %s395 = scalar_lea.vmem %s7, %s394
      %s396 = smul.u32 8, %s24
      %p397 = scmp.lt.s32.totalorder %s23, 1
      %s398 = scalar_select %p397, %s23, 1
      %p399 = scmp.lt.s32.totalorder %s396, 7
      %s400 = scalar_select %p399, %s396, 7
      %s401 = smul.addr %s398, 8
      %s402 = sadd.s32 %s400, %s401
      %s403 = smul.addr %s402, 4
      %s404 = scalar_lea.vmem %s0, %s403
      %s405 = smul.u32 8, %s24
      %s406 = smul.u32 %s24, 8
      %s407 = ssub.s32 %s406, 1
      %p408 = scmp.gt.s32.totalorder %s407, 0
      %s409 = scalar_select %p408, %s407, 0
      %p410 = scmp.lt.s32.totalorder %s23, 1
      %s411 = scalar_select %p410, %s23, 1
      %p412 = scmp.lt.s32.totalorder %s409, 7
      %s413 = scalar_select %p412, %s409, 7
      %s414 = smul.addr %s411, 8
      %s415 = sadd.s32 %s413, %s414
      %s416 = smul.addr %s415, 4
      %s417 = scalar_lea.vmem %s1, %s416
      %s418 = smul.u32 %s24, 8
      %s419 = ssub.s32 %s418, 1
      %p420 = scmp.gt.s32.totalorder %s419, 0
      %s421 = scalar_select %p420, %s419, 0
      %s422 = sadd.s32 %s24, 1
      %s423 = smul.u32 %s422, 8
      %p424 = scmp.lt.s32.totalorder %s423, 7
      %s425 = scalar_select %p424, %s423, 7
      %p426 = scmp.lt.s32.totalorder %s23, 1
      %s427 = scalar_select %p426, %s23, 1
      %p428 = scmp.lt.s32.totalorder %s425, 7
      %s429 = scalar_select %p428, %s425, 7
      %s430 = smul.addr %s427, 8
      %s431 = sadd.s32 %s429, %s430
      %s432 = smul.addr %s431, 4
      %s433 = scalar_lea.vmem %s2, %s432
      %s434 = sadd.s32 %s24, 1
      %s435 = smul.u32 %s434, 8
      %p436 = scmp.lt.s32.totalorder %s435, 7
      %s437 = scalar_select %p436, %s435, 7
      %s438 = smul.u32 8, %s24
      %p439 = scmp.lt.s32.totalorder %s23, 1
      %s440 = scalar_select %p439, %s23, 1
      %p441 = scmp.lt.s32.totalorder %s438, 7
      %s442 = scalar_select %p441, %s438, 7
      %s443 = smul.addr %s440, 8
      %s444 = sadd.s32 %s442, %s443
      %s445 = smul.addr %s444, 4
      %s446 = scalar_lea.vmem %s6, %s445
      %s447 = smul.u32 8, %s24
      %p448 = scmp.lt.s32.totalorder %s23, 1
      %s449 = scalar_select %p448, %s23, 1
      %p450 = scmp.lt.s32.totalorder %s24, 0
      %s451 = scalar_select %p450, %s24, 0
      %s452 = sadd.s32 %s451, %s449
      %s453 = smul.addr %s452, 2
      %s454 = scalar_lea.vmem %s7, %s453
      %vm456 = vcmask 1040384
      %vm457 = vsmask.f32 256
      %vm458 = vmand %vm456, %vm457
      %v459 = vld [vmem:[#allocation2] sm:$0x1]
      %v460 = vsel %vm458, 0, %v459
      %461 = vst [vmem:[#allocation2] sm:$0x1] %v460
      %v462 = vld [vmem:[#allocation2 + $0x8] sm:$0x1]
      %v463 = vsel %vm458, 0, %v462
      %464 = vst [vmem:[#allocation2 + $0x8] sm:$0x1] %v463
      %v465 = vld [vmem:[#allocation2 + $0x10] sm:$0x1]
      %v466 = vsel %vm458, 0, %v465
      %467 = vst [vmem:[#allocation2 + $0x10] sm:$0x1] %v466
      %v468 = vld [vmem:[#allocation2 + $0x18] sm:$0x1]
      %v469 = vsel %vm458, 0, %v468
      %470 = vst [vmem:[#allocation2 + $0x18] sm:$0x1] %v469
      %v471 = vld [vmem:[#allocation2 + $0x20] sm:$0x1]
      %v472 = vsel %vm458, 0, %v471
      %473 = vst [vmem:[#allocation2 + $0x20] sm:$0x1] %v472
      %v474 = vld [vmem:[#allocation2 + $0x28] sm:$0x1]
      %v475 = vsel %vm458, 0, %v474
      %476 = vst [vmem:[#allocation2 + $0x28] sm:$0x1] %v475
      %v477 = vld [vmem:[#allocation2 + $0x30] sm:$0x1]
      %v478 = vsel %vm458, 0, %v477
      %479 = vst [vmem:[#allocation2 + $0x30] sm:$0x1] %v478
      %v480 = vld [vmem:[#allocation2 + $0x38] sm:$0x1]
      %v481 = vsel %vm458, 0, %v480
      %482 = vst [vmem:[#allocation2 + $0x38] sm:$0x1] %v481
      %v483 = vld [vmem:[#allocation2 + $0x40] sm:$0x1]
      %v484 = vsel %vm458, 0, %v483
      %485 = vst [vmem:[#allocation2 + $0x40] sm:$0x1] %v484
      %v486 = vld [vmem:[#allocation2 + $0x48] sm:$0x1]
      %v487 = vsel %vm458, 0, %v486
      %488 = vst [vmem:[#allocation2 + $0x48] sm:$0x1] %v487
      %vm489 = vsmask.f32 7938
      %vm490 = vmand %vm456, %vm489
      %v491 = vld [vmem:[#allocation2 + $0x4] sm:$0x1]
      %v492 = vsel %vm490, 0, %v491
      %493 = vst [vmem:[#allocation2 + $0x4] sm:$0x1] %v492
      %v494 = vld [vmem:[#allocation2 + $0xc] sm:$0x1]
      %v495 = vsel %vm490, 0, %v494
      %496 = vst [vmem:[#allocation2 + $0xc] sm:$0x1] %v495
      %v497 = vld [vmem:[#allocation2 + $0x14] sm:$0x1]
      %v498 = vsel %vm490, 0, %v497
      %499 = vst [vmem:[#allocation2 + $0x14] sm:$0x1] %v498
      %v500 = vld [vmem:[#allocation2 + $0x1c] sm:$0x1]
      %v501 = vsel %vm490, 0, %v500
      %502 = vst [vmem:[#allocation2 + $0x1c] sm:$0x1] %v501
      %v503 = vld [vmem:[#allocation2 + $0x24] sm:$0x1]
      %v504 = vsel %vm490, 0, %v503
      %505 = vst [vmem:[#allocation2 + $0x24] sm:$0x1] %v504
      %v506 = vld [vmem:[#allocation2 + $0x2c] sm:$0x1]
      %v507 = vsel %vm490, 0, %v506
      %508 = vst [vmem:[#allocation2 + $0x2c] sm:$0x1] %v507
      %v509 = vld [vmem:[#allocation2 + $0x34] sm:$0x1]
      %v510 = vsel %vm490, 0, %v509
      %511 = vst [vmem:[#allocation2 + $0x34] sm:$0x1] %v510
      %v512 = vld [vmem:[#allocation2 + $0x3c] sm:$0x1]
      %v513 = vsel %vm490, 0, %v512
      %514 = vst [vmem:[#allocation2 + $0x3c] sm:$0x1] %v513
      %v515 = vld [vmem:[#allocation2 + $0x44] sm:$0x1]
      %v516 = vsel %vm490, 0, %v515
      %517 = vst [vmem:[#allocation2 + $0x44] sm:$0x1] %v516
      %v518 = vld [vmem:[#allocation2 + $0x4c] sm:$0x1]
      %v519 = vsel %vm490, 0, %v518
      %520 = vst [vmem:[#allocation2 + $0x4c] sm:$0x1] %v519
      %v521 = vld [vmem:[%s404] sm:$0xf]
      %v522 = vld [vmem:[%s404 + $0x4] sm:$0xf]
      %v523 = vld [vmem:[%s404 + $0x8] sm:$0xf]
      %v524 = vld [vmem:[%s404 + $0xc] sm:$0xf]
      %v525 = vld [vmem:[%s404 + $0x10] sm:$0xf]
      %v526 = vld [vmem:[%s404 + $0x14] sm:$0xf]
      %v527 = vld [vmem:[%s404 + $0x18] sm:$0xf]
      %v528 = vld [vmem:[%s404 + $0x1c] sm:$0xf]
      %v530 = vshrl.u32 %v521, 16
      %v532 = vrot.slane %v530, 7
      %v533 = vshll.u32 %v521, 16
      %v535 = vor.u32 %v532, %v533
      %v536 = vrot.slane %v532, 4
      %v538 = vshrl.u32 %v522, 16
      %v540 = vrot.slane %v538, 7
      %v541 = vshll.u32 %v522, 16
      %v543 = vor.u32 %v540, %v541
      %v544 = vrot.slane %v540, 4
      %v546 = vshrl.u32 %v523, 16
      %v548 = vrot.slane %v546, 7
      %v549 = vshll.u32 %v523, 16
      %v551 = vor.u32 %v548, %v549
      %v552 = vrot.slane %v548, 4
      %v554 = vshrl.u32 %v524, 16
      %v556 = vrot.slane %v554, 7
      %v557 = vshll.u32 %v524, 16
      %v559 = vor.u32 %v556, %v557
      %v560 = vrot.slane %v556, 4
      %v562 = vshrl.u32 %v525, 16
      %v564 = vrot.slane %v562, 7
      %v565 = vshll.u32 %v525, 16
      %v567 = vor.u32 %v564, %v565
      %v568 = vrot.slane %v564, 4
      %v570 = vshrl.u32 %v526, 16
      %v572 = vrot.slane %v570, 7
      %v573 = vshll.u32 %v526, 16
      %v575 = vor.u32 %v572, %v573
      %v576 = vrot.slane %v572, 4
      %v578 = vshrl.u32 %v527, 16
      %v580 = vrot.slane %v578, 7
      %v581 = vshll.u32 %v527, 16
      %v583 = vor.u32 %v580, %v581
      %v584 = vrot.slane %v580, 4
      %v586 = vshrl.u32 %v528, 16
      %v588 = vrot.slane %v586, 7
      %v589 = vshll.u32 %v528, 16
      %v591 = vor.u32 %v588, %v589
      %v592 = vrot.slane %v588, 4
      %s609 = scalar_lea.vmem [#allocation2], 8
      %vm610 = vcmask 1043456
      %vm611 = vmand %vm610, %vm489
      %v612 = vld [vmem:[%s609] sm:$0xf]
      %v613 = vsel %vm611, %v535, %v612
      %614 = vst [vmem:[%s609] sm:$0xf] %v613
      %v615 = vld [vmem:[%s609 + $0x4] sm:$0x1]
      %v616 = vsel %vm458, %v536, %v615
      %617 = vst [vmem:[%s609 + $0x4] sm:$0x1] %v616
      %v618 = vld [vmem:[%s609 + $0x8] sm:$0xf]
      %v619 = vsel %vm611, %v543, %v618
      %620 = vst [vmem:[%s609 + $0x8] sm:$0xf] %v619
      %v621 = vld [vmem:[%s609 + $0xc] sm:$0x1]
      %v622 = vsel %vm458, %v544, %v621
      %623 = vst [vmem:[%s609 + $0xc] sm:$0x1] %v622
      %v624 = vld [vmem:[%s609 + $0x10] sm:$0xf]
      %v625 = vsel %vm611, %v551, %v624
      %626 = vst [vmem:[%s609 + $0x10] sm:$0xf] %v625
      %v627 = vld [vmem:[%s609 + $0x14] sm:$0x1]
      %v628 = vsel %vm458, %v552, %v627
      %629 = vst [vmem:[%s609 + $0x14] sm:$0x1] %v628
      %v630 = vld [vmem:[%s609 + $0x18] sm:$0xf]
      %v631 = vsel %vm611, %v559, %v630
      %632 = vst [vmem:[%s609 + $0x18] sm:$0xf] %v631
      %v633 = vld [vmem:[%s609 + $0x1c] sm:$0x1]
      %v634 = vsel %vm458, %v560, %v633
      %635 = vst [vmem:[%s609 + $0x1c] sm:$0x1] %v634
      %v636 = vld [vmem:[%s609 + $0x20] sm:$0xf]
      %v637 = vsel %vm611, %v567, %v636
      %638 = vst [vmem:[%s609 + $0x20] sm:$0xf] %v637
      %v639 = vld [vmem:[%s609 + $0x24] sm:$0x1]
      %v640 = vsel %vm458, %v568, %v639
      %641 = vst [vmem:[%s609 + $0x24] sm:$0x1] %v640
      %v642 = vld [vmem:[%s609 + $0x28] sm:$0xf]
      %v643 = vsel %vm611, %v575, %v642
      %644 = vst [vmem:[%s609 + $0x28] sm:$0xf] %v643
      %v645 = vld [vmem:[%s609 + $0x2c] sm:$0x1]
      %v646 = vsel %vm458, %v576, %v645
      %647 = vst [vmem:[%s609 + $0x2c] sm:$0x1] %v646
      %v648 = vld [vmem:[%s609 + $0x30] sm:$0xf]
      %v649 = vsel %vm611, %v583, %v648
      %650 = vst [vmem:[%s609 + $0x30] sm:$0xf] %v649
      %v651 = vld [vmem:[%s609 + $0x34] sm:$0x1]
      %v652 = vsel %vm458, %v584, %v651
      %653 = vst [vmem:[%s609 + $0x34] sm:$0x1] %v652
      %v654 = vld [vmem:[%s609 + $0x38] sm:$0xf]
      %v655 = vsel %vm611, %v591, %v654
      %656 = vst [vmem:[%s609 + $0x38] sm:$0xf] %v655
      %v657 = vld [vmem:[%s609 + $0x3c] sm:$0x1]
      %v658 = vsel %vm458, %v592, %v657
      %659 = vst [vmem:[%s609 + $0x3c] sm:$0x1] %v658
      %p660 = scmp.gt.s32.totalorder %s24, 0
      // Predicated region
      $region45: #{down_forward.3} parent=43 // pred_check
        %p661 = pneg %p660
      $region46: #{down_forward.3} parent=43 // pred_check_branch
        %663 = sbr.rel (%p661) target = $region48
      $region47: #{down_forward.3} parent=43 // pred_region
        %v664 = vld [vmem:[%s417] sm:$0xf]
        %v666 = vshrl.u32 %v664, 16
        %v668 = vrot.slane %v666, 7
        %v669 = vshll.u32 %v664, 16
        %v671 = vor.u32 %v668, %v669
        %v672 = vrot.slane %v668, 4
        %v675 = vld [vmem:[#allocation2] sm:$0xf]
        %v676 = vsel %vm611, %v671, %v675
        %677 = vst [vmem:[#allocation2] sm:$0xf] %v676
        %v678 = vld [vmem:[#allocation2 + $0x4] sm:$0x1]
        %v679 = vsel %vm458, %v672, %v678
        %680 = vst [vmem:[#allocation2 + $0x4] sm:$0x1] %v679
      $region48: #{down_forward.3} parent=43 // pred_fallthru
        _
      %p681 = scmp.eq.s32.totalorder %s24, 0
      // Predicated region
      $region49: #{down_forward.3} parent=43 // pred_check
        %p682 = pneg %p681
      $region50: #{down_forward.3} parent=43 // pred_check_branch
        %684 = sbr.rel (%p682) target = $region52
      $region51: #{down_forward.3} parent=43 // pred_region
        %v685 = vld [vmem:[#allocation2] sm:$0xf]
        %v686 = vsel %vm611, 0, %v685
        %687 = vst [vmem:[#allocation2] sm:$0xf] %v686
        %v688 = vld [vmem:[#allocation2 + $0x4] sm:$0x1]
        %v689 = vsel %vm458, 0, %v688
        %690 = vst [vmem:[#allocation2 + $0x4] sm:$0x1] %v689
      $region52: #{down_forward.3} parent=43 // pred_fallthru
        _
      %p691 = scmp.lt.s32.totalorder %s24, 0
      // Predicated region
      $region53: #{down_forward.3} parent=43 // pred_check
        %p692 = pneg %p691
      $region54: #{down_forward.3} parent=43 // pred_check_branch
        %694 = sbr.rel (%p692) target = $region56
      $region55: #{down_forward.3} parent=43 // pred_region
        %v695 = vld [vmem:[%s433] sm:$0xf]
        %v697 = vshrl.u32 %v695, 16
        %v699 = vrot.slane %v697, 7
        %v700 = vshll.u32 %v695, 16
        %v702 = vor.u32 %v699, %v700
        %v703 = vrot.slane %v699, 4
        %s706 = scalar_lea.vmem [#allocation2], 72
        %v707 = vld [vmem:[%s706] sm:$0xf]
        %v708 = vsel %vm611, %v702, %v707
        %709 = vst [vmem:[%s706] sm:$0xf] %v708
        %v710 = vld [vmem:[%s706 + $0x4] sm:$0x1]
        %v711 = vsel %vm458, %v703, %v710
        %712 = vst [vmem:[%s706 + $0x4] sm:$0x1] %v711
      $region56: #{down_forward.3} parent=43 // pred_fallthru
        _
      // Predicated region
      $region57: #{down_forward.3} parent=43 // pred_check
        %p713 = pneg %p681
      $region58: #{down_forward.3} parent=43 // pred_check_branch
        %715 = sbr.rel (%p713) target = $region60
      $region59: #{down_forward.3} parent=43 // pred_region
        %s716 = scalar_lea.vmem [#allocation2], 72
        %v717 = vld [vmem:[%s716] sm:$0xf]
        %v718 = vsel %vm611, 0, %v717
        %719 = vst [vmem:[%s716] sm:$0xf] %v718
        %v720 = vld [vmem:[%s716 + $0x4] sm:$0x1]
        %v721 = vsel %vm458, 0, %v720
        %722 = vst [vmem:[%s716 + $0x4] sm:$0x1] %v721
      $region60: #{down_forward.3} parent=43 // pred_fallthru
        _
      %v723 = vld [vmem:[#allocation2] sm:$0xf]
      %v724 = vld [vmem:[#allocation2 + $0x8] sm:$0xf]
      %v725 = vld [vmem:[#allocation2 + $0x10] sm:$0xf]
      %v726 = vld [vmem:[#allocation2 + $0x18] sm:$0xf]
      %v727 = vld [vmem:[#allocation2 + $0x20] sm:$0xf]
      %v728 = vld [vmem:[#allocation2 + $0x28] sm:$0xf]
      %v729 = vld [vmem:[#allocation2 + $0x30] sm:$0xf]
      %v730 = vld [vmem:[#allocation2 + $0x38] sm:$0xf]
      %v731 = vld [vmem:[%s3] sm:$0xf]
      %v732 = vld [vmem:[%s3 + $0x4] sm:$0xf]
      %v733 = vld [vmem:[%s3 + $0x8] sm:$0xf]
      %v734 = vld [vmem:[%s3 + $0xc] sm:$0xf]
      %v735 = vld [vmem:[%s3 + $0x10] sm:$0xf]
      %v736 = vld [vmem:[%s3 + $0x14] sm:$0xf]
      %v737 = vld [vmem:[%s3 + $0x18] sm:$0xf]
      %v738 = vld [vmem:[%s3 + $0x1c] sm:$0xf]
      %v739 = vld [vmem:[%s3 + $0x20] sm:$0xf]
      %v740 = vld [vmem:[%s3 + $0x24] sm:$0xf]
      %v741 = vld [vmem:[%s3 + $0x28] sm:$0xf]
      %v742 = vld [vmem:[%s3 + $0x2c] sm:$0xf]
      %v743 = vld [vmem:[%s3 + $0x30] sm:$0xf]
      %v744 = vld [vmem:[%s3 + $0x34] sm:$0xf]
      %v745 = vld [vmem:[%s3 + $0x38] sm:$0xf]
      %v746 = vld [vmem:[%s3 + $0x3c] sm:$0xf]
      %v747 = vld [vmem:[#allocation2 + $0x4] sm:$0x1]
      %v748 = vld [vmem:[#allocation2 + $0xc] sm:$0x1]
      %v749 = vld [vmem:[#allocation2 + $0x14] sm:$0x1]
      %v750 = vld [vmem:[#allocation2 + $0x1c] sm:$0x1]
      %v751 = vld [vmem:[#allocation2 + $0x24] sm:$0x1]
      %v752 = vld [vmem:[#allocation2 + $0x2c] sm:$0x1]
      %v753 = vld [vmem:[#allocation2 + $0x34] sm:$0x1]
      %v754 = vld [vmem:[#allocation2 + $0x3c] sm:$0x1]
      %vm755 = vsmask.f32 3328
      %vm756 = vsmask.f32 7440
      %vm757 = vmor %vm755, %vm756
      %v759 = vshrl.u32 %v723, 16
      %v761 = vrot.slane %v759, 4
      %v762 = vshll.u32 %v723, 16
      %v764 = vrot.slane %v762, 5
      %v765 = vor.u32 %v761, %v764
      %v766 = vrot.slane %v765, 4
      %v768 = vshll.u32 %v747, 16
      %v770 = vrot.slane %v768, 5
      %v771 = vsel %vm757, %v766, %v770
      %v773 = vshrl.u32 %v724, 16
      %v775 = vrot.slane %v773, 4
      %v776 = vshll.u32 %v724, 16
      %v778 = vrot.slane %v776, 5
      %v779 = vor.u32 %v775, %v778
      %v780 = vrot.slane %v779, 4
      %v782 = vshll.u32 %v748, 16
      %v784 = vrot.slane %v782, 5
      %v785 = vsel %vm757, %v780, %v784
      %v787 = vshrl.u32 %v725, 16
      %v789 = vrot.slane %v787, 4
      %v790 = vshll.u32 %v725, 16
      %v792 = vrot.slane %v790, 5
      %v793 = vor.u32 %v789, %v792
      %v794 = vrot.slane %v793, 4
      %v796 = vshll.u32 %v749, 16
      %v798 = vrot.slane %v796, 5
      %v799 = vsel %vm757, %v794, %v798
      %v801 = vshrl.u32 %v726, 16
      %v803 = vrot.slane %v801, 4
      %v804 = vshll.u32 %v726, 16
      %v806 = vrot.slane %v804, 5
      %v807 = vor.u32 %v803, %v806
      %v808 = vrot.slane %v807, 4
      %v810 = vshll.u32 %v750, 16
      %v812 = vrot.slane %v810, 5
      %v813 = vsel %vm757, %v808, %v812
      %v815 = vshrl.u32 %v727, 16
      %v817 = vrot.slane %v815, 4
      %v818 = vshll.u32 %v727, 16
      %v820 = vrot.slane %v818, 5
      %v821 = vor.u32 %v817, %v820
      %v822 = vrot.slane %v821, 4
      %v824 = vshll.u32 %v751, 16
      %v826 = vrot.slane %v824, 5
      %v827 = vsel %vm757, %v822, %v826
      %v829 = vshrl.u32 %v728, 16
      %v831 = vrot.slane %v829, 4
      %v832 = vshll.u32 %v728, 16
      %v834 = vrot.slane %v832, 5
      %v835 = vor.u32 %v831, %v834
      %v836 = vrot.slane %v835, 4
      %v838 = vshll.u32 %v752, 16
      %v840 = vrot.slane %v838, 5
      %v841 = vsel %vm757, %v836, %v840
      %v843 = vshrl.u32 %v729, 16
      %v845 = vrot.slane %v843, 4
      %v846 = vshll.u32 %v729, 16
      %v848 = vrot.slane %v846, 5
      %v849 = vor.u32 %v845, %v848
      %v850 = vrot.slane %v849, 4
      %v852 = vshll.u32 %v753, 16
      %v854 = vrot.slane %v852, 5
      %v855 = vsel %vm757, %v850, %v854
      %v857 = vshrl.u32 %v730, 16
      %v859 = vrot.slane %v857, 4
      %v860 = vshll.u32 %v730, 16
      %v862 = vrot.slane %v860, 5
      %v863 = vor.u32 %v859, %v862
      %v864 = vrot.slane %v863, 4
      %v866 = vshll.u32 %v754, 16
      %v868 = vrot.slane %v866, 5
      %v869 = vsel %vm757, %v864, %v868
      %s870 = scalar_lea.vmem %s3, 64
      %v871 = vld [vmem:[%s870] sm:$0xf]
      %v872 = vld [vmem:[%s870 + $0x4] sm:$0xf]
      %v873 = vld [vmem:[%s870 + $0x8] sm:$0xf]
      %v874 = vld [vmem:[%s870 + $0xc] sm:$0xf]
      %v875 = vld [vmem:[%s870 + $0x10] sm:$0xf]
      %v876 = vld [vmem:[%s870 + $0x14] sm:$0xf]
      %v877 = vld [vmem:[%s870 + $0x18] sm:$0xf]
      %v878 = vld [vmem:[%s870 + $0x1c] sm:$0xf]
      %v879 = vld [vmem:[%s870 + $0x20] sm:$0xf]
      %v880 = vld [vmem:[%s870 + $0x24] sm:$0xf]
      %v881 = vld [vmem:[%s870 + $0x28] sm:$0xf]
      %v882 = vld [vmem:[%s870 + $0x2c] sm:$0xf]
      %v883 = vld [vmem:[%s870 + $0x30] sm:$0xf]
      %v884 = vld [vmem:[%s870 + $0x34] sm:$0xf]
      %v885 = vld [vmem:[%s870 + $0x38] sm:$0xf]
      %v886 = vld [vmem:[%s870 + $0x3c] sm:$0xf]
      %v887 = vunpack.c.l.b16 %v771
      %v888 = vunpack.c.l.b16 %v785
      %v889 = vunpack.c.l.b16 %v799
      %v890 = vunpack.c.l.b16 %v813
      %v891 = vunpack.c.l.b16 %v827
      %v892 = vunpack.c.l.b16 %v841
      %v893 = vunpack.c.l.b16 %v855
      %v894 = vunpack.c.l.b16 %v869
      %v895 = vpack.c.b16 %v888, %v887
      %v896 = vpack.c.b16 %v890, %v889
      %v897 = vpack.c.b16 %v892, %v891
      %v898 = vpack.c.b16 %v894, %v893
      %v919 = vunpack.c.l.b16 %v871
      %v920 = vunpack.c.l.b16 %v872
      %v921 = vunpack.c.l.b16 %v873
      %v922 = vunpack.c.l.b16 %v874
      %v923 = vunpack.c.l.b16 %v875
      %v924 = vunpack.c.l.b16 %v876
      %v925 = vunpack.c.l.b16 %v877
      %v926 = vunpack.c.l.b16 %v878
      %v927 = vunpack.c.l.b16 %v879
      %v928 = vunpack.c.l.b16 %v880
      %v929 = vunpack.c.l.b16 %v881
      %v930 = vunpack.c.l.b16 %v882
      %v931 = vunpack.c.l.b16 %v883
      %v932 = vunpack.c.l.b16 %v884
      %v933 = vunpack.c.l.b16 %v885
      %v934 = vunpack.c.l.b16 %v886
      %v935 = vpack.c.b16 %v920, %v919
      %v936 = vpack.c.b16 %v922, %v921
      %v937 = vpack.c.b16 %v924, %v923
      %v938 = vpack.c.b16 %v926, %v925
      %v939 = vpack.c.b16 %v928, %v927
      %v940 = vpack.c.b16 %v930, %v929
      %v941 = vpack.c.b16 %v932, %v931
      %v942 = vpack.c.b16 %v934, %v933
      %951 = vmatpush.bf16.msra.mxu0 %v942
      %952 = vmatpush.bf16.msra.mxu0 %v941
      %953 = vmatpush.bf16.msra.mxu0 %v940
      %954 = vmatpush.bf16.msra.mxu0 %v939
      %955 = vmatpush.bf16.msra.mxu0 %v938
      %956 = vmatpush.bf16.msra.mxu0 %v937
      %957 = vmatpush.bf16.msra.mxu0 %v936
      %958 = vmatpush.bf16.msra.mxu0 %v935
      %959 = vmatmul.bf16.gmra.mxu0 %v895
      %v960 = vpop.f32.mrf.mxu0
      %v961 = vadd.f32 0.0, %v960
      %v962 = vpop.f32.mrf.mxu0
      %v963 = vadd.f32 0.0, %v962
      %964 = vmatmul.bf16.gmra.mxu0 %v896
      %v965 = vpop.f32.mrf.mxu0
      %v966 = vadd.f32 0.0, %v965
      %v967 = vpop.f32.mrf.mxu0
      %v968 = vadd.f32 0.0, %v967
      %969 = vmatmul.bf16.gmra.mxu0 %v897
      %v970 = vpop.f32.mrf.mxu0
      %v971 = vadd.f32 0.0, %v970
      %v972 = vpop.f32.mrf.mxu0
      %v973 = vadd.f32 0.0, %v972
      %974 = vmatmul.bf16.gmra.mxu0 %v898
      %v975 = vpop.f32.mrf.mxu0
      %v976 = vadd.f32 0.0, %v975
      %v977 = vpop.f32.mrf.mxu0
      %v978 = vadd.f32 0.0, %v977
      %979 = vdwg.mxu0
      %v988 = vunpack.c.l.b16 %v723
      %v989 = vunpack.c.l.b16 %v724
      %v990 = vunpack.c.l.b16 %v725
      %v991 = vunpack.c.l.b16 %v726
      %v992 = vunpack.c.l.b16 %v727
      %v993 = vunpack.c.l.b16 %v728
      %v994 = vunpack.c.l.b16 %v729
      %v995 = vunpack.c.l.b16 %v730
      %v996 = vpack.c.b16 %v989, %v988
      %v997 = vpack.c.b16 %v991, %v990
      %v998 = vpack.c.b16 %v993, %v992
      %v999 = vpack.c.b16 %v995, %v994
      %v1020 = vunpack.c.l.b16 %v731
      %v1021 = vunpack.c.l.b16 %v732
      %v1022 = vunpack.c.l.b16 %v733
      %v1023 = vunpack.c.l.b16 %v734
      %v1024 = vunpack.c.l.b16 %v735
      %v1025 = vunpack.c.l.b16 %v736
      %v1026 = vunpack.c.l.b16 %v737
      %v1027 = vunpack.c.l.b16 %v738
      %v1028 = vunpack.c.l.b16 %v739
      %v1029 = vunpack.c.l.b16 %v740
      %v1030 = vunpack.c.l.b16 %v741
      %v1031 = vunpack.c.l.b16 %v742
      %v1032 = vunpack.c.l.b16 %v743
      %v1033 = vunpack.c.l.b16 %v744
      %v1034 = vunpack.c.l.b16 %v745
      %v1035 = vunpack.c.l.b16 %v746
      %v1036 = vpack.c.b16 %v1021, %v1020
      %v1037 = vpack.c.b16 %v1023, %v1022
      %v1038 = vpack.c.b16 %v1025, %v1024
      %v1039 = vpack.c.b16 %v1027, %v1026
      %v1040 = vpack.c.b16 %v1029, %v1028
      %v1041 = vpack.c.b16 %v1031, %v1030
      %v1042 = vpack.c.b16 %v1033, %v1032
      %v1043 = vpack.c.b16 %v1035, %v1034
      %1052 = vmatpush.bf16.msra.mxu0 %v1043
      %1053 = vmatpush.bf16.msra.mxu0 %v1042
      %1054 = vmatpush.bf16.msra.mxu0 %v1041
      %1055 = vmatpush.bf16.msra.mxu0 %v1040
      %1056 = vmatpush.bf16.msra.mxu0 %v1039
      %1057 = vmatpush.bf16.msra.mxu0 %v1038
      %1058 = vmatpush.bf16.msra.mxu0 %v1037
      %1059 = vmatpush.bf16.msra.mxu0 %v1036
      %1060 = vmatmul.bf16.gmra.mxu0 %v996
      %v1061 = vpop.f32.mrf.mxu0
      %v1062 = vadd.f32 %v961, %v1061
      %v1063 = vpop.f32.mrf.mxu0
      %v1064 = vadd.f32 %v963, %v1063
      %1065 = vmatmul.bf16.gmra.mxu0 %v997
      %v1066 = vpop.f32.mrf.mxu0
      %v1067 = vadd.f32 %v966, %v1066
      %v1068 = vpop.f32.mrf.mxu0
      %v1069 = vadd.f32 %v968, %v1068
      %1070 = vmatmul.bf16.gmra.mxu0 %v998
      %v1071 = vpop.f32.mrf.mxu0
      %v1072 = vadd.f32 %v971, %v1071
      %v1073 = vpop.f32.mrf.mxu0
      %v1074 = vadd.f32 %v973, %v1073
      %1075 = vmatmul.bf16.gmra.mxu0 %v999
      %v1076 = vpop.f32.mrf.mxu0
      %v1077 = vadd.f32 %v976, %v1076
      %v1078 = vpop.f32.mrf.mxu0
      %v1079 = vadd.f32 %v978, %v1078
      %1080 = vdwg.mxu0
      %v1081 = vld [vmem:[#allocation2] sm:$0xe]
      %v1082 = vld [vmem:[#allocation2 + $0x8] sm:$0xe]
      %v1083 = vld [vmem:[#allocation2 + $0x10] sm:$0xe]
      %v1084 = vld [vmem:[#allocation2 + $0x18] sm:$0xe]
      %v1085 = vld [vmem:[#allocation2 + $0x20] sm:$0xe]
      %v1086 = vld [vmem:[#allocation2 + $0x28] sm:$0xe]
      %v1087 = vld [vmem:[#allocation2 + $0x30] sm:$0xe]
      %v1088 = vld [vmem:[#allocation2 + $0x38] sm:$0xe]
      %vm1105 = vcmask 1042432
      %vm1106 = vcmask 1046532
      %vm1107 = vmor %vm1105, %vm1106
      %v1108 = vrot.slane %v1081, 5
      %v1109 = vrot.slane %v1108, 4
      %v1110 = vrot.slane %v747, 5
      %v1111 = vsel %vm1107, %v1109, %v1110
      %v1112 = vrot.slane %v1082, 5
      %v1113 = vrot.slane %v1112, 4
      %v1114 = vrot.slane %v748, 5
      %v1115 = vsel %vm1107, %v1113, %v1114
      %v1116 = vrot.slane %v1083, 5
      %v1117 = vrot.slane %v1116, 4
      %v1118 = vrot.slane %v749, 5
      %v1119 = vsel %vm1107, %v1117, %v1118
      %v1120 = vrot.slane %v1084, 5
      %v1121 = vrot.slane %v1120, 4
      %v1122 = vrot.slane %v750, 5
      %v1123 = vsel %vm1107, %v1121, %v1122
      %v1124 = vrot.slane %v1085, 5
      %v1125 = vrot.slane %v1124, 4
      %v1126 = vrot.slane %v751, 5
      %v1127 = vsel %vm1107, %v1125, %v1126
      %v1128 = vrot.slane %v1086, 5
      %v1129 = vrot.slane %v1128, 4
      %v1130 = vrot.slane %v752, 5
      %v1131 = vsel %vm1107, %v1129, %v1130
      %v1132 = vrot.slane %v1087, 5
      %v1133 = vrot.slane %v1132, 4
      %v1134 = vrot.slane %v753, 5
      %v1135 = vsel %vm1107, %v1133, %v1134
      %v1136 = vrot.slane %v1088, 5
      %v1137 = vrot.slane %v1136, 4
      %v1138 = vrot.slane %v754, 5
      %v1139 = vsel %vm1107, %v1137, %v1138
      %s1140 = scalar_lea.vmem %s3, 128
      %v1141 = vld [vmem:[%s1140] sm:$0xf]
      %v1142 = vld [vmem:[%s1140 + $0x4] sm:$0xf]
      %v1143 = vld [vmem:[%s1140 + $0x8] sm:$0xf]
      %v1144 = vld [vmem:[%s1140 + $0xc] sm:$0xf]
      %v1145 = vld [vmem:[%s1140 + $0x10] sm:$0xf]
      %v1146 = vld [vmem:[%s1140 + $0x14] sm:$0xf]
      %v1147 = vld [vmem:[%s1140 + $0x18] sm:$0xf]
      %v1148 = vld [vmem:[%s1140 + $0x1c] sm:$0xf]
      %v1149 = vld [vmem:[%s1140 + $0x20] sm:$0xf]
      %v1150 = vld [vmem:[%s1140 + $0x24] sm:$0xf]
      %v1151 = vld [vmem:[%s1140 + $0x28] sm:$0xf]
      %v1152 = vld [vmem:[%s1140 + $0x2c] sm:$0xf]
      %v1153 = vld [vmem:[%s1140 + $0x30] sm:$0xf]
      %v1154 = vld [vmem:[%s1140 + $0x34] sm:$0xf]
      %v1155 = vld [vmem:[%s1140 + $0x38] sm:$0xf]
      %v1156 = vld [vmem:[%s1140 + $0x3c] sm:$0xf]
      %v1157 = vunpack.c.l.b16 %v1111
      %v1158 = vunpack.c.l.b16 %v1115
      %v1159 = vunpack.c.l.b16 %v1119
      %v1160 = vunpack.c.l.b16 %v1123
      %v1161 = vunpack.c.l.b16 %v1127
      %v1162 = vunpack.c.l.b16 %v1131
      %v1163 = vunpack.c.l.b16 %v1135
      %v1164 = vunpack.c.l.b16 %v1139
      %v1165 = vpack.c.b16 %v1158, %v1157
      %v1166 = vpack.c.b16 %v1160, %v1159
      %v1167 = vpack.c.b16 %v1162, %v1161
      %v1168 = vpack.c.b16 %v1164, %v1163
      %v1189 = vunpack.c.l.b16 %v1141
      %v1190 = vunpack.c.l.b16 %v1142
      %v1191 = vunpack.c.l.b16 %v1143
      %v1192 = vunpack.c.l.b16 %v1144
      %v1193 = vunpack.c.l.b16 %v1145
      %v1194 = vunpack.c.l.b16 %v1146
      %v1195 = vunpack.c.l.b16 %v1147
      %v1196 = vunpack.c.l.b16 %v1148
      %v1197 = vunpack.c.l.b16 %v1149
      %v1198 = vunpack.c.l.b16 %v1150
      %v1199 = vunpack.c.l.b16 %v1151
      %v1200 = vunpack.c.l.b16 %v1152
      %v1201 = vunpack.c.l.b16 %v1153
      %v1202 = vunpack.c.l.b16 %v1154
      %v1203 = vunpack.c.l.b16 %v1155
      %v1204 = vunpack.c.l.b16 %v1156
      %v1205 = vpack.c.b16 %v1190, %v1189
      %v1206 = vpack.c.b16 %v1192, %v1191
      %v1207 = vpack.c.b16 %v1194, %v1193
      %v1208 = vpack.c.b16 %v1196, %v1195
      %v1209 = vpack.c.b16 %v1198, %v1197
      %v1210 = vpack.c.b16 %v1200, %v1199
      %v1211 = vpack.c.b16 %v1202, %v1201
      %v1212 = vpack.c.b16 %v1204, %v1203
      %1221 = vmatpush.bf16.msra.mxu0 %v1212
      %1222 = vmatpush.bf16.msra.mxu0 %v1211
      %1223 = vmatpush.bf16.msra.mxu0 %v1210
      %1224 = vmatpush.bf16.msra.mxu0 %v1209
      %1225 = vmatpush.bf16.msra.mxu0 %v1208
      %1226 = vmatpush.bf16.msra.mxu0 %v1207
      %1227 = vmatpush.bf16.msra.mxu0 %v1206
      %1228 = vmatpush.bf16.msra.mxu0 %v1205
      %1229 = vmatmul.bf16.gmra.mxu0 %v1165
      %v1230 = vpop.f32.mrf.mxu0
      %v1231 = vadd.f32 0.0, %v1230
      %v1232 = vpop.f32.mrf.mxu0
      %v1233 = vadd.f32 0.0, %v1232
      %1234 = vmatmul.bf16.gmra.mxu0 %v1166
      %v1235 = vpop.f32.mrf.mxu0
      %v1236 = vadd.f32 0.0, %v1235
      %v1237 = vpop.f32.mrf.mxu0
      %v1238 = vadd.f32 0.0, %v1237
      %1239 = vmatmul.bf16.gmra.mxu0 %v1167
      %v1240 = vpop.f32.mrf.mxu0
      %v1241 = vadd.f32 0.0, %v1240
      %v1242 = vpop.f32.mrf.mxu0
      %v1243 = vadd.f32 0.0, %v1242
      %1244 = vmatmul.bf16.gmra.mxu0 %v1168
      %v1245 = vpop.f32.mrf.mxu0
      %v1246 = vadd.f32 0.0, %v1245
      %v1247 = vpop.f32.mrf.mxu0
      %v1248 = vadd.f32 0.0, %v1247
      %1249 = vdwg.mxu0
      %v1250 = vadd.f32 %v1062, %v1231
      %v1251 = vadd.f32 %v1064, %v1233
      %v1252 = vadd.f32 %v1067, %v1236
      %v1253 = vadd.f32 %v1069, %v1238
      %v1254 = vadd.f32 %v1072, %v1241
      %v1255 = vadd.f32 %v1074, %v1243
      %v1256 = vadd.f32 %v1077, %v1246
      %v1257 = vadd.f32 %v1079, %v1248
      %v1258 = vld [vmem:[%s609] sm:$0xf]
      %v1259 = vld [vmem:[%s609 + $0x8] sm:$0xf]
      %v1260 = vld [vmem:[%s609 + $0x10] sm:$0xf]
      %v1261 = vld [vmem:[%s609 + $0x18] sm:$0xf]
      %v1262 = vld [vmem:[%s609 + $0x20] sm:$0xf]
      %v1263 = vld [vmem:[%s609 + $0x28] sm:$0xf]
      %v1264 = vld [vmem:[%s609 + $0x30] sm:$0xf]
      %v1265 = vld [vmem:[%s609 + $0x38] sm:$0xf]
      %s1266 = scalar_lea.vmem %s3, 192
      %v1267 = vld [vmem:[%s1266] sm:$0xf]
      %v1268 = vld [vmem:[%s1266 + $0x4] sm:$0xf]
      %v1269 = vld [vmem:[%s1266 + $0x8] sm:$0xf]
      %v1270 = vld [vmem:[%s1266 + $0xc] sm:$0xf]
      %v1271 = vld [vmem:[%s1266 + $0x10] sm:$0xf]
      %v1272 = vld [vmem:[%s1266 + $0x14] sm:$0xf]
      %v1273 = vld [vmem:[%s1266 + $0x18] sm:$0xf]
      %v1274 = vld [vmem:[%s1266 + $0x1c] sm:$0xf]
      %v1275 = vld [vmem:[%s1266 + $0x20] sm:$0xf]
      %v1276 = vld [vmem:[%s1266 + $0x24] sm:$0xf]
      %v1277 = vld [vmem:[%s1266 + $0x28] sm:$0xf]
      %v1278 = vld [vmem:[%s1266 + $0x2c] sm:$0xf]
      %v1279 = vld [vmem:[%s1266 + $0x30] sm:$0xf]
      %v1280 = vld [vmem:[%s1266 + $0x34] sm:$0xf]
      %v1281 = vld [vmem:[%s1266 + $0x38] sm:$0xf]
      %v1282 = vld [vmem:[%s1266 + $0x3c] sm:$0xf]
      %v1291 = vunpack.c.l.b16 %v1258
      %v1292 = vunpack.c.l.b16 %v1259
      %v1293 = vunpack.c.l.b16 %v1260
      %v1294 = vunpack.c.l.b16 %v1261
      %v1295 = vunpack.c.l.b16 %v1262
      %v1296 = vunpack.c.l.b16 %v1263
      %v1297 = vunpack.c.l.b16 %v1264
      %v1298 = vunpack.c.l.b16 %v1265
      %v1299 = vpack.c.b16 %v1292, %v1291
      %v1300 = vpack.c.b16 %v1294, %v1293
      %v1301 = vpack.c.b16 %v1296, %v1295
      %v1302 = vpack.c.b16 %v1298, %v1297
      %v1323 = vunpack.c.l.b16 %v1267
      %v1324 = vunpack.c.l.b16 %v1268
      %v1325 = vunpack.c.l.b16 %v1269
      %v1326 = vunpack.c.l.b16 %v1270
      %v1327 = vunpack.c.l.b16 %v1271
      %v1328 = vunpack.c.l.b16 %v1272
      %v1329 = vunpack.c.l.b16 %v1273
      %v1330 = vunpack.c.l.b16 %v1274
      %v1331 = vunpack.c.l.b16 %v1275
      %v1332 = vunpack.c.l.b16 %v1276
      %v1333 = vunpack.c.l.b16 %v1277
      %v1334 = vunpack.c.l.b16 %v1278
      %v1335 = vunpack.c.l.b16 %v1279
      %v1336 = vunpack.c.l.b16 %v1280
      %v1337 = vunpack.c.l.b16 %v1281
      %v1338 = vunpack.c.l.b16 %v1282
      %v1339 = vpack.c.b16 %v1324, %v1323
      %v1340 = vpack.c.b16 %v1326, %v1325
      %v1341 = vpack.c.b16 %v1328, %v1327
      %v1342 = vpack.c.b16 %v1330, %v1329
      %v1343 = vpack.c.b16 %v1332, %v1331
      %v1344 = vpack.c.b16 %v1334, %v1333
      %v1345 = vpack.c.b16 %v1336, %v1335
      %v1346 = vpack.c.b16 %v1338, %v1337
      %1355 = vmatpush.bf16.msra.mxu0 %v1346
      %1356 = vmatpush.bf16.msra.mxu0 %v1345
      %1357 = vmatpush.bf16.msra.mxu0 %v1344
      %1358 = vmatpush.bf16.msra.mxu0 %v1343
      %1359 = vmatpush.bf16.msra.mxu0 %v1342
      %1360 = vmatpush.bf16.msra.mxu0 %v1341
      %1361 = vmatpush.bf16.msra.mxu0 %v1340
      %1362 = vmatpush.bf16.msra.mxu0 %v1339
      %1363 = vmatmul.bf16.gmra.mxu0 %v1299
      %v1364 = vpop.f32.mrf.mxu0
      %v1365 = vadd.f32 0.0, %v1364
      %v1366 = vpop.f32.mrf.mxu0
      %v1367 = vadd.f32 0.0, %v1366
      %1368 = vmatmul.bf16.gmra.mxu0 %v1300
      %v1369 = vpop.f32.mrf.mxu0
      %v1370 = vadd.f32 0.0, %v1369
      %v1371 = vpop.f32.mrf.mxu0
      %v1372 = vadd.f32 0.0, %v1371
      %1373 = vmatmul.bf16.gmra.mxu0 %v1301
      %v1374 = vpop.f32.mrf.mxu0
      %v1375 = vadd.f32 0.0, %v1374
      %v1376 = vpop.f32.mrf.mxu0
      %v1377 = vadd.f32 0.0, %v1376
      %1378 = vmatmul.bf16.gmra.mxu0 %v1302
      %v1379 = vpop.f32.mrf.mxu0
      %v1380 = vadd.f32 0.0, %v1379
      %v1381 = vpop.f32.mrf.mxu0
      %v1382 = vadd.f32 0.0, %v1381
      %1383 = vdwg.mxu0
      %v1384 = vadd.f32 %v1250, %v1365
      %v1385 = vadd.f32 %v1251, %v1367
      %v1386 = vadd.f32 %v1252, %v1370
      %v1387 = vadd.f32 %v1253, %v1372
      %v1388 = vadd.f32 %v1254, %v1375
      %v1389 = vadd.f32 %v1255, %v1377
      %v1390 = vadd.f32 %v1256, %v1380
      %v1391 = vadd.f32 %v1257, %v1382
      %v1392 = vld [vmem:[%s609] sm:$0xf]
      %v1393 = vld [vmem:[%s609 + $0x4] sm:$0x1]
      %v1394 = vld [vmem:[%s609 + $0x8] sm:$0xf]
      %v1395 = vld [vmem:[%s609 + $0xc] sm:$0x1]
      %v1396 = vld [vmem:[%s609 + $0x10] sm:$0xf]
      %v1397 = vld [vmem:[%s609 + $0x14] sm:$0x1]
      %v1398 = vld [vmem:[%s609 + $0x18] sm:$0xf]
      %v1399 = vld [vmem:[%s609 + $0x1c] sm:$0x1]
      %v1400 = vld [vmem:[%s609 + $0x20] sm:$0xf]
      %v1401 = vld [vmem:[%s609 + $0x24] sm:$0x1]
      %v1402 = vld [vmem:[%s609 + $0x28] sm:$0xf]
      %v1403 = vld [vmem:[%s609 + $0x2c] sm:$0x1]
      %v1404 = vld [vmem:[%s609 + $0x30] sm:$0xf]
      %v1405 = vld [vmem:[%s609 + $0x34] sm:$0x1]
      %v1406 = vld [vmem:[%s609 + $0x38] sm:$0xf]
      %v1407 = vld [vmem:[%s609 + $0x3c] sm:$0x1]
      %v1409 = vshrl.u32 %v1392, 16
      %v1411 = vrot.slane %v1409, 4
      %v1412 = vshll.u32 %v1392, 16
      %v1414 = vrot.slane %v1412, 5
      %v1415 = vor.u32 %v1411, %v1414
      %v1416 = vrot.slane %v1415, 4
      %v1418 = vshll.u32 %v1393, 16
      %v1420 = vrot.slane %v1418, 5
      %v1421 = vsel %vm757, %v1416, %v1420
      %v1423 = vshrl.u32 %v1394, 16
      %v1425 = vrot.slane %v1423, 4
      %v1426 = vshll.u32 %v1394, 16
      %v1428 = vrot.slane %v1426, 5
      %v1429 = vor.u32 %v1425, %v1428
      %v1430 = vrot.slane %v1429, 4
      %v1432 = vshll.u32 %v1395, 16
      %v1434 = vrot.slane %v1432, 5
      %v1435 = vsel %vm757, %v1430, %v1434
      %v1437 = vshrl.u32 %v1396, 16
      %v1439 = vrot.slane %v1437, 4
      %v1440 = vshll.u32 %v1396, 16
      %v1442 = vrot.slane %v1440, 5
      %v1443 = vor.u32 %v1439, %v1442
      %v1444 = vrot.slane %v1443, 4
      %v1446 = vshll.u32 %v1397, 16
      %v1448 = vrot.slane %v1446, 5
      %v1449 = vsel %vm757, %v1444, %v1448
      %v1451 = vshrl.u32 %v1398, 16
      %v1453 = vrot.slane %v1451, 4
      %v1454 = vshll.u32 %v1398, 16
      %v1456 = vrot.slane %v1454, 5
      %v1457 = vor.u32 %v1453, %v1456
      %v1458 = vrot.slane %v1457, 4
      %v1460 = vshll.u32 %v1399, 16
      %v1462 = vrot.slane %v1460, 5
      %v1463 = vsel %vm757, %v1458, %v1462
      %v1465 = vshrl.u32 %v1400, 16
      %v1467 = vrot.slane %v1465, 4
      %v1468 = vshll.u32 %v1400, 16
      %v1470 = vrot.slane %v1468, 5
      %v1471 = vor.u32 %v1467, %v1470
      %v1472 = vrot.slane %v1471, 4
      %v1474 = vshll.u32 %v1401, 16
      %v1476 = vrot.slane %v1474, 5
      %v1477 = vsel %vm757, %v1472, %v1476
      %v1479 = vshrl.u32 %v1402, 16
      %v1481 = vrot.slane %v1479, 4
      %v1482 = vshll.u32 %v1402, 16
      %v1484 = vrot.slane %v1482, 5
      %v1485 = vor.u32 %v1481, %v1484
      %v1486 = vrot.slane %v1485, 4
      %v1488 = vshll.u32 %v1403, 16
      %v1490 = vrot.slane %v1488, 5
      %v1491 = vsel %vm757, %v1486, %v1490
      %v1493 = vshrl.u32 %v1404, 16
      %v1495 = vrot.slane %v1493, 4
      %v1496 = vshll.u32 %v1404, 16
      %v1498 = vrot.slane %v1496, 5
      %v1499 = vor.u32 %v1495, %v1498
      %v1500 = vrot.slane %v1499, 4
      %v1502 = vshll.u32 %v1405, 16
      %v1504 = vrot.slane %v1502, 5
      %v1505 = vsel %vm757, %v1500, %v1504
      %v1507 = vshrl.u32 %v1406, 16
      %v1509 = vrot.slane %v1507, 4
      %v1510 = vshll.u32 %v1406, 16
      %v1512 = vrot.slane %v1510, 5
      %v1513 = vor.u32 %v1509, %v1512
      %v1514 = vrot.slane %v1513, 4
      %v1516 = vshll.u32 %v1407, 16
      %v1518 = vrot.slane %v1516, 5
      %v1519 = vsel %vm757, %v1514, %v1518
      %s1520 = scalar_lea.vmem %s3, 256
      %v1521 = vld [vmem:[%s1520] sm:$0xf]
      %v1522 = vld [vmem:[%s1520 + $0x4] sm:$0xf]
      %v1523 = vld [vmem:[%s1520 + $0x8] sm:$0xf]
      %v1524 = vld [vmem:[%s1520 + $0xc] sm:$0xf]
      %v1525 = vld [vmem:[%s1520 + $0x10] sm:$0xf]
      %v1526 = vld [vmem:[%s1520 + $0x14] sm:$0xf]
      %v1527 = vld [vmem:[%s1520 + $0x18] sm:$0xf]
      %v1528 = vld [vmem:[%s1520 + $0x1c] sm:$0xf]
      %v1529 = vld [vmem:[%s1520 + $0x20] sm:$0xf]
      %v1530 = vld [vmem:[%s1520 + $0x24] sm:$0xf]
      %v1531 = vld [vmem:[%s1520 + $0x28] sm:$0xf]
      %v1532 = vld [vmem:[%s1520 + $0x2c] sm:$0xf]
      %v1533 = vld [vmem:[%s1520 + $0x30] sm:$0xf]
      %v1534 = vld [vmem:[%s1520 + $0x34] sm:$0xf]
      %v1535 = vld [vmem:[%s1520 + $0x38] sm:$0xf]
      %v1536 = vld [vmem:[%s1520 + $0x3c] sm:$0xf]
      %v1537 = vunpack.c.l.b16 %v1421
      %v1538 = vunpack.c.l.b16 %v1435
      %v1539 = vunpack.c.l.b16 %v1449
      %v1540 = vunpack.c.l.b16 %v1463
      %v1541 = vunpack.c.l.b16 %v1477
      %v1542 = vunpack.c.l.b16 %v1491
      %v1543 = vunpack.c.l.b16 %v1505
      %v1544 = vunpack.c.l.b16 %v1519
      %v1545 = vpack.c.b16 %v1538, %v1537
      %v1546 = vpack.c.b16 %v1540, %v1539
      %v1547 = vpack.c.b16 %v1542, %v1541
      %v1548 = vpack.c.b16 %v1544, %v1543
      %v1569 = vunpack.c.l.b16 %v1521
      %v1570 = vunpack.c.l.b16 %v1522
      %v1571 = vunpack.c.l.b16 %v1523
      %v1572 = vunpack.c.l.b16 %v1524
      %v1573 = vunpack.c.l.b16 %v1525
      %v1574 = vunpack.c.l.b16 %v1526
      %v1575 = vunpack.c.l.b16 %v1527
      %v1576 = vunpack.c.l.b16 %v1528
      %v1577 = vunpack.c.l.b16 %v1529
      %v1578 = vunpack.c.l.b16 %v1530
      %v1579 = vunpack.c.l.b16 %v1531
      %v1580 = vunpack.c.l.b16 %v1532
      %v1581 = vunpack.c.l.b16 %v1533
      %v1582 = vunpack.c.l.b16 %v1534
      %v1583 = vunpack.c.l.b16 %v1535
      %v1584 = vunpack.c.l.b16 %v1536
      %v1585 = vpack.c.b16 %v1570, %v1569
      %v1586 = vpack.c.b16 %v1572, %v1571
      %v1587 = vpack.c.b16 %v1574, %v1573
      %v1588 = vpack.c.b16 %v1576, %v1575
      %v1589 = vpack.c.b16 %v1578, %v1577
      %v1590 = vpack.c.b16 %v1580, %v1579
      %v1591 = vpack.c.b16 %v1582, %v1581
      %v1592 = vpack.c.b16 %v1584, %v1583
      %1601 = vmatpush.bf16.msra.mxu0 %v1592
      %1602 = vmatpush.bf16.msra.mxu0 %v1591
      %1603 = vmatpush.bf16.msra.mxu0 %v1590
      %1604 = vmatpush.bf16.msra.mxu0 %v1589
      %1605 = vmatpush.bf16.msra.mxu0 %v1588
      %1606 = vmatpush.bf16.msra.mxu0 %v1587
      %1607 = vmatpush.bf16.msra.mxu0 %v1586
      %1608 = vmatpush.bf16.msra.mxu0 %v1585
      %1609 = vmatmul.bf16.gmra.mxu0 %v1545
      %v1610 = vpop.f32.mrf.mxu0
      %v1611 = vadd.f32 0.0, %v1610
      %v1612 = vpop.f32.mrf.mxu0
      %v1613 = vadd.f32 0.0, %v1612
      %1614 = vmatmul.bf16.gmra.mxu0 %v1546
      %v1615 = vpop.f32.mrf.mxu0
      %v1616 = vadd.f32 0.0, %v1615
      %v1617 = vpop.f32.mrf.mxu0
      %v1618 = vadd.f32 0.0, %v1617
      %1619 = vmatmul.bf16.gmra.mxu0 %v1547
      %v1620 = vpop.f32.mrf.mxu0
      %v1621 = vadd.f32 0.0, %v1620
      %v1622 = vpop.f32.mrf.mxu0
      %v1623 = vadd.f32 0.0, %v1622
      %1624 = vmatmul.bf16.gmra.mxu0 %v1548
      %v1625 = vpop.f32.mrf.mxu0
      %v1626 = vadd.f32 0.0, %v1625
      %v1627 = vpop.f32.mrf.mxu0
      %v1628 = vadd.f32 0.0, %v1627
      %1629 = vdwg.mxu0
      %v1630 = vadd.f32 %v1384, %v1611
      %v1631 = vadd.f32 %v1385, %v1613
      %v1632 = vadd.f32 %v1386, %v1616
      %v1633 = vadd.f32 %v1387, %v1618
      %v1634 = vadd.f32 %v1388, %v1621
      %v1635 = vadd.f32 %v1389, %v1623
      %v1636 = vadd.f32 %v1390, %v1626
      %v1637 = vadd.f32 %v1391, %v1628
      %v1638 = vld [vmem:[%s609] sm:$0xe]
      %v1639 = vld [vmem:[%s609 + $0x8] sm:$0xe]
      %v1640 = vld [vmem:[%s609 + $0x10] sm:$0xe]
      %v1641 = vld [vmem:[%s609 + $0x18] sm:$0xe]
      %v1642 = vld [vmem:[%s609 + $0x20] sm:$0xe]
      %v1643 = vld [vmem:[%s609 + $0x28] sm:$0xe]
      %v1644 = vld [vmem:[%s609 + $0x30] sm:$0xe]
      %v1645 = vld [vmem:[%s609 + $0x38] sm:$0xe]
      %v1662 = vrot.slane %v1638, 5
      %v1663 = vrot.slane %v1662, 4
      %v1664 = vrot.slane %v1393, 5
      %v1665 = vsel %vm1107, %v1663, %v1664
      %v1666 = vrot.slane %v1639, 5
      %v1667 = vrot.slane %v1666, 4
      %v1668 = vrot.slane %v1395, 5
      %v1669 = vsel %vm1107, %v1667, %v1668
      %v1670 = vrot.slane %v1640, 5
      %v1671 = vrot.slane %v1670, 4
      %v1672 = vrot.slane %v1397, 5
      %v1673 = vsel %vm1107, %v1671, %v1672
      %v1674 = vrot.slane %v1641, 5
      %v1675 = vrot.slane %v1674, 4
      %v1676 = vrot.slane %v1399, 5
      %v1677 = vsel %vm1107, %v1675, %v1676
      %v1678 = vrot.slane %v1642, 5
      %v1679 = vrot.slane %v1678, 4
      %v1680 = vrot.slane %v1401, 5
      %v1681 = vsel %vm1107, %v1679, %v1680
      %v1682 = vrot.slane %v1643, 5
      %v1683 = vrot.slane %v1682, 4
      %v1684 = vrot.slane %v1403, 5
      %v1685 = vsel %vm1107, %v1683, %v1684
      %v1686 = vrot.slane %v1644, 5
      %v1687 = vrot.slane %v1686, 4
      %v1688 = vrot.slane %v1405, 5
      %v1689 = vsel %vm1107, %v1687, %v1688
      %v1690 = vrot.slane %v1645, 5
      %v1691 = vrot.slane %v1690, 4
      %v1692 = vrot.slane %v1407, 5
      %v1693 = vsel %vm1107, %v1691, %v1692
      %s1694 = scalar_lea.vmem %s3, 320
      %v1695 = vld [vmem:[%s1694] sm:$0xf]
      %v1696 = vld [vmem:[%s1694 + $0x4] sm:$0xf]
      %v1697 = vld [vmem:[%s1694 + $0x8] sm:$0xf]
      %v1698 = vld [vmem:[%s1694 + $0xc] sm:$0xf]
      %v1699 = vld [vmem:[%s1694 + $0x10] sm:$0xf]
      %v1700 = vld [vmem:[%s1694 + $0x14] sm:$0xf]
      %v1701 = vld [vmem:[%s1694 + $0x18] sm:$0xf]
      %v1702 = vld [vmem:[%s1694 + $0x1c] sm:$0xf]
      %v1703 = vld [vmem:[%s1694 + $0x20] sm:$0xf]
      %v1704 = vld [vmem:[%s1694 + $0x24] sm:$0xf]
      %v1705 = vld [vmem:[%s1694 + $0x28] sm:$0xf]
      %v1706 = vld [vmem:[%s1694 + $0x2c] sm:$0xf]
      %v1707 = vld [vmem:[%s1694 + $0x30] sm:$0xf]
      %v1708 = vld [vmem:[%s1694 + $0x34] sm:$0xf]
      %v1709 = vld [vmem:[%s1694 + $0x38] sm:$0xf]
      %v1710 = vld [vmem:[%s1694 + $0x3c] sm:$0xf]
      %v1711 = vunpack.c.l.b16 %v1665
      %v1712 = vunpack.c.l.b16 %v1669
      %v1713 = vunpack.c.l.b16 %v1673
      %v1714 = vunpack.c.l.b16 %v1677
      %v1715 = vunpack.c.l.b16 %v1681
      %v1716 = vunpack.c.l.b16 %v1685
      %v1717 = vunpack.c.l.b16 %v1689
      %v1718 = vunpack.c.l.b16 %v1693
      %v1719 = vpack.c.b16 %v1712, %v1711
      %v1720 = vpack.c.b16 %v1714, %v1713
      %v1721 = vpack.c.b16 %v1716, %v1715
      %v1722 = vpack.c.b16 %v1718, %v1717
      %v1743 = vunpack.c.l.b16 %v1695
      %v1744 = vunpack.c.l.b16 %v1696
      %v1745 = vunpack.c.l.b16 %v1697
      %v1746 = vunpack.c.l.b16 %v1698
      %v1747 = vunpack.c.l.b16 %v1699
      %v1748 = vunpack.c.l.b16 %v1700
      %v1749 = vunpack.c.l.b16 %v1701
      %v1750 = vunpack.c.l.b16 %v1702
      %v1751 = vunpack.c.l.b16 %v1703
      %v1752 = vunpack.c.l.b16 %v1704
      %v1753 = vunpack.c.l.b16 %v1705
      %v1754 = vunpack.c.l.b16 %v1706
      %v1755 = vunpack.c.l.b16 %v1707
      %v1756 = vunpack.c.l.b16 %v1708
      %v1757 = vunpack.c.l.b16 %v1709
      %v1758 = vunpack.c.l.b16 %v1710
      %v1759 = vpack.c.b16 %v1744, %v1743
      %v1760 = vpack.c.b16 %v1746, %v1745
      %v1761 = vpack.c.b16 %v1748, %v1747
      %v1762 = vpack.c.b16 %v1750, %v1749
      %v1763 = vpack.c.b16 %v1752, %v1751
      %v1764 = vpack.c.b16 %v1754, %v1753
      %v1765 = vpack.c.b16 %v1756, %v1755
      %v1766 = vpack.c.b16 %v1758, %v1757
      %1775 = vmatpush.bf16.msra.mxu0 %v1766
      %1776 = vmatpush.bf16.msra.mxu0 %v1765
      %1777 = vmatpush.bf16.msra.mxu0 %v1764
      %1778 = vmatpush.bf16.msra.mxu0 %v1763
      %1779 = vmatpush.bf16.msra.mxu0 %v1762
      %1780 = vmatpush.bf16.msra.mxu0 %v1761
      %1781 = vmatpush.bf16.msra.mxu0 %v1760
      %1782 = vmatpush.bf16.msra.mxu0 %v1759
      %1783 = vmatmul.bf16.gmra.mxu0 %v1719
      %v1784 = vpop.f32.mrf.mxu0
      %v1785 = vadd.f32 0.0, %v1784
      %v1786 = vpop.f32.mrf.mxu0
      %v1787 = vadd.f32 0.0, %v1786
      %1788 = vmatmul.bf16.gmra.mxu0 %v1720
      %v1789 = vpop.f32.mrf.mxu0
      %v1790 = vadd.f32 0.0, %v1789
      %v1791 = vpop.f32.mrf.mxu0
      %v1792 = vadd.f32 0.0, %v1791
      %1793 = vmatmul.bf16.gmra.mxu0 %v1721
      %v1794 = vpop.f32.mrf.mxu0
      %v1795 = vadd.f32 0.0, %v1794
      %v1796 = vpop.f32.mrf.mxu0
      %v1797 = vadd.f32 0.0, %v1796
      %1798 = vmatmul.bf16.gmra.mxu0 %v1722
      %v1799 = vpop.f32.mrf.mxu0
      %v1800 = vadd.f32 0.0, %v1799
      %v1801 = vpop.f32.mrf.mxu0
      %v1802 = vadd.f32 0.0, %v1801
      %1803 = vdwg.mxu0
      %v1804 = vadd.f32 %v1630, %v1785
      %v1805 = vadd.f32 %v1631, %v1787
      %v1806 = vadd.f32 %v1632, %v1790
      %v1807 = vadd.f32 %v1633, %v1792
      %v1808 = vadd.f32 %v1634, %v1795
      %v1809 = vadd.f32 %v1635, %v1797
      %v1810 = vadd.f32 %v1636, %v1800
      %v1811 = vadd.f32 %v1637, %v1802
      %s1812 = scalar_lea.vmem [#allocation2], 16
      %v1813 = vld [vmem:[%s1812] sm:$0xf]
      %v1814 = vld [vmem:[%s1812 + $0x8] sm:$0xf]
      %v1815 = vld [vmem:[%s1812 + $0x10] sm:$0xf]
      %v1816 = vld [vmem:[%s1812 + $0x18] sm:$0xf]
      %v1817 = vld [vmem:[%s1812 + $0x20] sm:$0xf]
      %v1818 = vld [vmem:[%s1812 + $0x28] sm:$0xf]
      %v1819 = vld [vmem:[%s1812 + $0x30] sm:$0xf]
      %v1820 = vld [vmem:[%s1812 + $0x38] sm:$0xf]
      %s1821 = scalar_lea.vmem %s3, 384
      %v1822 = vld [vmem:[%s1821] sm:$0xf]
      %v1823 = vld [vmem:[%s1821 + $0x4] sm:$0xf]
      %v1824 = vld [vmem:[%s1821 + $0x8] sm:$0xf]
      %v1825 = vld [vmem:[%s1821 + $0xc] sm:$0xf]
      %v1826 = vld [vmem:[%s1821 + $0x10] sm:$0xf]
      %v1827 = vld [vmem:[%s1821 + $0x14] sm:$0xf]
      %v1828 = vld [vmem:[%s1821 + $0x18] sm:$0xf]
      %v1829 = vld [vmem:[%s1821 + $0x1c] sm:$0xf]
      %v1830 = vld [vmem:[%s1821 + $0x20] sm:$0xf]
      %v1831 = vld [vmem:[%s1821 + $0x24] sm:$0xf]
      %v1832 = vld [vmem:[%s1821 + $0x28] sm:$0xf]
      %v1833 = vld [vmem:[%s1821 + $0x2c] sm:$0xf]
      %v1834 = vld [vmem:[%s1821 + $0x30] sm:$0xf]
      %v1835 = vld [vmem:[%s1821 + $0x34] sm:$0xf]
      %v1836 = vld [vmem:[%s1821 + $0x38] sm:$0xf]
      %v1837 = vld [vmem:[%s1821 + $0x3c] sm:$0xf]
      %v1846 = vunpack.c.l.b16 %v1813
      %v1847 = vunpack.c.l.b16 %v1814
      %v1848 = vunpack.c.l.b16 %v1815
      %v1849 = vunpack.c.l.b16 %v1816
      %v1850 = vunpack.c.l.b16 %v1817
      %v1851 = vunpack.c.l.b16 %v1818
      %v1852 = vunpack.c.l.b16 %v1819
      %v1853 = vunpack.c.l.b16 %v1820
      %v1854 = vpack.c.b16 %v1847, %v1846
      %v1855 = vpack.c.b16 %v1849, %v1848
      %v1856 = vpack.c.b16 %v1851, %v1850
      %v1857 = vpack.c.b16 %v1853, %v1852
      %v1878 = vunpack.c.l.b16 %v1822
      %v1879 = vunpack.c.l.b16 %v1823
      %v1880 = vunpack.c.l.b16 %v1824
      %v1881 = vunpack.c.l.b16 %v1825
      %v1882 = vunpack.c.l.b16 %v1826
      %v1883 = vunpack.c.l.b16 %v1827
      %v1884 = vunpack.c.l.b16 %v1828
      %v1885 = vunpack.c.l.b16 %v1829
      %v1886 = vunpack.c.l.b16 %v1830
      %v1887 = vunpack.c.l.b16 %v1831
      %v1888 = vunpack.c.l.b16 %v1832
      %v1889 = vunpack.c.l.b16 %v1833
      %v1890 = vunpack.c.l.b16 %v1834
      %v1891 = vunpack.c.l.b16 %v1835
      %v1892 = vunpack.c.l.b16 %v1836
      %v1893 = vunpack.c.l.b16 %v1837
      %v1894 = vpack.c.b16 %v1879, %v1878
      %v1895 = vpack.c.b16 %v1881, %v1880
      %v1896 = vpack.c.b16 %v1883, %v1882
      %v1897 = vpack.c.b16 %v1885, %v1884
      %v1898 = vpack.c.b16 %v1887, %v1886
      %v1899 = vpack.c.b16 %v1889, %v1888
      %v1900 = vpack.c.b16 %v1891, %v1890
      %v1901 = vpack.c.b16 %v1893, %v1892
      %1910 = vmatpush.bf16.msra.mxu0 %v1901
      %1911 = vmatpush.bf16.msra.mxu0 %v1900
      %1912 = vmatpush.bf16.msra.mxu0 %v1899
      %1913 = vmatpush.bf16.msra.mxu0 %v1898
      %1914 = vmatpush.bf16.msra.mxu0 %v1897
      %1915 = vmatpush.bf16.msra.mxu0 %v1896
      %1916 = vmatpush.bf16.msra.mxu0 %v1895
      %1917 = vmatpush.bf16.msra.mxu0 %v1894
      %1918 = vmatmul.bf16.gmra.mxu0 %v1854
      %v1919 = vpop.f32.mrf.mxu0
      %v1920 = vadd.f32 0.0, %v1919
      %v1921 = vpop.f32.mrf.mxu0
      %v1922 = vadd.f32 0.0, %v1921
      %1923 = vmatmul.bf16.gmra.mxu0 %v1855
      %v1924 = vpop.f32.mrf.mxu0
      %v1925 = vadd.f32 0.0, %v1924
      %v1926 = vpop.f32.mrf.mxu0
      %v1927 = vadd.f32 0.0, %v1926
      %1928 = vmatmul.bf16.gmra.mxu0 %v1856
      %v1929 = vpop.f32.mrf.mxu0
      %v1930 = vadd.f32 0.0, %v1929
      %v1931 = vpop.f32.mrf.mxu0
      %v1932 = vadd.f32 0.0, %v1931
      %1933 = vmatmul.bf16.gmra.mxu0 %v1857
      %v1934 = vpop.f32.mrf.mxu0
      %v1935 = vadd.f32 0.0, %v1934
      %v1936 = vpop.f32.mrf.mxu0
      %v1937 = vadd.f32 0.0, %v1936
      %1938 = vdwg.mxu0
      %v1939 = vadd.f32 %v1804, %v1920
      %v1940 = vadd.f32 %v1805, %v1922
      %v1941 = vadd.f32 %v1806, %v1925
      %v1942 = vadd.f32 %v1807, %v1927
      %v1943 = vadd.f32 %v1808, %v1930
      %v1944 = vadd.f32 %v1809, %v1932
      %v1945 = vadd.f32 %v1810, %v1935
      %v1946 = vadd.f32 %v1811, %v1937
      %v1947 = vld [vmem:[%s1812] sm:$0xf]
      %v1948 = vld [vmem:[%s1812 + $0x4] sm:$0x1]
      %v1949 = vld [vmem:[%s1812 + $0x8] sm:$0xf]
      %v1950 = vld [vmem:[%s1812 + $0xc] sm:$0x1]
      %v1951 = vld [vmem:[%s1812 + $0x10] sm:$0xf]
      %v1952 = vld [vmem:[%s1812 + $0x14] sm:$0x1]
      %v1953 = vld [vmem:[%s1812 + $0x18] sm:$0xf]
      %v1954 = vld [vmem:[%s1812 + $0x1c] sm:$0x1]
      %v1955 = vld [vmem:[%s1812 + $0x20] sm:$0xf]
      %v1956 = vld [vmem:[%s1812 + $0x24] sm:$0x1]
      %v1957 = vld [vmem:[%s1812 + $0x28] sm:$0xf]
      %v1958 = vld [vmem:[%s1812 + $0x2c] sm:$0x1]
      %v1959 = vld [vmem:[%s1812 + $0x30] sm:$0xf]
      %v1960 = vld [vmem:[%s1812 + $0x34] sm:$0x1]
      %v1961 = vld [vmem:[%s1812 + $0x38] sm:$0xf]
      %v1962 = vld [vmem:[%s1812 + $0x3c] sm:$0x1]
      %v1964 = vshrl.u32 %v1947, 16
      %v1966 = vrot.slane %v1964, 4
      %v1967 = vshll.u32 %v1947, 16
      %v1969 = vrot.slane %v1967, 5
      %v1970 = vor.u32 %v1966, %v1969
      %v1971 = vrot.slane %v1970, 4
      %v1973 = vshll.u32 %v1948, 16
      %v1975 = vrot.slane %v1973, 5
      %v1976 = vsel %vm757, %v1971, %v1975
      %v1978 = vshrl.u32 %v1949, 16
      %v1980 = vrot.slane %v1978, 4
      %v1981 = vshll.u32 %v1949, 16
      %v1983 = vrot.slane %v1981, 5
      %v1984 = vor.u32 %v1980, %v1983
      %v1985 = vrot.slane %v1984, 4
      %v1987 = vshll.u32 %v1950, 16
      %v1989 = vrot.slane %v1987, 5
      %v1990 = vsel %vm757, %v1985, %v1989
      %v1992 = vshrl.u32 %v1951, 16
      %v1994 = vrot.slane %v1992, 4
      %v1995 = vshll.u32 %v1951, 16
      %v1997 = vrot.slane %v1995, 5
      %v1998 = vor.u32 %v1994, %v1997
      %v1999 = vrot.slane %v1998, 4
      %v2001 = vshll.u32 %v1952, 16
      %v2003 = vrot.slane %v2001, 5
      %v2004 = vsel %vm757, %v1999, %v2003
      %v2006 = vshrl.u32 %v1953, 16
      %v2008 = vrot.slane %v2006, 4
      %v2009 = vshll.u32 %v1953, 16
      %v2011 = vrot.slane %v2009, 5
      %v2012 = vor.u32 %v2008, %v2011
      %v2013 = vrot.slane %v2012, 4
      %v2015 = vshll.u32 %v1954, 16
      %v2017 = vrot.slane %v2015, 5
      %v2018 = vsel %vm757, %v2013, %v2017
      %v2020 = vshrl.u32 %v1955, 16
      %v2022 = vrot.slane %v2020, 4
      %v2023 = vshll.u32 %v1955, 16
      %v2025 = vrot.slane %v2023, 5
      %v2026 = vor.u32 %v2022, %v2025
      %v2027 = vrot.slane %v2026, 4
      %v2029 = vshll.u32 %v1956, 16
      %v2031 = vrot.slane %v2029, 5
      %v2032 = vsel %vm757, %v2027, %v2031
      %v2034 = vshrl.u32 %v1957, 16
      %v2036 = vrot.slane %v2034, 4
      %v2037 = vshll.u32 %v1957, 16
      %v2039 = vrot.slane %v2037, 5
      %v2040 = vor.u32 %v2036, %v2039
      %v2041 = vrot.slane %v2040, 4
      %v2043 = vshll.u32 %v1958, 16
      %v2045 = vrot.slane %v2043, 5
      %v2046 = vsel %vm757, %v2041, %v2045
      %v2048 = vshrl.u32 %v1959, 16
      %v2050 = vrot.slane %v2048, 4
      %v2051 = vshll.u32 %v1959, 16
      %v2053 = vrot.slane %v2051, 5
      %v2054 = vor.u32 %v2050, %v2053
      %v2055 = vrot.slane %v2054, 4
      %v2057 = vshll.u32 %v1960, 16
      %v2059 = vrot.slane %v2057, 5
      %v2060 = vsel %vm757, %v2055, %v2059
      %v2062 = vshrl.u32 %v1961, 16
      %v2064 = vrot.slane %v2062, 4
      %v2065 = vshll.u32 %v1961, 16
      %v2067 = vrot.slane %v2065, 5
      %v2068 = vor.u32 %v2064, %v2067
      %v2069 = vrot.slane %v2068, 4
      %v2071 = vshll.u32 %v1962, 16
      %v2073 = vrot.slane %v2071, 5
      %v2074 = vsel %vm757, %v2069, %v2073
      %s2075 = scalar_lea.vmem %s3, 448
      %v2076 = vld [vmem:[%s2075] sm:$0xf]
      %v2077 = vld [vmem:[%s2075 + $0x4] sm:$0xf]
      %v2078 = vld [vmem:[%s2075 + $0x8] sm:$0xf]
      %v2079 = vld [vmem:[%s2075 + $0xc] sm:$0xf]
      %v2080 = vld [vmem:[%s2075 + $0x10] sm:$0xf]
      %v2081 = vld [vmem:[%s2075 + $0x14] sm:$0xf]
      %v2082 = vld [vmem:[%s2075 + $0x18] sm:$0xf]
      %v2083 = vld [vmem:[%s2075 + $0x1c] sm:$0xf]
      %v2084 = vld [vmem:[%s2075 + $0x20] sm:$0xf]
      %v2085 = vld [vmem:[%s2075 + $0x24] sm:$0xf]
      %v2086 = vld [vmem:[%s2075 + $0x28] sm:$0xf]
      %v2087 = vld [vmem:[%s2075 + $0x2c] sm:$0xf]
      %v2088 = vld [vmem:[%s2075 + $0x30] sm:$0xf]
      %v2089 = vld [vmem:[%s2075 + $0x34] sm:$0xf]
      %v2090 = vld [vmem:[%s2075 + $0x38] sm:$0xf]
      %v2091 = vld [vmem:[%s2075 + $0x3c] sm:$0xf]
      %v2092 = vunpack.c.l.b16 %v1976
      %v2093 = vunpack.c.l.b16 %v1990
      %v2094 = vunpack.c.l.b16 %v2004
      %v2095 = vunpack.c.l.b16 %v2018
      %v2096 = vunpack.c.l.b16 %v2032
      %v2097 = vunpack.c.l.b16 %v2046
      %v2098 = vunpack.c.l.b16 %v2060
      %v2099 = vunpack.c.l.b16 %v2074
      %v2100 = vpack.c.b16 %v2093, %v2092
      %v2101 = vpack.c.b16 %v2095, %v2094
      %v2102 = vpack.c.b16 %v2097, %v2096
      %v2103 = vpack.c.b16 %v2099, %v2098
      %v2124 = vunpack.c.l.b16 %v2076
      %v2125 = vunpack.c.l.b16 %v2077
      %v2126 = vunpack.c.l.b16 %v2078
      %v2127 = vunpack.c.l.b16 %v2079
      %v2128 = vunpack.c.l.b16 %v2080
      %v2129 = vunpack.c.l.b16 %v2081
      %v2130 = vunpack.c.l.b16 %v2082
      %v2131 = vunpack.c.l.b16 %v2083
      %v2132 = vunpack.c.l.b16 %v2084
      %v2133 = vunpack.c.l.b16 %v2085
      %v2134 = vunpack.c.l.b16 %v2086
      %v2135 = vunpack.c.l.b16 %v2087
      %v2136 = vunpack.c.l.b16 %v2088
      %v2137 = vunpack.c.l.b16 %v2089
      %v2138 = vunpack.c.l.b16 %v2090
      %v2139 = vunpack.c.l.b16 %v2091
      %v2140 = vpack.c.b16 %v2125, %v2124
      %v2141 = vpack.c.b16 %v2127, %v2126
      %v2142 = vpack.c.b16 %v2129, %v2128
      %v2143 = vpack.c.b16 %v2131, %v2130
      %v2144 = vpack.c.b16 %v2133, %v2132
      %v2145 = vpack.c.b16 %v2135, %v2134
      %v2146 = vpack.c.b16 %v2137, %v2136
      %v2147 = vpack.c.b16 %v2139, %v2138
      %2156 = vmatpush.bf16.msra.mxu0 %v2147
      %2157 = vmatpush.bf16.msra.mxu0 %v2146
      %2158 = vmatpush.bf16.msra.mxu0 %v2145
      %2159 = vmatpush.bf16.msra.mxu0 %v2144
      %2160 = vmatpush.bf16.msra.mxu0 %v2143
      %2161 = vmatpush.bf16.msra.mxu0 %v2142
      %2162 = vmatpush.bf16.msra.mxu0 %v2141
      %2163 = vmatpush.bf16.msra.mxu0 %v2140
      %2164 = vmatmul.bf16.gmra.mxu0 %v2100
      %v2165 = vpop.f32.mrf.mxu0
      %v2166 = vadd.f32 0.0, %v2165
      %v2167 = vpop.f32.mrf.mxu0
      %v2168 = vadd.f32 0.0, %v2167
      %2169 = vmatmul.bf16.gmra.mxu0 %v2101
      %v2170 = vpop.f32.mrf.mxu0
      %v2171 = vadd.f32 0.0, %v2170
      %v2172 = vpop.f32.mrf.mxu0
      %v2173 = vadd.f32 0.0, %v2172
      %2174 = vmatmul.bf16.gmra.mxu0 %v2102
      %v2175 = vpop.f32.mrf.mxu0
      %v2176 = vadd.f32 0.0, %v2175
      %v2177 = vpop.f32.mrf.mxu0
      %v2178 = vadd.f32 0.0, %v2177
      %2179 = vmatmul.bf16.gmra.mxu0 %v2103
      %v2180 = vpop.f32.mrf.mxu0
      %v2181 = vadd.f32 0.0, %v2180
      %v2182 = vpop.f32.mrf.mxu0
      %v2183 = vadd.f32 0.0, %v2182
      %2184 = vdwg.mxu0
      %v2185 = vadd.f32 %v1939, %v2166
      %v2186 = vadd.f32 %v1940, %v2168
      %v2187 = vadd.f32 %v1941, %v2171
      %v2188 = vadd.f32 %v1942, %v2173
      %v2189 = vadd.f32 %v1943, %v2176
      %v2190 = vadd.f32 %v1944, %v2178
      %v2191 = vadd.f32 %v1945, %v2181
      %v2192 = vadd.f32 %v1946, %v2183
      %v2193 = vld [vmem:[%s1812] sm:$0xe]
      %v2194 = vld [vmem:[%s1812 + $0x8] sm:$0xe]
      %v2195 = vld [vmem:[%s1812 + $0x10] sm:$0xe]
      %v2196 = vld [vmem:[%s1812 + $0x18] sm:$0xe]
      %v2197 = vld [vmem:[%s1812 + $0x20] sm:$0xe]
      %v2198 = vld [vmem:[%s1812 + $0x28] sm:$0xe]
      %v2199 = vld [vmem:[%s1812 + $0x30] sm:$0xe]
      %v2200 = vld [vmem:[%s1812 + $0x38] sm:$0xe]
      %v2217 = vrot.slane %v2193, 5
      %v2218 = vrot.slane %v2217, 4
      %v2219 = vrot.slane %v1948, 5
      %v2220 = vsel %vm1107, %v2218, %v2219
      %v2221 = vrot.slane %v2194, 5
      %v2222 = vrot.slane %v2221, 4
      %v2223 = vrot.slane %v1950, 5
      %v2224 = vsel %vm1107, %v2222, %v2223
      %v2225 = vrot.slane %v2195, 5
      %v2226 = vrot.slane %v2225, 4
      %v2227 = vrot.slane %v1952, 5
      %v2228 = vsel %vm1107, %v2226, %v2227
      %v2229 = vrot.slane %v2196, 5
      %v2230 = vrot.slane %v2229, 4
      %v2231 = vrot.slane %v1954, 5
      %v2232 = vsel %vm1107, %v2230, %v2231
      %v2233 = vrot.slane %v2197, 5
      %v2234 = vrot.slane %v2233, 4
      %v2235 = vrot.slane %v1956, 5
      %v2236 = vsel %vm1107, %v2234, %v2235
      %v2237 = vrot.slane %v2198, 5
      %v2238 = vrot.slane %v2237, 4
      %v2239 = vrot.slane %v1958, 5
      %v2240 = vsel %vm1107, %v2238, %v2239
      %v2241 = vrot.slane %v2199, 5
      %v2242 = vrot.slane %v2241, 4
      %v2243 = vrot.slane %v1960, 5
      %v2244 = vsel %vm1107, %v2242, %v2243
      %v2245 = vrot.slane %v2200, 5
      %v2246 = vrot.slane %v2245, 4
      %v2247 = vrot.slane %v1962, 5
      %v2248 = vsel %vm1107, %v2246, %v2247
      %s2249 = scalar_lea.vmem %s3, 512
      %v2250 = vld [vmem:[%s2249] sm:$0xf]
      %v2251 = vld [vmem:[%s2249 + $0x4] sm:$0xf]
      %v2252 = vld [vmem:[%s2249 + $0x8] sm:$0xf]
      %v2253 = vld [vmem:[%s2249 + $0xc] sm:$0xf]
      %v2254 = vld [vmem:[%s2249 + $0x10] sm:$0xf]
      %v2255 = vld [vmem:[%s2249 + $0x14] sm:$0xf]
      %v2256 = vld [vmem:[%s2249 + $0x18] sm:$0xf]
      %v2257 = vld [vmem:[%s2249 + $0x1c] sm:$0xf]
      %v2258 = vld [vmem:[%s2249 + $0x20] sm:$0xf]
      %v2259 = vld [vmem:[%s2249 + $0x24] sm:$0xf]
      %v2260 = vld [vmem:[%s2249 + $0x28] sm:$0xf]
      %v2261 = vld [vmem:[%s2249 + $0x2c] sm:$0xf]
      %v2262 = vld [vmem:[%s2249 + $0x30] sm:$0xf]
      %v2263 = vld [vmem:[%s2249 + $0x34] sm:$0xf]
      %v2264 = vld [vmem:[%s2249 + $0x38] sm:$0xf]
      %v2265 = vld [vmem:[%s2249 + $0x3c] sm:$0xf]
      %v2266 = vunpack.c.l.b16 %v2220
      %v2267 = vunpack.c.l.b16 %v2224
      %v2268 = vunpack.c.l.b16 %v2228
      %v2269 = vunpack.c.l.b16 %v2232
      %v2270 = vunpack.c.l.b16 %v2236
      %v2271 = vunpack.c.l.b16 %v2240
      %v2272 = vunpack.c.l.b16 %v2244
      %v2273 = vunpack.c.l.b16 %v2248
      %v2274 = vpack.c.b16 %v2267, %v2266
      %v2275 = vpack.c.b16 %v2269, %v2268
      %v2276 = vpack.c.b16 %v2271, %v2270
      %v2277 = vpack.c.b16 %v2273, %v2272
      %v2298 = vunpack.c.l.b16 %v2250
      %v2299 = vunpack.c.l.b16 %v2251
      %v2300 = vunpack.c.l.b16 %v2252
      %v2301 = vunpack.c.l.b16 %v2253
      %v2302 = vunpack.c.l.b16 %v2254
      %v2303 = vunpack.c.l.b16 %v2255
      %v2304 = vunpack.c.l.b16 %v2256
      %v2305 = vunpack.c.l.b16 %v2257
      %v2306 = vunpack.c.l.b16 %v2258
      %v2307 = vunpack.c.l.b16 %v2259
      %v2308 = vunpack.c.l.b16 %v2260
      %v2309 = vunpack.c.l.b16 %v2261
      %v2310 = vunpack.c.l.b16 %v2262
      %v2311 = vunpack.c.l.b16 %v2263
      %v2312 = vunpack.c.l.b16 %v2264
      %v2313 = vunpack.c.l.b16 %v2265
      %v2314 = vpack.c.b16 %v2299, %v2298
      %v2315 = vpack.c.b16 %v2301, %v2300
      %v2316 = vpack.c.b16 %v2303, %v2302
      %v2317 = vpack.c.b16 %v2305, %v2304
      %v2318 = vpack.c.b16 %v2307, %v2306
      %v2319 = vpack.c.b16 %v2309, %v2308
      %v2320 = vpack.c.b16 %v2311, %v2310
      %v2321 = vpack.c.b16 %v2313, %v2312
      %2330 = vmatpush.bf16.msra.mxu0 %v2321
      %2331 = vmatpush.bf16.msra.mxu0 %v2320
      %2332 = vmatpush.bf16.msra.mxu0 %v2319
      %2333 = vmatpush.bf16.msra.mxu0 %v2318
      %2334 = vmatpush.bf16.msra.mxu0 %v2317
      %2335 = vmatpush.bf16.msra.mxu0 %v2316
      %2336 = vmatpush.bf16.msra.mxu0 %v2315
      %2337 = vmatpush.bf16.msra.mxu0 %v2314
      %2338 = vmatmul.bf16.gmra.mxu0 %v2274
      %v2339 = vpop.f32.mrf.mxu0
      %v2340 = vadd.f32 0.0, %v2339
      %v2341 = vpop.f32.mrf.mxu0
      %v2342 = vadd.f32 0.0, %v2341
      %2343 = vmatmul.bf16.gmra.mxu0 %v2275
      %v2344 = vpop.f32.mrf.mxu0
      %v2345 = vadd.f32 0.0, %v2344
      %v2346 = vpop.f32.mrf.mxu0
      %v2347 = vadd.f32 0.0, %v2346
      %2348 = vmatmul.bf16.gmra.mxu0 %v2276
      %v2349 = vpop.f32.mrf.mxu0
      %v2350 = vadd.f32 0.0, %v2349
      %v2351 = vpop.f32.mrf.mxu0
      %v2352 = vadd.f32 0.0, %v2351
      %2353 = vmatmul.bf16.gmra.mxu0 %v2277
      %v2354 = vpop.f32.mrf.mxu0
      %v2355 = vadd.f32 0.0, %v2354
      %v2356 = vpop.f32.mrf.mxu0
      %v2357 = vadd.f32 0.0, %v2356
      %2358 = vdwg.mxu0
      %v2359 = vadd.f32 %v2185, %v2340
      %v2360 = vadd.f32 %v2186, %v2342
      %v2361 = vadd.f32 %v2187, %v2345
      %v2362 = vadd.f32 %v2188, %v2347
      %v2363 = vadd.f32 %v2189, %v2350
      %v2364 = vadd.f32 %v2190, %v2352
      %v2365 = vadd.f32 %v2191, %v2355
      %v2366 = vadd.f32 %v2192, %v2357
      %v2367 = vpack.c.bf16 %v2359, %v2359
      %v2368 = vpack.c.bf16 %v2360, %v2360
      %v2369 = vpack.c.bf16 %v2361, %v2361
      %v2370 = vpack.c.bf16 %v2362, %v2362
      %v2371 = vpack.c.bf16 %v2363, %v2363
      %v2372 = vpack.c.bf16 %v2364, %v2364
      %v2373 = vpack.c.bf16 %v2365, %v2365
      %v2374 = vpack.c.bf16 %v2366, %v2366
      %2375 = vst [vmem:[%s446] sm:$0xf] %v2367
      %2376 = vst [vmem:[%s446 + $0x4] sm:$0xf] %v2368
      %2377 = vst [vmem:[%s446 + $0x8] sm:$0xf] %v2369
      %2378 = vst [vmem:[%s446 + $0xc] sm:$0xf] %v2370
      %2379 = vst [vmem:[%s446 + $0x10] sm:$0xf] %v2371
      %2380 = vst [vmem:[%s446 + $0x14] sm:$0xf] %v2372
      %2381 = vst [vmem:[%s446 + $0x18] sm:$0xf] %v2373
      %2382 = vst [vmem:[%s446 + $0x1c] sm:$0xf] %v2374
      %v2383 = vadd.f32 %v2359, %v2360
      %v2384 = vadd.f32 %v2383, %v2361
      %v2385 = vadd.f32 %v2384, %v2362
      %v2386 = vadd.f32 %v2385, %v2363
      %v2387 = vadd.f32 %v2386, %v2364
      %v2388 = vadd.f32 %v2387, %v2365
      %v2389 = vadd.f32 %v2388, %v2366
      %v2390 = vrot.slane %v2389, 4
      %v2391 = vadd.f32 %v2389, %v2390
      %v2392 = vrot.slane %v2391, 2
      %v2393 = vadd.f32 %v2391, %v2392
      %v2394 = vrot.slane %v2393, 1
      %v2395 = vadd.f32 %v2393, %v2394
      %2396 = vst [vmem:[%s454] sm:$0x1] %v2395
      %v2397 = vmul.f32 %v2359, %v2359
      %v2398 = vmul.f32 %v2360, %v2360
      %v2399 = vmul.f32 %v2361, %v2361
      %v2400 = vmul.f32 %v2362, %v2362
      %v2401 = vmul.f32 %v2363, %v2363
      %v2402 = vmul.f32 %v2364, %v2364
      %v2403 = vmul.f32 %v2365, %v2365
      %v2404 = vmul.f32 %v2366, %v2366
      %v2405 = vadd.f32 %v2397, %v2398
      %v2406 = vadd.f32 %v2405, %v2399
      %v2407 = vadd.f32 %v2406, %v2400
      %v2408 = vadd.f32 %v2407, %v2401
      %v2409 = vadd.f32 %v2408, %v2402
      %v2410 = vadd.f32 %v2409, %v2403
      %v2411 = vadd.f32 %v2410, %v2404
      %v2412 = vrot.slane %v2411, 4
      %v2413 = vadd.f32 %v2411, %v2412
      %v2414 = vrot.slane %v2413, 2
      %v2415 = vadd.f32 %v2413, %v2414
      %v2416 = vrot.slane %v2415, 1
      %v2417 = vadd.f32 %v2415, %v2416
      %2418 = vst [vmem:[%s454 + $0x1] sm:$0x1] %v2417
      %s2419 = smul.u32 8, %s24
      %p2420 = scmp.lt.s32.totalorder %s23, 1
      %s2421 = scalar_select %p2420, %s23, 1
      %p2422 = scmp.lt.s32.totalorder %s2419, 7
      %s2423 = scalar_select %p2422, %s2419, 7
      %s2424 = smul.addr %s2421, 8
      %s2425 = sadd.s32 %s2423, %s2424
      %s2426 = smul.addr %s2425, 4
      %s2427 = scalar_lea.vmem %s6, %s2426
      %p2428 = scmp.lt.s32.totalorder %s23, 1
      %s2429 = scalar_select %p2428, %s23, 1
      %p2430 = scmp.lt.s32.totalorder %s24, 0
      %s2431 = scalar_select %p2430, %s24, 0
      %s2432 = sadd.s32 %s2431, %s2429
      %s2433 = smul.addr %s2432, 2
      %s2434 = scalar_lea.vmem %s7, %s2433
      // Predicated region
      $region61: #{down_forward.3} parent=43 // pred_check
        %p2435 = pneg %p214
      $region62: #{down_forward.3} parent=43 // pred_check_branch
        %2437 = sbr.rel (%p2435) target = $region64
      $region63: #{down_forward.3} parent=43 // pred_region
        %s2438 = smul.u32 8, %s24
      $region64: #{down_forward.3} parent=43 // pred_fallthru
        _
      // Predicated region
      $region65: #{down_forward.3} parent=43 // pred_check
        %p2439 = pneg %p242
      $region66: #{down_forward.3} parent=43 // pred_check_branch
        %2441 = sbr.rel (%p2439) target = $region68
      $region67: #{down_forward.3} parent=43 // pred_region
        _
      $region68: #{down_forward.3} parent=43 // pred_fallthru
        _
    $region44: #{down_forward.3} parent=5 // pred_fallthru
      _
    %p2442 = scmp.le.s32.totalorder 2, %s14
    // Predicated region
    $region69: #{down_forward.3} parent=5 // pred_check
      %p2443 = pneg %p2442
    $region70: #{down_forward.3} parent=5 // pred_check_branch
      %2445 = sbr.rel (%p2443) target = $region72
    $region71: #{down_forward.3} parent=5 // pred_region
      %s2446 = ssub.s32 %s14, 2
      // Predicated region
      $region73: #{down_forward.3} parent=71 // pred_check
        %p2447 = pneg %p220
      $region74: #{down_forward.3} parent=71 // pred_check_branch
        %2449 = sbr.rel (%p2447) target = $region76
      $region75: #{down_forward.3} parent=71 // pred_region
        %s2450 = smul.u32 8, %s26
        %p2451 = scmp.lt.s32.totalorder %s25, 1
        %s2452 = scalar_select %p2451, %s25, 1
        %p2453 = scmp.lt.s32.totalorder %s2450, 7
        %s2454 = scalar_select %p2453, %s2450, 7
        %s2455 = smul.addr %s2452, 8
        %s2456 = sadd.s32 %s2454, %s2455
        %s2457 = smul.addr %s2456, 4
        %s2458 = scalar_lea.vmem %s6, %s2457
      $region76: #{down_forward.3} parent=71 // pred_fallthru
        _
      // Predicated region
      $region77: #{down_forward.3} parent=71 // pred_check
        %p2459 = pneg %p248
      $region78: #{down_forward.3} parent=71 // pred_check_branch
        %2461 = sbr.rel (%p2459) target = $region80
      $region79: #{down_forward.3} parent=71 // pred_region
        %p2462 = scmp.lt.s32.totalorder %s25, 1
        %s2463 = scalar_select %p2462, %s25, 1
        %p2464 = scmp.lt.s32.totalorder %s26, 0
        %s2465 = scalar_select %p2464, %s26, 0
        %s2466 = sadd.s32 %s2465, %s2463
        %s2467 = smul.addr %s2466, 2
        %s2468 = scalar_lea.vmem %s7, %s2467
      $region80: #{down_forward.3} parent=71 // pred_fallthru
        _
    $region72: #{down_forward.3} parent=5 // pred_fallthru
      _
  $region6: #{down_forward.3} parent=0 // loop_footer
    %s18 = sadd.s32 1, %s14
  $region7: #{down_forward.3} parent=0 // loop_footer_branch
    %13 = sbr.rel target = $region3
  $region8: #{down_forward.3} parent=0 // loop_exit
    _

// kernel: down_forward.4
$region0: #{down_forward.4}
  #allocation0 [shape = 'u32[]', space=smem, size = 0x4, offset = 0x4, fixed_abs, tag = 'smem constant byte address 0x4 - core index']
  #allocation1 [shape = 'u32[72,128]{1,0:T(1,128)}', space=vmem, size = 0x9000, scoped, tag = 'internal scratch']
  #allocation2 [shape = 'bf16[10,10,128]{2,1,0:T(8,128)(2,1)}', space=vmem, size = 0xa000, scoped, tag = 'scratch operand']
  %s0 = inlined_call_operand.vmem [shape: bf16[2,8,8,128], index: 0, kind: input, shape index: {}, may-alias: {0,1,2}]
  %s1 = inlined_call_operand.vmem [shape: bf16[2,8,8,128], index: 1, kind: input, shape index: {}, may-alias: {0,1,2}]
  %s2 = inlined_call_operand.vmem [shape: bf16[2,8,8,128], index: 2, kind: input, shape index: {}, may-alias: {0,1,2}]
  %s3 = inlined_call_operand.vmem [shape: bf16[9,128,128], index: 3, kind: input, shape index: {}]
  %s4 = inlined_call_operand.vmem [shape: f32[1,1,128], index: 4, kind: input, shape index: {}]
  %s5 = inlined_call_operand.vmem [shape: f32[1,1,128], index: 5, kind: input, shape index: {}]
  %s6 = inlined_call_operand.vmem [shape: bf16[2,8,8,128], index: 6, kind: output, shape index: {0}]
  %s7 = inlined_call_operand.vmem [shape: f32[2,1,2,128], index: 7, kind: output, shape index: {1}]
  %8 = xla_tuple %s6, %s7
  %s9 = sld [smem:[#allocation0]]
  $region81: #{down_forward.4} parent=0
    _
  %s11 = ssub.s32 1, %s9
  %s12 = scalar_select 0, %s11, %s9
  loop: start=0, step=1, limit=4
  $region2: #{down_forward.4} parent=0 // loop_pre_header
    _
  $region3: #{down_forward.4} parent=0 // loop_header
    %s14 = sphi 0, %s18
    %p15 = scmp.ge.s32.totalorder %s14, 4
    %s21 = sphi 0, %s33
    %s22 = sphi 0, %s29
    %s23 = sphi 0, %s21
    %s24 = sphi 0, %s22
    %s25 = sphi 0, %s23
    %s26 = sphi 0, %s24
    %s38 = sphi 0, %s40
    %s41 = sphi 0, %s38
    %s42 = sphi 0, %s41
    %s58 = sphi 0, %s42
    %s74 = sphi 0, %s76
    %s77 = sphi 0, %s74
    %s78 = sphi 0, %s77
    %s94 = sphi 0, %s78
    %s110 = sphi 0, %s112
    %s113 = sphi 0, %s110
    %s114 = sphi 0, %s113
    %s130 = sphi 0, %s114
    %s134 = sphi 0, %s134
    %s136 = sphi 0, %s134
    %s137 = sphi 0, %s136
    %s151 = sphi 0, %s137
    %s155 = sphi 0, %s155
    %s157 = sphi 0, %s155
    %s158 = sphi 0, %s157
    %s172 = sphi 0, %s158
    %s176 = sphi 0, %s176
    %s178 = sphi 0, %s176
    %s179 = sphi 0, %s178
    %s193 = sphi 0, %s179
    %s201 = sphi 0, %s203
    %s204 = sphi 0, %s201
    %s205 = sphi 0, %s204
    %s221 = sphi 0, %s205
    %s229 = sphi 0, %s231
    %s232 = sphi 0, %s229
    %s233 = sphi 0, %s232
    %s249 = sphi 0, %s233
  $region4: #{down_forward.4} parent=0 // loop_header_branch
    %17 = sbr.rel (%p15) target = $region8
  $region5: #{down_forward.4} parent=0 // loop_body
    %s19 = ssub.s32 %s14, 1
    %s20 = ssub.s32 %s14, 2
    %s27 = sadd.s32 1, %s22
    %p28 = scmp.ge.s32.totalorder %s27, 1
    %s29 = scalar_select %p28, 0, %s27
    %s30 = sadd.s32 1, %s21
    %s31 = scalar_select %p28, %s30, %s21
    %p32 = scmp.ge.s32.totalorder %s31, 2
    %s33 = scalar_select %p32, 0, %s31
    %s34 = ssub.s32 %s21, %s33
    %s35 = ssub.s32 %s22, %s29
    %s36 = sor.u32 %s34, %s35
    %p37 = scmp.eq.s32.totalorder %s36, 0
    %s39 = sadd.s32 %s38, 1
    %s40 = scalar_select %p37, %s38, %s39
    %p43 = pneg %p37
    %p44 = scmp.eq.s32.totalorder %s14, 1
    %p45 = por %p43, %p44
    %p46 = scmp.ne.s32.totalorder %s38, %s41
    %p47 = scmp.eq.s32.totalorder %s14, 0
    %p48 = por %p46, %p47
    %p49 = scmp.ne.s32.totalorder %s38, %s41
    %p50 = scmp.eq.s32.totalorder %s19, 1
    %p51 = por %p49, %p50
    %p52 = scmp.ne.s32.totalorder %s41, %s42
    %p53 = scmp.eq.s32.totalorder %s19, 0
    %p54 = por %p52, %p53
    %p55 = scmp.ne.s32.totalorder %s41, %s42
    %p56 = scmp.eq.s32.totalorder %s20, 1
    %p57 = por %p55, %p56
    %p59 = scmp.ne.s32.totalorder %s42, %s58
    %p60 = scmp.eq.s32.totalorder %s20, 0
    %p61 = por %p59, %p60
    %s62 = smul.u32 %s22, 8
    %s63 = ssub.s32 %s62, 1
    %p64 = scmp.gt.s32.totalorder %s63, 0
    %s65 = scalar_select %p64, %s63, 0
    %s66 = smul.u32 %s29, 8
    %s67 = ssub.s32 %s66, 1
    %p68 = scmp.gt.s32.totalorder %s67, 0
    %s69 = scalar_select %p68, %s67, 0
    %s70 = ssub.s32 %s21, %s33
    %s71 = ssub.s32 %s65, %s69
    %s72 = sor.u32 %s70, %s71
    %p73 = scmp.eq.s32.totalorder %s72, 0
    %s75 = sadd.s32 %s74, 1
    %s76 = scalar_select %p73, %s74, %s75
    %p79 = pneg %p73
    %p80 = scmp.eq.s32.totalorder %s14, 1
    %p81 = por %p79, %p80
    %p82 = scmp.ne.s32.totalorder %s74, %s77
    %p83 = scmp.eq.s32.totalorder %s14, 0
    %p84 = por %p82, %p83
    %p85 = scmp.ne.s32.totalorder %s74, %s77
    %p86 = scmp.eq.s32.totalorder %s19, 1
    %p87 = por %p85, %p86
    %p88 = scmp.ne.s32.totalorder %s77, %s78
    %p89 = scmp.eq.s32.totalorder %s19, 0
    %p90 = por %p88, %p89
    %p91 = scmp.ne.s32.totalorder %s77, %s78
    %p92 = scmp.eq.s32.totalorder %s20, 1
    %p93 = por %p91, %p92
    %p95 = scmp.ne.s32.totalorder %s78, %s94
    %p96 = scmp.eq.s32.totalorder %s20, 0
    %p97 = por %p95, %p96
    %s98 = sadd.s32 %s22, 1
    %s99 = smul.u32 %s98, 8
    %p100 = scmp.lt.s32.totalorder %s99, 7
    %s101 = scalar_select %p100, %s99, 7
    %s102 = sadd.s32 %s29, 1
    %s103 = smul.u32 %s102, 8
    %p104 = scmp.lt.s32.totalorder %s103, 7
    %s105 = scalar_select %p104, %s103, 7
    %s106 = ssub.s32 %s21, %s33
    %s107 = ssub.s32 %s101, %s105
    %s108 = sor.u32 %s106, %s107
    %p109 = scmp.eq.s32.totalorder %s108, 0
    %s111 = sadd.s32 %s110, 1
    %s112 = scalar_select %p109, %s110, %s111
    %p115 = pneg %p109
    %p116 = scmp.eq.s32.totalorder %s14, 1
    %p117 = por %p115, %p116
    %p118 = scmp.ne.s32.totalorder %s110, %s113
    %p119 = scmp.eq.s32.totalorder %s14, 0
    %p120 = por %p118, %p119
    %p121 = scmp.ne.s32.totalorder %s110, %s113
    %p122 = scmp.eq.s32.totalorder %s19, 1
    %p123 = por %p121, %p122
    %p124 = scmp.ne.s32.totalorder %s113, %s114
    %p125 = scmp.eq.s32.totalorder %s19, 0
    %p126 = por %p124, %p125
    %p127 = scmp.ne.s32.totalorder %s113, %s114
    %p128 = scmp.eq.s32.totalorder %s20, 1
    %p129 = por %p127, %p128
    %p131 = scmp.ne.s32.totalorder %s114, %s130
    %p132 = scmp.eq.s32.totalorder %s20, 0
    %p133 = por %p131, %p132
    %s135 = sadd.s32 %s134, 1
    %p138 = scmp.eq.s32.totalorder %s14, 1
    %p139 = scmp.ne.s32.totalorder %s134, %s136
    %p140 = scmp.eq.s32.totalorder %s14, 0
    %p141 = por %p139, %p140
    %p142 = scmp.ne.s32.totalorder %s134, %s136
    %p143 = scmp.eq.s32.totalorder %s19, 1
    %p144 = por %p142, %p143
    %p145 = scmp.ne.s32.totalorder %s136, %s137
    %p146 = scmp.eq.s32.totalorder %s19, 0
    %p147 = por %p145, %p146
    %p148 = scmp.ne.s32.totalorder %s136, %s137
    %p149 = scmp.eq.s32.totalorder %s20, 1
    %p150 = por %p148, %p149
    %p152 = scmp.ne.s32.totalorder %s137, %s151
    %p153 = scmp.eq.s32.totalorder %s20, 0
    %p154 = por %p152, %p153
    %s156 = sadd.s32 %s155, 1
    %p159 = scmp.eq.s32.totalorder %s14, 1
    %p160 = scmp.ne.s32.totalorder %s155, %s157
    %p161 = scmp.eq.s32.totalorder %s14, 0
    %p162 = por %p160, %p161
    %p163 = scmp.ne.s32.totalorder %s155, %s157
    %p164 = scmp.eq.s32.totalorder %s19, 1
    %p165 = por %p163, %p164
    %p166 = scmp.ne.s32.totalorder %s157, %s158
    %p167 = scmp.eq.s32.totalorder %s19, 0
    %p168 = por %p166, %p167
    %p169 = scmp.ne.s32.totalorder %s157, %s158
    %p170 = scmp.eq.s32.totalorder %s20, 1
    %p171 = por %p169, %p170
    %p173 = scmp.ne.s32.totalorder %s158, %s172
    %p174 = scmp.eq.s32.totalorder %s20, 0
    %p175 = por %p173, %p174
    %s177 = sadd.s32 %s176, 1
    %p180 = scmp.eq.s32.totalorder %s14, 1
    %p181 = scmp.ne.s32.totalorder %s176, %s178
    %p182 = scmp.eq.s32.totalorder %s14, 0
    %p183 = por %p181, %p182
    %p184 = scmp.ne.s32.totalorder %s176, %s178
    %p185 = scmp.eq.s32.totalorder %s19, 1
    %p186 = por %p184, %p185
    %p187 = scmp.ne.s32.totalorder %s178, %s179
    %p188 = scmp.eq.s32.totalorder %s19, 0
    %p189 = por %p187, %p188
    %p190 = scmp.ne.s32.totalorder %s178, %s179
    %p191 = scmp.eq.s32.totalorder %s20, 1
    %p192 = por %p190, %p191
    %p194 = scmp.ne.s32.totalorder %s179, %s193
    %p195 = scmp.eq.s32.totalorder %s20, 0
    %p196 = por %p194, %p195
    %s197 = ssub.s32 %s21, %s33
    %s198 = ssub.s32 %s22, %s29
    %s199 = sor.u32 %s197, %s198
    %p200 = scmp.eq.s32.totalorder %s199, 0
    %s202 = sadd.s32 %s201, 1
    %s203 = scalar_select %p200, %s201, %s202
    %p206 = pneg %p200
    %p207 = scmp.eq.s32.totalorder %s14, 1
    %p208 = por %p206, %p207
    %p209 = scmp.ne.s32.totalorder %s201, %s204
    %p210 = scmp.eq.s32.totalorder %s14, 0
    %p211 = por %p209, %p210
    %p212 = scmp.ne.s32.totalorder %s201, %s204
    %p213 = scmp.eq.s32.totalorder %s19, 1
    %p214 = por %p212, %p213
    %p215 = scmp.ne.s32.totalorder %s204, %s205
    %p216 = scmp.eq.s32.totalorder %s19, 0
    %p217 = por %p215, %p216
    %p218 = scmp.ne.s32.totalorder %s204, %s205
    %p219 = scmp.eq.s32.totalorder %s20, 1
    %p220 = por %p218, %p219
    %p222 = scmp.ne.s32.totalorder %s205, %s221
    %p223 = scmp.eq.s32.totalorder %s20, 0
    %p224 = por %p222, %p223
    %s225 = ssub.s32 %s21, %s33
    %s226 = ssub.s32 %s22, %s29
    %s227 = sor.u32 %s225, %s226
    %p228 = scmp.eq.s32.totalorder %s227, 0
    %s230 = sadd.s32 %s229, 1
    %s231 = scalar_select %p228, %s229, %s230
    %p234 = pneg %p228
    %p235 = scmp.eq.s32.totalorder %s14, 1
    %p236 = por %p234, %p235
    %p237 = scmp.ne.s32.totalorder %s229, %s232
    %p238 = scmp.eq.s32.totalorder %s14, 0
    %p239 = por %p237, %p238
    %p240 = scmp.ne.s32.totalorder %s229, %s232
    %p241 = scmp.eq.s32.totalorder %s19, 1
    %p242 = por %p240, %p241
    %p243 = scmp.ne.s32.totalorder %s232, %s233
    %p244 = scmp.eq.s32.totalorder %s19, 0
    %p245 = por %p243, %p244
    %p246 = scmp.ne.s32.totalorder %s232, %s233
    %p247 = scmp.eq.s32.totalorder %s20, 1
    %p248 = por %p246, %p247
    %p250 = scmp.ne.s32.totalorder %s233, %s249
    %p251 = scmp.eq.s32.totalorder %s20, 0
    %p252 = por %p250, %p251
    %p253 = scmp.le.s32.totalorder 1, %s14
    %p254 = scmp.lt.s32.totalorder %s14, 3
    %p255 = pnand %p253, %p254
    %p256 = pneg %p255
    // Predicated region
    $region9: #{down_forward.4} parent=5 // pred_check
      _
    $region10: #{down_forward.4} parent=5 // pred_check_branch
      %258 = sbr.rel (%p255) target = $region12
    $region11: #{down_forward.4} parent=5 // pred_region
      %s259 = ssub.s32 %s14, 1
      // Predicated region
      $region13: #{down_forward.4} parent=11 // pred_check
        %p260 = pneg %p147
      $region14: #{down_forward.4} parent=11 // pred_check_branch
        %262 = sbr.rel (%p260) target = $region16
      $region15: #{down_forward.4} parent=11 // pred_region
        _
      $region16: #{down_forward.4} parent=11 // pred_fallthru
        _
      // Predicated region
      $region17: #{down_forward.4} parent=11 // pred_check
        %p263 = pneg %p168
      $region18: #{down_forward.4} parent=11 // pred_check_branch
        %265 = sbr.rel (%p263) target = $region20
      $region19: #{down_forward.4} parent=11 // pred_region
        _
      $region20: #{down_forward.4} parent=11 // pred_fallthru
        _
      // Predicated region
      $region21: #{down_forward.4} parent=11 // pred_check
        %p266 = pneg %p189
      $region22: #{down_forward.4} parent=11 // pred_check_branch
        %268 = sbr.rel (%p266) target = $region24
      $region23: #{down_forward.4} parent=11 // pred_region
        _
      $region24: #{down_forward.4} parent=11 // pred_fallthru
        _
    $region12: #{down_forward.4} parent=5 // pred_fallthru
      _
    %p269 = scmp.lt.s32.totalorder %s14, 2
    // Predicated region
    $region25: #{down_forward.4} parent=5 // pred_check
      %p270 = pneg %p269
    $region26: #{down_forward.4} parent=5 // pred_check_branch
      %272 = sbr.rel (%p270) target = $region28
    $region27: #{down_forward.4} parent=5 // pred_region
      // Predicated region
      $region29: #{down_forward.4} parent=27 // pred_check
        %p273 = pneg %p48
      $region30: #{down_forward.4} parent=27 // pred_check_branch
        %275 = sbr.rel (%p273) target = $region32
      $region31: #{down_forward.4} parent=27 // pred_region
        %s276 = smul.u32 8, %s22
        %p277 = scmp.lt.s32.totalorder %s21, 1
        %s278 = scalar_select %p277, %s21, 1
        %p279 = scmp.lt.s32.totalorder %s276, 7
        %s280 = scalar_select %p279, %s276, 7
        %s281 = smul.addr %s278, 8
        %s282 = sadd.s32 %s280, %s281
        %s283 = smul.addr %s282, 4
        %s284 = scalar_lea.vmem %s0, %s283
        %s285 = smul.u32 8, %s22
      $region32: #{down_forward.4} parent=27 // pred_fallthru
        _
      // Predicated region
      $region33: #{down_forward.4} parent=27 // pred_check
        %p286 = pneg %p84
      $region34: #{down_forward.4} parent=27 // pred_check_branch
        %288 = sbr.rel (%p286) target = $region36
      $region35: #{down_forward.4} parent=27 // pred_region
        %s289 = smul.u32 %s22, 8
        %s290 = ssub.s32 %s289, 1
        %p291 = scmp.gt.s32.totalorder %s290, 0
        %s292 = scalar_select %p291, %s290, 0
        %p293 = scmp.lt.s32.totalorder %s21, 1
        %s294 = scalar_select %p293, %s21, 1
        %p295 = scmp.lt.s32.totalorder %s292, 7
        %s296 = scalar_select %p295, %s292, 7
        %s297 = smul.addr %s294, 8
        %s298 = sadd.s32 %s296, %s297
        %s299 = smul.addr %s298, 4
        %s300 = scalar_lea.vmem %s1, %s299
        %s301 = smul.u32 %s22, 8
        %s302 = ssub.s32 %s301, 1
        %p303 = scmp.gt.s32.totalorder %s302, 0
        %s304 = scalar_select %p303, %s302, 0
      $region36: #{down_forward.4} parent=27 // pred_fallthru
        _
      // Predicated region
      $region37: #{down_forward.4} parent=27 // pred_check
        %p305 = pneg %p120
      $region38: #{down_forward.4} parent=27 // pred_check_branch
        %307 = sbr.rel (%p305) target = $region40
      $region39: #{down_forward.4} parent=27 // pred_region
        %s308 = sadd.s32 %s22, 1
        %s309 = smul.u32 %s308, 8
        %p310 = scmp.lt.s32.totalorder %s309, 7
        %s311 = scalar_select %p310, %s309, 7
        %p312 = scmp.lt.s32.totalorder %s21, 1
        %s313 = scalar_select %p312, %s21, 1
        %p314 = scmp.lt.s32.totalorder %s311, 7
        %s315 = scalar_select %p314, %s311, 7
        %s316 = smul.addr %s313, 8
        %s317 = sadd.s32 %s315, %s316
        %s318 = smul.addr %s317, 4
        %s319 = scalar_lea.vmem %s2, %s318
        %s320 = sadd.s32 %s22, 1
        %s321 = smul.u32 %s320, 8
        %p322 = scmp.lt.s32.totalorder %s321, 7
        %s323 = scalar_select %p322, %s321, 7
      $region40: #{down_forward.4} parent=27 // pred_fallthru
        _
    $region28: #{down_forward.4} parent=5 // pred_fallthru
      _
    %p324 = scmp.le.s32.totalorder 1, %s14
    %p325 = scmp.lt.s32.totalorder %s14, 3
    %p326 = pnand %p324, %p325
    %p327 = pneg %p326
    // Predicated region
    $region41: #{down_forward.4} parent=5 // pred_check
      _
    $region42: #{down_forward.4} parent=5 // pred_check_branch
      %329 = sbr.rel (%p326) target = $region44
    $region43: #{down_forward.4} parent=5 // pred_region
      %s330 = ssub.s32 %s14, 1
      %s331 = smul.u32 8, %s24
      %p332 = scmp.lt.s32.totalorder %s23, 1
      %s333 = scalar_select %p332, %s23, 1
      %p334 = scmp.lt.s32.totalorder %s331, 7
      %s335 = scalar_select %p334, %s331, 7
      %s336 = smul.addr %s333, 8
      %s337 = sadd.s32 %s335, %s336
      %s338 = smul.addr %s337, 4
      %s339 = scalar_lea.vmem %s0, %s338
      %p340 = pneg %p54
      %p341 = pneg %p51
      %s342 = smul.u32 %s24, 8
      %s343 = ssub.s32 %s342, 1
      %p344 = scmp.gt.s32.totalorder %s343, 0
      %s345 = scalar_select %p344, %s343, 0
      %p346 = scmp.lt.s32.totalorder %s23, 1
      %s347 = scalar_select %p346, %s23, 1
      %p348 = scmp.lt.s32.totalorder %s345, 7
      %s349 = scalar_select %p348, %s345, 7
      %s350 = smul.addr %s347, 8
      %s351 = sadd.s32 %s349, %s350
      %s352 = smul.addr %s351, 4
      %s353 = scalar_lea.vmem %s1, %s352
      %p354 = pneg %p90
      %p355 = pneg %p87
      %s356 = sadd.s32 %s24, 1
      %s357 = smul.u32 %s356, 8
      %p358 = scmp.lt.s32.totalorder %s357, 7
      %s359 = scalar_select %p358, %s357, 7
      %p360 = scmp.lt.s32.totalorder %s23, 1
      %s361 = scalar_select %p360, %s23, 1
      %p362 = scmp.lt.s32.totalorder %s359, 7
      %s363 = scalar_select %p362, %s359, 7
      %s364 = smul.addr %s361, 8
      %s365 = sadd.s32 %s363, %s364
      %s366 = smul.addr %s365, 4
      %s367 = scalar_lea.vmem %s2, %s366
      %p368 = pneg %p126
      %p369 = pneg %p123
      %p370 = pneg %p147
      %p371 = pneg %p144
      %p372 = pneg %p168
      %p373 = pneg %p165
      %p374 = pneg %p189
      %p375 = pneg %p186
      %p376 = pneg %p217
      %p377 = pneg %p214
      %s378 = smul.u32 8, %s24
      %p379 = scmp.lt.s32.totalorder %s23, 1
      %s380 = scalar_select %p379, %s23, 1
      %p381 = scmp.lt.s32.totalorder %s378, 7
      %s382 = scalar_select %p381, %s378, 7
      %s383 = smul.addr %s380, 8
      %s384 = sadd.s32 %s382, %s383
      %s385 = smul.addr %s384, 4
      %s386 = scalar_lea.vmem %s6, %s385
      %p387 = pneg %p245
      %p388 = pneg %p242
      %p389 = scmp.lt.s32.totalorder %s23, 1
      %s390 = scalar_select %p389, %s23, 1
      %p391 = scmp.lt.s32.totalorder %s24, 0
      %s392 = scalar_select %p391, %s24, 0
      %s393 = sadd.s32 %s392, %s390
      %s394 = smul.addr %s393, 2
      %s395 = scalar_lea.vmem %s7, %s394
      %s396 = smul.u32 8, %s24
      %p397 = scmp.lt.s32.totalorder %s23, 1
      %s398 = scalar_select %p397, %s23, 1
      %p399 = scmp.lt.s32.totalorder %s396, 7
      %s400 = scalar_select %p399, %s396, 7
      %s401 = smul.addr %s398, 8
      %s402 = sadd.s32 %s400, %s401
      %s403 = smul.addr %s402, 4
      %s404 = scalar_lea.vmem %s0, %s403
      %s405 = smul.u32 8, %s24
      %s406 = smul.u32 %s24, 8
      %s407 = ssub.s32 %s406, 1
      %p408 = scmp.gt.s32.totalorder %s407, 0
      %s409 = scalar_select %p408, %s407, 0
      %p410 = scmp.lt.s32.totalorder %s23, 1
      %s411 = scalar_select %p410, %s23, 1
      %p412 = scmp.lt.s32.totalorder %s409, 7
      %s413 = scalar_select %p412, %s409, 7
      %s414 = smul.addr %s411, 8
      %s415 = sadd.s32 %s413, %s414
      %s416 = smul.addr %s415, 4
      %s417 = scalar_lea.vmem %s1, %s416
      %s418 = smul.u32 %s24, 8
      %s419 = ssub.s32 %s418, 1
      %p420 = scmp.gt.s32.totalorder %s419, 0
      %s421 = scalar_select %p420, %s419, 0
      %s422 = sadd.s32 %s24, 1
      %s423 = smul.u32 %s422, 8
      %p424 = scmp.lt.s32.totalorder %s423, 7
      %s425 = scalar_select %p424, %s423, 7
      %p426 = scmp.lt.s32.totalorder %s23, 1
      %s427 = scalar_select %p426, %s23, 1
      %p428 = scmp.lt.s32.totalorder %s425, 7
      %s429 = scalar_select %p428, %s425, 7
      %s430 = smul.addr %s427, 8
      %s431 = sadd.s32 %s429, %s430
      %s432 = smul.addr %s431, 4
      %s433 = scalar_lea.vmem %s2, %s432
      %s434 = sadd.s32 %s24, 1
      %s435 = smul.u32 %s434, 8
      %p436 = scmp.lt.s32.totalorder %s435, 7
      %s437 = scalar_select %p436, %s435, 7
      %s438 = smul.u32 8, %s24
      %p439 = scmp.lt.s32.totalorder %s23, 1
      %s440 = scalar_select %p439, %s23, 1
      %p441 = scmp.lt.s32.totalorder %s438, 7
      %s442 = scalar_select %p441, %s438, 7
      %s443 = smul.addr %s440, 8
      %s444 = sadd.s32 %s442, %s443
      %s445 = smul.addr %s444, 4
      %s446 = scalar_lea.vmem %s6, %s445
      %s447 = smul.u32 8, %s24
      %p448 = scmp.lt.s32.totalorder %s23, 1
      %s449 = scalar_select %p448, %s23, 1
      %p450 = scmp.lt.s32.totalorder %s24, 0
      %s451 = scalar_select %p450, %s24, 0
      %s452 = sadd.s32 %s451, %s449
      %s453 = smul.addr %s452, 2
      %s454 = scalar_lea.vmem %s7, %s453
      %vm456 = vcmask 1040384
      %vm457 = vsmask.f32 256
      %vm458 = vmand %vm456, %vm457
      %v459 = vld [vmem:[#allocation2] sm:$0x1]
      %v460 = vsel %vm458, 0, %v459
      %461 = vst [vmem:[#allocation2] sm:$0x1] %v460
      %v462 = vld [vmem:[#allocation2 + $0x8] sm:$0x1]
      %v463 = vsel %vm458, 0, %v462
      %464 = vst [vmem:[#allocation2 + $0x8] sm:$0x1] %v463
      %v465 = vld [vmem:[#allocation2 + $0x10] sm:$0x1]
      %v466 = vsel %vm458, 0, %v465
      %467 = vst [vmem:[#allocation2 + $0x10] sm:$0x1] %v466
      %v468 = vld [vmem:[#allocation2 + $0x18] sm:$0x1]
      %v469 = vsel %vm458, 0, %v468
      %470 = vst [vmem:[#allocation2 + $0x18] sm:$0x1] %v469
      %v471 = vld [vmem:[#allocation2 + $0x20] sm:$0x1]
      %v472 = vsel %vm458, 0, %v471
      %473 = vst [vmem:[#allocation2 + $0x20] sm:$0x1] %v472
      %v474 = vld [vmem:[#allocation2 + $0x28] sm:$0x1]
      %v475 = vsel %vm458, 0, %v474
      %476 = vst [vmem:[#allocation2 + $0x28] sm:$0x1] %v475
      %v477 = vld [vmem:[#allocation2 + $0x30] sm:$0x1]
      %v478 = vsel %vm458, 0, %v477
      %479 = vst [vmem:[#allocation2 + $0x30] sm:$0x1] %v478
      %v480 = vld [vmem:[#allocation2 + $0x38] sm:$0x1]
      %v481 = vsel %vm458, 0, %v480
      %482 = vst [vmem:[#allocation2 + $0x38] sm:$0x1] %v481
      %v483 = vld [vmem:[#allocation2 + $0x40] sm:$0x1]
      %v484 = vsel %vm458, 0, %v483
      %485 = vst [vmem:[#allocation2 + $0x40] sm:$0x1] %v484
      %v486 = vld [vmem:[#allocation2 + $0x48] sm:$0x1]
      %v487 = vsel %vm458, 0, %v486
      %488 = vst [vmem:[#allocation2 + $0x48] sm:$0x1] %v487
      %vm489 = vsmask.f32 7938
      %vm490 = vmand %vm456, %vm489
      %v491 = vld [vmem:[#allocation2 + $0x4] sm:$0x1]
      %v492 = vsel %vm490, 0, %v491
      %493 = vst [vmem:[#allocation2 + $0x4] sm:$0x1] %v492
      %v494 = vld [vmem:[#allocation2 + $0xc] sm:$0x1]
      %v495 = vsel %vm490, 0, %v494
      %496 = vst [vmem:[#allocation2 + $0xc] sm:$0x1] %v495
      %v497 = vld [vmem:[#allocation2 + $0x14] sm:$0x1]
      %v498 = vsel %vm490, 0, %v497
      %499 = vst [vmem:[#allocation2 + $0x14] sm:$0x1] %v498
      %v500 = vld [vmem:[#allocation2 + $0x1c] sm:$0x1]
      %v501 = vsel %vm490, 0, %v500
      %502 = vst [vmem:[#allocation2 + $0x1c] sm:$0x1] %v501
      %v503 = vld [vmem:[#allocation2 + $0x24] sm:$0x1]
      %v504 = vsel %vm490, 0, %v503
      %505 = vst [vmem:[#allocation2 + $0x24] sm:$0x1] %v504
      %v506 = vld [vmem:[#allocation2 + $0x2c] sm:$0x1]
      %v507 = vsel %vm490, 0, %v506
      %508 = vst [vmem:[#allocation2 + $0x2c] sm:$0x1] %v507
      %v509 = vld [vmem:[#allocation2 + $0x34] sm:$0x1]
      %v510 = vsel %vm490, 0, %v509
      %511 = vst [vmem:[#allocation2 + $0x34] sm:$0x1] %v510
      %v512 = vld [vmem:[#allocation2 + $0x3c] sm:$0x1]
      %v513 = vsel %vm490, 0, %v512
      %514 = vst [vmem:[#allocation2 + $0x3c] sm:$0x1] %v513
      %v515 = vld [vmem:[#allocation2 + $0x44] sm:$0x1]
      %v516 = vsel %vm490, 0, %v515
      %517 = vst [vmem:[#allocation2 + $0x44] sm:$0x1] %v516
      %v518 = vld [vmem:[#allocation2 + $0x4c] sm:$0x1]
      %v519 = vsel %vm490, 0, %v518
      %520 = vst [vmem:[#allocation2 + $0x4c] sm:$0x1] %v519
      %v521 = vld [vmem:[%s404] sm:$0xf]
      %v522 = vld [vmem:[%s404 + $0x4] sm:$0xf]
      %v523 = vld [vmem:[%s404 + $0x8] sm:$0xf]
      %v524 = vld [vmem:[%s404 + $0xc] sm:$0xf]
      %v525 = vld [vmem:[%s404 + $0x10] sm:$0xf]
      %v526 = vld [vmem:[%s404 + $0x14] sm:$0xf]
      %v527 = vld [vmem:[%s404 + $0x18] sm:$0xf]
      %v528 = vld [vmem:[%s404 + $0x1c] sm:$0xf]
      %v529 = vunpack.c.l.bf16 %v521
      %v530 = vunpack.c.l.bf16 %v522
      %v531 = vunpack.c.l.bf16 %v523
      %v532 = vunpack.c.l.bf16 %v524
      %v533 = vunpack.c.l.bf16 %v525
      %v534 = vunpack.c.l.bf16 %v526
      %v535 = vunpack.c.l.bf16 %v527
      %v536 = vunpack.c.l.bf16 %v528
      %v537 = vld [vmem:[%s4] sm:$0x1]
      %v539 = vperm.slane %v537, 0
      %v541 = vmul.f32 %v529, %v539
      %v542 = vmul.f32 %v530, %v539
      %v543 = vmul.f32 %v531, %v539
      %v544 = vmul.f32 %v532, %v539
      %v545 = vmul.f32 %v533, %v539
      %v546 = vmul.f32 %v534, %v539
      %v547 = vmul.f32 %v535, %v539
      %v548 = vmul.f32 %v536, %v539
      %v549 = vld [vmem:[%s5] sm:$0x1]
      %v551 = vperm.slane %v549, 0
      %v553 = vadd.f32 %v541, %v551
      %v554 = vadd.f32 %v542, %v551
      %v555 = vadd.f32 %v543, %v551
      %v556 = vadd.f32 %v544, %v551
      %v557 = vadd.f32 %v545, %v551
      %v558 = vadd.f32 %v546, %v551
      %v559 = vadd.f32 %v547, %v551
      %v560 = vadd.f32 %v548, %v551
      %v561 = vmax.f32 %v553, 0.0
      %v562 = vmax.f32 %v554, 0.0
      %v563 = vmax.f32 %v555, 0.0
      %v564 = vmax.f32 %v556, 0.0
      %v565 = vmax.f32 %v557, 0.0
      %v566 = vmax.f32 %v558, 0.0
      %v567 = vmax.f32 %v559, 0.0
      %v568 = vmax.f32 %v560, 0.0
      %v569 = vpack.c.bf16 %v561, %v561
      %v570 = vpack.c.bf16 %v562, %v562
      %v571 = vpack.c.bf16 %v563, %v563
      %v572 = vpack.c.bf16 %v564, %v564
      %v573 = vpack.c.bf16 %v565, %v565
      %v574 = vpack.c.bf16 %v566, %v566
      %v575 = vpack.c.bf16 %v567, %v567
      %v576 = vpack.c.bf16 %v568, %v568
      %v578 = vshrl.u32 %v569, 16
      %v580 = vrot.slane %v578, 7
      %v581 = vshll.u32 %v569, 16
      %v583 = vor.u32 %v580, %v581
      %v584 = vrot.slane %v580, 4
      %v586 = vshrl.u32 %v570, 16
      %v588 = vrot.slane %v586, 7
      %v589 = vshll.u32 %v570, 16
      %v591 = vor.u32 %v588, %v589
      %v592 = vrot.slane %v588, 4
      %v594 = vshrl.u32 %v571, 16
      %v596 = vrot.slane %v594, 7
      %v597 = vshll.u32 %v571, 16
      %v599 = vor.u32 %v596, %v597
      %v600 = vrot.slane %v596, 4
      %v602 = vshrl.u32 %v572, 16
      %v604 = vrot.slane %v602, 7
      %v605 = vshll.u32 %v572, 16
      %v607 = vor.u32 %v604, %v605
      %v608 = vrot.slane %v604, 4
      %v610 = vshrl.u32 %v573, 16
      %v612 = vrot.slane %v610, 7
      %v613 = vshll.u32 %v573, 16
      %v615 = vor.u32 %v612, %v613
      %v616 = vrot.slane %v612, 4
      %v618 = vshrl.u32 %v574, 16
      %v620 = vrot.slane %v618, 7
      %v621 = vshll.u32 %v574, 16
      %v623 = vor.u32 %v620, %v621
      %v624 = vrot.slane %v620, 4
      %v626 = vshrl.u32 %v575, 16
      %v628 = vrot.slane %v626, 7
      %v629 = vshll.u32 %v575, 16
      %v631 = vor.u32 %v628, %v629
      %v632 = vrot.slane %v628, 4
      %v634 = vshrl.u32 %v576, 16
      %v636 = vrot.slane %v634, 7
      %v637 = vshll.u32 %v576, 16
      %v639 = vor.u32 %v636, %v637
      %v640 = vrot.slane %v636, 4
      %s657 = scalar_lea.vmem [#allocation2], 8
      %vm658 = vcmask 1043456
      %vm659 = vmand %vm658, %vm489
      %v660 = vld [vmem:[%s657] sm:$0xf]
      %v661 = vsel %vm659, %v583, %v660
      %662 = vst [vmem:[%s657] sm:$0xf] %v661
      %v663 = vld [vmem:[%s657 + $0x4] sm:$0x1]
      %v664 = vsel %vm458, %v584, %v663
      %665 = vst [vmem:[%s657 + $0x4] sm:$0x1] %v664
      %v666 = vld [vmem:[%s657 + $0x8] sm:$0xf]
      %v667 = vsel %vm659, %v591, %v666
      %668 = vst [vmem:[%s657 + $0x8] sm:$0xf] %v667
      %v669 = vld [vmem:[%s657 + $0xc] sm:$0x1]
      %v670 = vsel %vm458, %v592, %v669
      %671 = vst [vmem:[%s657 + $0xc] sm:$0x1] %v670
      %v672 = vld [vmem:[%s657 + $0x10] sm:$0xf]
      %v673 = vsel %vm659, %v599, %v672
      %674 = vst [vmem:[%s657 + $0x10] sm:$0xf] %v673
      %v675 = vld [vmem:[%s657 + $0x14] sm:$0x1]
      %v676 = vsel %vm458, %v600, %v675
      %677 = vst [vmem:[%s657 + $0x14] sm:$0x1] %v676
      %v678 = vld [vmem:[%s657 + $0x18] sm:$0xf]
      %v679 = vsel %vm659, %v607, %v678
      %680 = vst [vmem:[%s657 + $0x18] sm:$0xf] %v679
      %v681 = vld [vmem:[%s657 + $0x1c] sm:$0x1]
      %v682 = vsel %vm458, %v608, %v681
      %683 = vst [vmem:[%s657 + $0x1c] sm:$0x1] %v682
      %v684 = vld [vmem:[%s657 + $0x20] sm:$0xf]
      %v685 = vsel %vm659, %v615, %v684
      %686 = vst [vmem:[%s657 + $0x20] sm:$0xf] %v685
      %v687 = vld [vmem:[%s657 + $0x24] sm:$0x1]
      %v688 = vsel %vm458, %v616, %v687
      %689 = vst [vmem:[%s657 + $0x24] sm:$0x1] %v688
      %v690 = vld [vmem:[%s657 + $0x28] sm:$0xf]
      %v691 = vsel %vm659, %v623, %v690
      %692 = vst [vmem:[%s657 + $0x28] sm:$0xf] %v691
      %v693 = vld [vmem:[%s657 + $0x2c] sm:$0x1]
      %v694 = vsel %vm458, %v624, %v693
      %695 = vst [vmem:[%s657 + $0x2c] sm:$0x1] %v694
      %v696 = vld [vmem:[%s657 + $0x30] sm:$0xf]
      %v697 = vsel %vm659, %v631, %v696
      %698 = vst [vmem:[%s657 + $0x30] sm:$0xf] %v697
      %v699 = vld [vmem:[%s657 + $0x34] sm:$0x1]
      %v700 = vsel %vm458, %v632, %v699
      %701 = vst [vmem:[%s657 + $0x34] sm:$0x1] %v700
      %v702 = vld [vmem:[%s657 + $0x38] sm:$0xf]
      %v703 = vsel %vm659, %v639, %v702
      %704 = vst [vmem:[%s657 + $0x38] sm:$0xf] %v703
      %v705 = vld [vmem:[%s657 + $0x3c] sm:$0x1]
      %v706 = vsel %vm458, %v640, %v705
      %707 = vst [vmem:[%s657 + $0x3c] sm:$0x1] %v706
      %p708 = scmp.gt.s32.totalorder %s24, 0
      // Predicated region
      $region45: #{down_forward.4} parent=43 // pred_check
        %p709 = pneg %p708
      $region46: #{down_forward.4} parent=43 // pred_check_branch
        %711 = sbr.rel (%p709) target = $region48
      $region47: #{down_forward.4} parent=43 // pred_region
        %v712 = vld [vmem:[%s417] sm:$0xf]
        %v713 = vunpack.c.l.bf16 %v712
        %v714 = vld [vmem:[%s4] sm:$0x1]
        %v716 = vperm.slane %v714, 0
        %v718 = vmul.f32 %v713, %v716
        %v719 = vld [vmem:[%s5] sm:$0x1]
        %v721 = vperm.slane %v719, 0
        %v723 = vadd.f32 %v718, %v721
        %v724 = vmax.f32 %v723, 0.0
        %v725 = vpack.c.bf16 %v724, %v724
        %v727 = vshrl.u32 %v725, 16
        %v729 = vrot.slane %v727, 7
        %v730 = vshll.u32 %v725, 16
        %v732 = vor.u32 %v729, %v730
        %v733 = vrot.slane %v729, 4
        %v736 = vld [vmem:[#allocation2] sm:$0xf]
        %v737 = vsel %vm659, %v732, %v736
        %738 = vst [vmem:[#allocation2] sm:$0xf] %v737
        %v739 = vld [vmem:[#allocation2 + $0x4] sm:$0x1]
        %v740 = vsel %vm458, %v733, %v739
        %741 = vst [vmem:[#allocation2 + $0x4] sm:$0x1] %v740
      $region48: #{down_forward.4} parent=43 // pred_fallthru
        _
      %p742 = scmp.eq.s32.totalorder %s24, 0
      // Predicated region
      $region49: #{down_forward.4} parent=43 // pred_check
        %p743 = pneg %p742
      $region50: #{down_forward.4} parent=43 // pred_check_branch
        %745 = sbr.rel (%p743) target = $region52
      $region51: #{down_forward.4} parent=43 // pred_region
        %v746 = vld [vmem:[#allocation2] sm:$0xf]
        %v747 = vsel %vm659, 0, %v746
        %748 = vst [vmem:[#allocation2] sm:$0xf] %v747
        %v749 = vld [vmem:[#allocation2 + $0x4] sm:$0x1]
        %v750 = vsel %vm458, 0, %v749
        %751 = vst [vmem:[#allocation2 + $0x4] sm:$0x1] %v750
      $region52: #{down_forward.4} parent=43 // pred_fallthru
        _
      %p752 = scmp.lt.s32.totalorder %s24, 0
      // Predicated region
      $region53: #{down_forward.4} parent=43 // pred_check
        %p753 = pneg %p752
      $region54: #{down_forward.4} parent=43 // pred_check_branch
        %755 = sbr.rel (%p753) target = $region56
      $region55: #{down_forward.4} parent=43 // pred_region
        %v756 = vld [vmem:[%s433] sm:$0xf]
        %v757 = vunpack.c.l.bf16 %v756
        %v758 = vld [vmem:[%s4] sm:$0x1]
        %v760 = vperm.slane %v758, 0
        %v762 = vmul.f32 %v757, %v760
        %v763 = vld [vmem:[%s5] sm:$0x1]
        %v765 = vperm.slane %v763, 0
        %v767 = vadd.f32 %v762, %v765
        %v768 = vmax.f32 %v767, 0.0
        %v769 = vpack.c.bf16 %v768, %v768
        %v771 = vshrl.u32 %v769, 16
        %v773 = vrot.slane %v771, 7
        %v774 = vshll.u32 %v769, 16
        %v776 = vor.u32 %v773, %v774
        %v777 = vrot.slane %v773, 4
        %s780 = scalar_lea.vmem [#allocation2], 72
        %v781 = vld [vmem:[%s780] sm:$0xf]
        %v782 = vsel %vm659, %v776, %v781
        %783 = vst [vmem:[%s780] sm:$0xf] %v782
        %v784 = vld [vmem:[%s780 + $0x4] sm:$0x1]
        %v785 = vsel %vm458, %v777, %v784
        %786 = vst [vmem:[%s780 + $0x4] sm:$0x1] %v785
      $region56: #{down_forward.4} parent=43 // pred_fallthru
        _
      // Predicated region
      $region57: #{down_forward.4} parent=43 // pred_check
        %p787 = pneg %p742
      $region58: #{down_forward.4} parent=43 // pred_check_branch
        %789 = sbr.rel (%p787) target = $region60
      $region59: #{down_forward.4} parent=43 // pred_region
        %s790 = scalar_lea.vmem [#allocation2], 72
        %v791 = vld [vmem:[%s790] sm:$0xf]
        %v792 = vsel %vm659, 0, %v791
        %793 = vst [vmem:[%s790] sm:$0xf] %v792
        %v794 = vld [vmem:[%s790 + $0x4] sm:$0x1]
        %v795 = vsel %vm458, 0, %v794
        %796 = vst [vmem:[%s790 + $0x4] sm:$0x1] %v795
      $region60: #{down_forward.4} parent=43 // pred_fallthru
        _
      %v797 = vld [vmem:[#allocation2] sm:$0xf]
      %v798 = vld [vmem:[#allocation2 + $0x8] sm:$0xf]
      %v799 = vld [vmem:[#allocation2 + $0x10] sm:$0xf]
      %v800 = vld [vmem:[#allocation2 + $0x18] sm:$0xf]
      %v801 = vld [vmem:[#allocation2 + $0x20] sm:$0xf]
      %v802 = vld [vmem:[#allocation2 + $0x28] sm:$0xf]
      %v803 = vld [vmem:[#allocation2 + $0x30] sm:$0xf]
      %v804 = vld [vmem:[#allocation2 + $0x38] sm:$0xf]
      %v805 = vld [vmem:[%s3] sm:$0xf]
      %v806 = vld [vmem:[%s3 + $0x4] sm:$0xf]
      %v807 = vld [vmem:[%s3 + $0x8] sm:$0xf]
      %v808 = vld [vmem:[%s3 + $0xc] sm:$0xf]
      %v809 = vld [vmem:[%s3 + $0x10] sm:$0xf]
      %v810 = vld [vmem:[%s3 + $0x14] sm:$0xf]
      %v811 = vld [vmem:[%s3 + $0x18] sm:$0xf]
      %v812 = vld [vmem:[%s3 + $0x1c] sm:$0xf]
      %v813 = vld [vmem:[%s3 + $0x20] sm:$0xf]
      %v814 = vld [vmem:[%s3 + $0x24] sm:$0xf]
      %v815 = vld [vmem:[%s3 + $0x28] sm:$0xf]
      %v816 = vld [vmem:[%s3 + $0x2c] sm:$0xf]
      %v817 = vld [vmem:[%s3 + $0x30] sm:$0xf]
      %v818 = vld [vmem:[%s3 + $0x34] sm:$0xf]
      %v819 = vld [vmem:[%s3 + $0x38] sm:$0xf]
      %v820 = vld [vmem:[%s3 + $0x3c] sm:$0xf]
      %v821 = vld [vmem:[#allocation2 + $0x4] sm:$0x1]
      %v822 = vld [vmem:[#allocation2 + $0xc] sm:$0x1]
      %v823 = vld [vmem:[#allocation2 + $0x14] sm:$0x1]
      %v824 = vld [vmem:[#allocation2 + $0x1c] sm:$0x1]
      %v825 = vld [vmem:[#allocation2 + $0x24] sm:$0x1]
      %v826 = vld [vmem:[#allocation2 + $0x2c] sm:$0x1]
      %v827 = vld [vmem:[#allocation2 + $0x34] sm:$0x1]
      %v828 = vld [vmem:[#allocation2 + $0x3c] sm:$0x1]
      %vm829 = vsmask.f32 3328
      %vm830 = vsmask.f32 7440
      %vm831 = vmor %vm829, %vm830
      %v833 = vshrl.u32 %v797, 16
      %v835 = vrot.slane %v833, 4
      %v836 = vshll.u32 %v797, 16
      %v838 = vrot.slane %v836, 5
      %v839 = vor.u32 %v835, %v838
      %v840 = vrot.slane %v839, 4
      %v842 = vshll.u32 %v821, 16
      %v844 = vrot.slane %v842, 5
      %v845 = vsel %vm831, %v840, %v844
      %v847 = vshrl.u32 %v798, 16
      %v849 = vrot.slane %v847, 4
      %v850 = vshll.u32 %v798, 16
      %v852 = vrot.slane %v850, 5
      %v853 = vor.u32 %v849, %v852
      %v854 = vrot.slane %v853, 4
      %v856 = vshll.u32 %v822, 16
      %v858 = vrot.slane %v856, 5
      %v859 = vsel %vm831, %v854, %v858
      %v861 = vshrl.u32 %v799, 16
      %v863 = vrot.slane %v861, 4
      %v864 = vshll.u32 %v799, 16
      %v866 = vrot.slane %v864, 5
      %v867 = vor.u32 %v863, %v866
      %v868 = vrot.slane %v867, 4
      %v870 = vshll.u32 %v823, 16
      %v872 = vrot.slane %v870, 5
      %v873 = vsel %vm831, %v868, %v872
      %v875 = vshrl.u32 %v800, 16
      %v877 = vrot.slane %v875, 4
      %v878 = vshll.u32 %v800, 16
      %v880 = vrot.slane %v878, 5
      %v881 = vor.u32 %v877, %v880
      %v882 = vrot.slane %v881, 4
      %v884 = vshll.u32 %v824, 16
      %v886 = vrot.slane %v884, 5
      %v887 = vsel %vm831, %v882, %v886
      %v889 = vshrl.u32 %v801, 16
      %v891 = vrot.slane %v889, 4
      %v892 = vshll.u32 %v801, 16
      %v894 = vrot.slane %v892, 5
      %v895 = vor.u32 %v891, %v894
      %v896 = vrot.slane %v895, 4
      %v898 = vshll.u32 %v825, 16
      %v900 = vrot.slane %v898, 5
      %v901 = vsel %vm831, %v896, %v900
      %v903 = vshrl.u32 %v802, 16
      %v905 = vrot.slane %v903, 4
      %v906 = vshll.u32 %v802, 16
      %v908 = vrot.slane %v906, 5
      %v909 = vor.u32 %v905, %v908
      %v910 = vrot.slane %v909, 4
      %v912 = vshll.u32 %v826, 16
      %v914 = vrot.slane %v912, 5
      %v915 = vsel %vm831, %v910, %v914
      %v917 = vshrl.u32 %v803, 16
      %v919 = vrot.slane %v917, 4
      %v920 = vshll.u32 %v803, 16
      %v922 = vrot.slane %v920, 5
      %v923 = vor.u32 %v919, %v922
      %v924 = vrot.slane %v923, 4
      %v926 = vshll.u32 %v827, 16
      %v928 = vrot.slane %v926, 5
      %v929 = vsel %vm831, %v924, %v928
      %v931 = vshrl.u32 %v804, 16
      %v933 = vrot.slane %v931, 4
      %v934 = vshll.u32 %v804, 16
      %v936 = vrot.slane %v934, 5
      %v937 = vor.u32 %v933, %v936
      %v938 = vrot.slane %v937, 4
      %v940 = vshll.u32 %v828, 16
      %v942 = vrot.slane %v940, 5
      %v943 = vsel %vm831, %v938, %v942
      %s944 = scalar_lea.vmem %s3, 64
      %v945 = vld [vmem:[%s944] sm:$0xf]
      %v946 = vld [vmem:[%s944 + $0x4] sm:$0xf]
      %v947 = vld [vmem:[%s944 + $0x8] sm:$0xf]
      %v948 = vld [vmem:[%s944 + $0xc] sm:$0xf]
      %v949 = vld [vmem:[%s944 + $0x10] sm:$0xf]
      %v950 = vld [vmem:[%s944 + $0x14] sm:$0xf]
      %v951 = vld [vmem:[%s944 + $0x18] sm:$0xf]
      %v952 = vld [vmem:[%s944 + $0x1c] sm:$0xf]
      %v953 = vld [vmem:[%s944 + $0x20] sm:$0xf]
      %v954 = vld [vmem:[%s944 + $0x24] sm:$0xf]
      %v955 = vld [vmem:[%s944 + $0x28] sm:$0xf]
      %v956 = vld [vmem:[%s944 + $0x2c] sm:$0xf]
      %v957 = vld [vmem:[%s944 + $0x30] sm:$0xf]
      %v958 = vld [vmem:[%s944 + $0x34] sm:$0xf]
      %v959 = vld [vmem:[%s944 + $0x38] sm:$0xf]
      %v960 = vld [vmem:[%s944 + $0x3c] sm:$0xf]
      %v961 = vunpack.c.l.b16 %v845
      %v962 = vunpack.c.l.b16 %v859
      %v963 = vunpack.c.l.b16 %v873
      %v964 = vunpack.c.l.b16 %v887
      %v965 = vunpack.c.l.b16 %v901
      %v966 = vunpack.c.l.b16 %v915
      %v967 = vunpack.c.l.b16 %v929
      %v968 = vunpack.c.l.b16 %v943
      %v969 = vpack.c.b16 %v962, %v961
      %v970 = vpack.c.b16 %v964, %v963
      %v971 = vpack.c.b16 %v966, %v965
      %v972 = vpack.c.b16 %v968, %v967
      %v993 = vunpack.c.l.b16 %v945
      %v994 = vunpack.c.l.b16 %v946
      %v995 = vunpack.c.l.b16 %v947
      %v996 = vunpack.c.l.b16 %v948
      %v997 = vunpack.c.l.b16 %v949
      %v998 = vunpack.c.l.b16 %v950
      %v999 = vunpack.c.l.b16 %v951
      %v1000 = vunpack.c.l.b16 %v952
      %v1001 = vunpack.c.l.b16 %v953
      %v1002 = vunpack.c.l.b16 %v954
      %v1003 = vunpack.c.l.b16 %v955
      %v1004 = vunpack.c.l.b16 %v956
      %v1005 = vunpack.c.l.b16 %v957
      %v1006 = vunpack.c.l.b16 %v958
      %v1007 = vunpack.c.l.b16 %v959
      %v1008 = vunpack.c.l.b16 %v960
      %v1009 = vpack.c.b16 %v994, %v993
      %v1010 = vpack.c.b16 %v996, %v995
      %v1011 = vpack.c.b16 %v998, %v997
      %v1012 = vpack.c.b16 %v1000, %v999
      %v1013 = vpack.c.b16 %v1002, %v1001
      %v1014 = vpack.c.b16 %v1004, %v1003
      %v1015 = vpack.c.b16 %v1006, %v1005
      %v1016 = vpack.c.b16 %v1008, %v1007
      %1025 = vmatpush.bf16.msra.mxu0 %v1016
      %1026 = vmatpush.bf16.msra.mxu0 %v1015
      %1027 = vmatpush.bf16.msra.mxu0 %v1014
      %1028 = vmatpush.bf16.msra.mxu0 %v1013
      %1029 = vmatpush.bf16.msra.mxu0 %v1012
      %1030 = vmatpush.bf16.msra.mxu0 %v1011
      %1031 = vmatpush.bf16.msra.mxu0 %v1010
      %1032 = vmatpush.bf16.msra.mxu0 %v1009
      %1033 = vmatmul.bf16.gmra.mxu0 %v969
      %v1034 = vpop.f32.mrf.mxu0
      %v1035 = vadd.f32 0.0, %v1034
      %v1036 = vpop.f32.mrf.mxu0
      %v1037 = vadd.f32 0.0, %v1036
      %1038 = vmatmul.bf16.gmra.mxu0 %v970
      %v1039 = vpop.f32.mrf.mxu0
      %v1040 = vadd.f32 0.0, %v1039
      %v1041 = vpop.f32.mrf.mxu0
      %v1042 = vadd.f32 0.0, %v1041
      %1043 = vmatmul.bf16.gmra.mxu0 %v971
      %v1044 = vpop.f32.mrf.mxu0
      %v1045 = vadd.f32 0.0, %v1044
      %v1046 = vpop.f32.mrf.mxu0
      %v1047 = vadd.f32 0.0, %v1046
      %1048 = vmatmul.bf16.gmra.mxu0 %v972
      %v1049 = vpop.f32.mrf.mxu0
      %v1050 = vadd.f32 0.0, %v1049
      %v1051 = vpop.f32.mrf.mxu0
      %v1052 = vadd.f32 0.0, %v1051
      %1053 = vdwg.mxu0
      %v1062 = vunpack.c.l.b16 %v797
      %v1063 = vunpack.c.l.b16 %v798
      %v1064 = vunpack.c.l.b16 %v799
      %v1065 = vunpack.c.l.b16 %v800
      %v1066 = vunpack.c.l.b16 %v801
      %v1067 = vunpack.c.l.b16 %v802
      %v1068 = vunpack.c.l.b16 %v803
      %v1069 = vunpack.c.l.b16 %v804
      %v1070 = vpack.c.b16 %v1063, %v1062
      %v1071 = vpack.c.b16 %v1065, %v1064
      %v1072 = vpack.c.b16 %v1067, %v1066
      %v1073 = vpack.c.b16 %v1069, %v1068
      %v1094 = vunpack.c.l.b16 %v805
      %v1095 = vunpack.c.l.b16 %v806
      %v1096 = vunpack.c.l.b16 %v807
      %v1097 = vunpack.c.l.b16 %v808
      %v1098 = vunpack.c.l.b16 %v809
      %v1099 = vunpack.c.l.b16 %v810
      %v1100 = vunpack.c.l.b16 %v811
      %v1101 = vunpack.c.l.b16 %v812
      %v1102 = vunpack.c.l.b16 %v813
      %v1103 = vunpack.c.l.b16 %v814
      %v1104 = vunpack.c.l.b16 %v815
      %v1105 = vunpack.c.l.b16 %v816
      %v1106 = vunpack.c.l.b16 %v817
      %v1107 = vunpack.c.l.b16 %v818
      %v1108 = vunpack.c.l.b16 %v819
      %v1109 = vunpack.c.l.b16 %v820
      %v1110 = vpack.c.b16 %v1095, %v1094
      %v1111 = vpack.c.b16 %v1097, %v1096
      %v1112 = vpack.c.b16 %v1099, %v1098
      %v1113 = vpack.c.b16 %v1101, %v1100
      %v1114 = vpack.c.b16 %v1103, %v1102
      %v1115 = vpack.c.b16 %v1105, %v1104
      %v1116 = vpack.c.b16 %v1107, %v1106
      %v1117 = vpack.c.b16 %v1109, %v1108
      %1126 = vmatpush.bf16.msra.mxu0 %v1117
      %1127 = vmatpush.bf16.msra.mxu0 %v1116
      %1128 = vmatpush.bf16.msra.mxu0 %v1115
      %1129 = vmatpush.bf16.msra.mxu0 %v1114
      %1130 = vmatpush.bf16.msra.mxu0 %v1113
      %1131 = vmatpush.bf16.msra.mxu0 %v1112
      %1132 = vmatpush.bf16.msra.mxu0 %v1111
      %1133 = vmatpush.bf16.msra.mxu0 %v1110
      %1134 = vmatmul.bf16.gmra.mxu0 %v1070
      %v1135 = vpop.f32.mrf.mxu0
      %v1136 = vadd.f32 %v1035, %v1135
      %v1137 = vpop.f32.mrf.mxu0
      %v1138 = vadd.f32 %v1037, %v1137
      %1139 = vmatmul.bf16.gmra.mxu0 %v1071
      %v1140 = vpop.f32.mrf.mxu0
      %v1141 = vadd.f32 %v1040, %v1140
      %v1142 = vpop.f32.mrf.mxu0
      %v1143 = vadd.f32 %v1042, %v1142
      %1144 = vmatmul.bf16.gmra.mxu0 %v1072
      %v1145 = vpop.f32.mrf.mxu0
      %v1146 = vadd.f32 %v1045, %v1145
      %v1147 = vpop.f32.mrf.mxu0
      %v1148 = vadd.f32 %v1047, %v1147
      %1149 = vmatmul.bf16.gmra.mxu0 %v1073
      %v1150 = vpop.f32.mrf.mxu0
      %v1151 = vadd.f32 %v1050, %v1150
      %v1152 = vpop.f32.mrf.mxu0
      %v1153 = vadd.f32 %v1052, %v1152
      %1154 = vdwg.mxu0
      %v1155 = vld [vmem:[#allocation2] sm:$0xe]
      %v1156 = vld [vmem:[#allocation2 + $0x8] sm:$0xe]
      %v1157 = vld [vmem:[#allocation2 + $0x10] sm:$0xe]
      %v1158 = vld [vmem:[#allocation2 + $0x18] sm:$0xe]
      %v1159 = vld [vmem:[#allocation2 + $0x20] sm:$0xe]
      %v1160 = vld [vmem:[#allocation2 + $0x28] sm:$0xe]
      %v1161 = vld [vmem:[#allocation2 + $0x30] sm:$0xe]
      %v1162 = vld [vmem:[#allocation2 + $0x38] sm:$0xe]
      %vm1179 = vcmask 1042432
      %vm1180 = vcmask 1046532
      %vm1181 = vmor %vm1179, %vm1180
      %v1182 = vrot.slane %v1155, 5
      %v1183 = vrot.slane %v1182, 4
      %v1184 = vrot.slane %v821, 5
      %v1185 = vsel %vm1181, %v1183, %v1184
      %v1186 = vrot.slane %v1156, 5
      %v1187 = vrot.slane %v1186, 4
      %v1188 = vrot.slane %v822, 5
      %v1189 = vsel %vm1181, %v1187, %v1188
      %v1190 = vrot.slane %v1157, 5
      %v1191 = vrot.slane %v1190, 4
      %v1192 = vrot.slane %v823, 5
      %v1193 = vsel %vm1181, %v1191, %v1192
      %v1194 = vrot.slane %v1158, 5
      %v1195 = vrot.slane %v1194, 4
      %v1196 = vrot.slane %v824, 5
      %v1197 = vsel %vm1181, %v1195, %v1196
      %v1198 = vrot.slane %v1159, 5
      %v1199 = vrot.slane %v1198, 4
      %v1200 = vrot.slane %v825, 5
      %v1201 = vsel %vm1181, %v1199, %v1200
      %v1202 = vrot.slane %v1160, 5
      %v1203 = vrot.slane %v1202, 4
      %v1204 = vrot.slane %v826, 5
      %v1205 = vsel %vm1181, %v1203, %v1204
      %v1206 = vrot.slane %v1161, 5
      %v1207 = vrot.slane %v1206, 4
      %v1208 = vrot.slane %v827, 5
      %v1209 = vsel %vm1181, %v1207, %v1208
      %v1210 = vrot.slane %v1162, 5
      %v1211 = vrot.slane %v1210, 4
      %v1212 = vrot.slane %v828, 5
      %v1213 = vsel %vm1181, %v1211, %v1212
      %s1214 = scalar_lea.vmem %s3, 128
      %v1215 = vld [vmem:[%s1214] sm:$0xf]
      %v1216 = vld [vmem:[%s1214 + $0x4] sm:$0xf]
      %v1217 = vld [vmem:[%s1214 + $0x8] sm:$0xf]
      %v1218 = vld [vmem:[%s1214 + $0xc] sm:$0xf]
      %v1219 = vld [vmem:[%s1214 + $0x10] sm:$0xf]
      %v1220 = vld [vmem:[%s1214 + $0x14] sm:$0xf]
      %v1221 = vld [vmem:[%s1214 + $0x18] sm:$0xf]
      %v1222 = vld [vmem:[%s1214 + $0x1c] sm:$0xf]
      %v1223 = vld [vmem:[%s1214 + $0x20] sm:$0xf]
      %v1224 = vld [vmem:[%s1214 + $0x24] sm:$0xf]
      %v1225 = vld [vmem:[%s1214 + $0x28] sm:$0xf]
      %v1226 = vld [vmem:[%s1214 + $0x2c] sm:$0xf]
      %v1227 = vld [vmem:[%s1214 + $0x30] sm:$0xf]
      %v1228 = vld [vmem:[%s1214 + $0x34] sm:$0xf]
      %v1229 = vld [vmem:[%s1214 + $0x38] sm:$0xf]
      %v1230 = vld [vmem:[%s1214 + $0x3c] sm:$0xf]
      %v1231 = vunpack.c.l.b16 %v1185
      %v1232 = vunpack.c.l.b16 %v1189
      %v1233 = vunpack.c.l.b16 %v1193
      %v1234 = vunpack.c.l.b16 %v1197
      %v1235 = vunpack.c.l.b16 %v1201
      %v1236 = vunpack.c.l.b16 %v1205
      %v1237 = vunpack.c.l.b16 %v1209
      %v1238 = vunpack.c.l.b16 %v1213
      %v1239 = vpack.c.b16 %v1232, %v1231
      %v1240 = vpack.c.b16 %v1234, %v1233
      %v1241 = vpack.c.b16 %v1236, %v1235
      %v1242 = vpack.c.b16 %v1238, %v1237
      %v1263 = vunpack.c.l.b16 %v1215
      %v1264 = vunpack.c.l.b16 %v1216
      %v1265 = vunpack.c.l.b16 %v1217
      %v1266 = vunpack.c.l.b16 %v1218
      %v1267 = vunpack.c.l.b16 %v1219
      %v1268 = vunpack.c.l.b16 %v1220
      %v1269 = vunpack.c.l.b16 %v1221
      %v1270 = vunpack.c.l.b16 %v1222
      %v1271 = vunpack.c.l.b16 %v1223
      %v1272 = vunpack.c.l.b16 %v1224
      %v1273 = vunpack.c.l.b16 %v1225
      %v1274 = vunpack.c.l.b16 %v1226
      %v1275 = vunpack.c.l.b16 %v1227
      %v1276 = vunpack.c.l.b16 %v1228
      %v1277 = vunpack.c.l.b16 %v1229
      %v1278 = vunpack.c.l.b16 %v1230
      %v1279 = vpack.c.b16 %v1264, %v1263
      %v1280 = vpack.c.b16 %v1266, %v1265
      %v1281 = vpack.c.b16 %v1268, %v1267
      %v1282 = vpack.c.b16 %v1270, %v1269
      %v1283 = vpack.c.b16 %v1272, %v1271
      %v1284 = vpack.c.b16 %v1274, %v1273
      %v1285 = vpack.c.b16 %v1276, %v1275
      %v1286 = vpack.c.b16 %v1278, %v1277
      %1295 = vmatpush.bf16.msra.mxu0 %v1286
      %1296 = vmatpush.bf16.msra.mxu0 %v1285
      %1297 = vmatpush.bf16.msra.mxu0 %v1284
      %1298 = vmatpush.bf16.msra.mxu0 %v1283
      %1299 = vmatpush.bf16.msra.mxu0 %v1282
      %1300 = vmatpush.bf16.msra.mxu0 %v1281
      %1301 = vmatpush.bf16.msra.mxu0 %v1280
      %1302 = vmatpush.bf16.msra.mxu0 %v1279
      %1303 = vmatmul.bf16.gmra.mxu0 %v1239
      %v1304 = vpop.f32.mrf.mxu0
      %v1305 = vadd.f32 0.0, %v1304
      %v1306 = vpop.f32.mrf.mxu0
      %v1307 = vadd.f32 0.0, %v1306
      %1308 = vmatmul.bf16.gmra.mxu0 %v1240
      %v1309 = vpop.f32.mrf.mxu0
      %v1310 = vadd.f32 0.0, %v1309
      %v1311 = vpop.f32.mrf.mxu0
      %v1312 = vadd.f32 0.0, %v1311
      %1313 = vmatmul.bf16.gmra.mxu0 %v1241
      %v1314 = vpop.f32.mrf.mxu0
      %v1315 = vadd.f32 0.0, %v1314
      %v1316 = vpop.f32.mrf.mxu0
      %v1317 = vadd.f32 0.0, %v1316
      %1318 = vmatmul.bf16.gmra.mxu0 %v1242
      %v1319 = vpop.f32.mrf.mxu0
      %v1320 = vadd.f32 0.0, %v1319
      %v1321 = vpop.f32.mrf.mxu0
      %v1322 = vadd.f32 0.0, %v1321
      %1323 = vdwg.mxu0
      %v1324 = vadd.f32 %v1136, %v1305
      %v1325 = vadd.f32 %v1138, %v1307
      %v1326 = vadd.f32 %v1141, %v1310
      %v1327 = vadd.f32 %v1143, %v1312
      %v1328 = vadd.f32 %v1146, %v1315
      %v1329 = vadd.f32 %v1148, %v1317
      %v1330 = vadd.f32 %v1151, %v1320
      %v1331 = vadd.f32 %v1153, %v1322
      %v1332 = vld [vmem:[%s657] sm:$0xf]
      %v1333 = vld [vmem:[%s657 + $0x8] sm:$0xf]
      %v1334 = vld [vmem:[%s657 + $0x10] sm:$0xf]
      %v1335 = vld [vmem:[%s657 + $0x18] sm:$0xf]
      %v1336 = vld [vmem:[%s657 + $0x20] sm:$0xf]
      %v1337 = vld [vmem:[%s657 + $0x28] sm:$0xf]
      %v1338 = vld [vmem:[%s657 + $0x30] sm:$0xf]
      %v1339 = vld [vmem:[%s657 + $0x38] sm:$0xf]
      %s1340 = scalar_lea.vmem %s3, 192
      %v1341 = vld [vmem:[%s1340] sm:$0xf]
      %v1342 = vld [vmem:[%s1340 + $0x4] sm:$0xf]
      %v1343 = vld [vmem:[%s1340 + $0x8] sm:$0xf]
      %v1344 = vld [vmem:[%s1340 + $0xc] sm:$0xf]
      %v1345 = vld [vmem:[%s1340 + $0x10] sm:$0xf]
      %v1346 = vld [vmem:[%s1340 + $0x14] sm:$0xf]
      %v1347 = vld [vmem:[%s1340 + $0x18] sm:$0xf]
      %v1348 = vld [vmem:[%s1340 + $0x1c] sm:$0xf]
      %v1349 = vld [vmem:[%s1340 + $0x20] sm:$0xf]
      %v1350 = vld [vmem:[%s1340 + $0x24] sm:$0xf]
      %v1351 = vld [vmem:[%s1340 + $0x28] sm:$0xf]
      %v1352 = vld [vmem:[%s1340 + $0x2c] sm:$0xf]
      %v1353 = vld [vmem:[%s1340 + $0x30] sm:$0xf]
      %v1354 = vld [vmem:[%s1340 + $0x34] sm:$0xf]
      %v1355 = vld [vmem:[%s1340 + $0x38] sm:$0xf]
      %v1356 = vld [vmem:[%s1340 + $0x3c] sm:$0xf]
      %v1365 = vunpack.c.l.b16 %v1332
      %v1366 = vunpack.c.l.b16 %v1333
      %v1367 = vunpack.c.l.b16 %v1334
      %v1368 = vunpack.c.l.b16 %v1335
      %v1369 = vunpack.c.l.b16 %v1336
      %v1370 = vunpack.c.l.b16 %v1337
      %v1371 = vunpack.c.l.b16 %v1338
      %v1372 = vunpack.c.l.b16 %v1339
      %v1373 = vpack.c.b16 %v1366, %v1365
      %v1374 = vpack.c.b16 %v1368, %v1367
      %v1375 = vpack.c.b16 %v1370, %v1369
      %v1376 = vpack.c.b16 %v1372, %v1371
      %v1397 = vunpack.c.l.b16 %v1341
      %v1398 = vunpack.c.l.b16 %v1342
      %v1399 = vunpack.c.l.b16 %v1343
      %v1400 = vunpack.c.l.b16 %v1344
      %v1401 = vunpack.c.l.b16 %v1345
      %v1402 = vunpack.c.l.b16 %v1346
      %v1403 = vunpack.c.l.b16 %v1347
      %v1404 = vunpack.c.l.b16 %v1348
      %v1405 = vunpack.c.l.b16 %v1349
      %v1406 = vunpack.c.l.b16 %v1350
      %v1407 = vunpack.c.l.b16 %v1351
      %v1408 = vunpack.c.l.b16 %v1352
      %v1409 = vunpack.c.l.b16 %v1353
      %v1410 = vunpack.c.l.b16 %v1354
      %v1411 = vunpack.c.l.b16 %v1355
      %v1412 = vunpack.c.l.b16 %v1356
      %v1413 = vpack.c.b16 %v1398, %v1397
      %v1414 = vpack.c.b16 %v1400, %v1399
      %v1415 = vpack.c.b16 %v1402, %v1401
      %v1416 = vpack.c.b16 %v1404, %v1403
      %v1417 = vpack.c.b16 %v1406, %v1405
      %v1418 = vpack.c.b16 %v1408, %v1407
      %v1419 = vpack.c.b16 %v1410, %v1409
      %v1420 = vpack.c.b16 %v1412, %v1411
      %1429 = vmatpush.bf16.msra.mxu0 %v1420
      %1430 = vmatpush.bf16.msra.mxu0 %v1419
      %1431 = vmatpush.bf16.msra.mxu0 %v1418
      %1432 = vmatpush.bf16.msra.mxu0 %v1417
      %1433 = vmatpush.bf16.msra.mxu0 %v1416
      %1434 = vmatpush.bf16.msra.mxu0 %v1415
      %1435 = vmatpush.bf16.msra.mxu0 %v1414
      %1436 = vmatpush.bf16.msra.mxu0 %v1413
      %1437 = vmatmul.bf16.gmra.mxu0 %v1373
      %v1438 = vpop.f32.mrf.mxu0
      %v1439 = vadd.f32 0.0, %v1438
      %v1440 = vpop.f32.mrf.mxu0
      %v1441 = vadd.f32 0.0, %v1440
      %1442 = vmatmul.bf16.gmra.mxu0 %v1374
      %v1443 = vpop.f32.mrf.mxu0
      %v1444 = vadd.f32 0.0, %v1443
      %v1445 = vpop.f32.mrf.mxu0
      %v1446 = vadd.f32 0.0, %v1445
      %1447 = vmatmul.bf16.gmra.mxu0 %v1375
      %v1448 = vpop.f32.mrf.mxu0
      %v1449 = vadd.f32 0.0, %v1448
      %v1450 = vpop.f32.mrf.mxu0
      %v1451 = vadd.f32 0.0, %v1450
      %1452 = vmatmul.bf16.gmra.mxu0 %v1376
      %v1453 = vpop.f32.mrf.mxu0
      %v1454 = vadd.f32 0.0, %v1453
      %v1455 = vpop.f32.mrf.mxu0
      %v1456 = vadd.f32 0.0, %v1455
      %1457 = vdwg.mxu0
      %v1458 = vadd.f32 %v1324, %v1439
      %v1459 = vadd.f32 %v1325, %v1441
      %v1460 = vadd.f32 %v1326, %v1444
      %v1461 = vadd.f32 %v1327, %v1446
      %v1462 = vadd.f32 %v1328, %v1449
      %v1463 = vadd.f32 %v1329, %v1451
      %v1464 = vadd.f32 %v1330, %v1454
      %v1465 = vadd.f32 %v1331, %v1456
      %v1466 = vld [vmem:[%s657] sm:$0xf]
      %v1467 = vld [vmem:[%s657 + $0x4] sm:$0x1]
      %v1468 = vld [vmem:[%s657 + $0x8] sm:$0xf]
      %v1469 = vld [vmem:[%s657 + $0xc] sm:$0x1]
      %v1470 = vld [vmem:[%s657 + $0x10] sm:$0xf]
      %v1471 = vld [vmem:[%s657 + $0x14] sm:$0x1]
      %v1472 = vld [vmem:[%s657 + $0x18] sm:$0xf]
      %v1473 = vld [vmem:[%s657 + $0x1c] sm:$0x1]
      %v1474 = vld [vmem:[%s657 + $0x20] sm:$0xf]
      %v1475 = vld [vmem:[%s657 + $0x24] sm:$0x1]
      %v1476 = vld [vmem:[%s657 + $0x28] sm:$0xf]
      %v1477 = vld [vmem:[%s657 + $0x2c] sm:$0x1]
      %v1478 = vld [vmem:[%s657 + $0x30] sm:$0xf]
      %v1479 = vld [vmem:[%s657 + $0x34] sm:$0x1]
      %v1480 = vld [vmem:[%s657 + $0x38] sm:$0xf]
      %v1481 = vld [vmem:[%s657 + $0x3c] sm:$0x1]
      %v1483 = vshrl.u32 %v1466, 16
      %v1485 = vrot.slane %v1483, 4
      %v1486 = vshll.u32 %v1466, 16
      %v1488 = vrot.slane %v1486, 5
      %v1489 = vor.u32 %v1485, %v1488
      %v1490 = vrot.slane %v1489, 4
      %v1492 = vshll.u32 %v1467, 16
      %v1494 = vrot.slane %v1492, 5
      %v1495 = vsel %vm831, %v1490, %v1494
      %v1497 = vshrl.u32 %v1468, 16
      %v1499 = vrot.slane %v1497, 4
      %v1500 = vshll.u32 %v1468, 16
      %v1502 = vrot.slane %v1500, 5
      %v1503 = vor.u32 %v1499, %v1502
      %v1504 = vrot.slane %v1503, 4
      %v1506 = vshll.u32 %v1469, 16
      %v1508 = vrot.slane %v1506, 5
      %v1509 = vsel %vm831, %v1504, %v1508
      %v1511 = vshrl.u32 %v1470, 16
      %v1513 = vrot.slane %v1511, 4
      %v1514 = vshll.u32 %v1470, 16
      %v1516 = vrot.slane %v1514, 5
      %v1517 = vor.u32 %v1513, %v1516
      %v1518 = vrot.slane %v1517, 4
      %v1520 = vshll.u32 %v1471, 16
      %v1522 = vrot.slane %v1520, 5
      %v1523 = vsel %vm831, %v1518, %v1522
      %v1525 = vshrl.u32 %v1472, 16
      %v1527 = vrot.slane %v1525, 4
      %v1528 = vshll.u32 %v1472, 16
      %v1530 = vrot.slane %v1528, 5
      %v1531 = vor.u32 %v1527, %v1530
      %v1532 = vrot.slane %v1531, 4
      %v1534 = vshll.u32 %v1473, 16
      %v1536 = vrot.slane %v1534, 5
      %v1537 = vsel %vm831, %v1532, %v1536
      %v1539 = vshrl.u32 %v1474, 16
      %v1541 = vrot.slane %v1539, 4
      %v1542 = vshll.u32 %v1474, 16
      %v1544 = vrot.slane %v1542, 5
      %v1545 = vor.u32 %v1541, %v1544
      %v1546 = vrot.slane %v1545, 4
      %v1548 = vshll.u32 %v1475, 16
      %v1550 = vrot.slane %v1548, 5
      %v1551 = vsel %vm831, %v1546, %v1550
      %v1553 = vshrl.u32 %v1476, 16
      %v1555 = vrot.slane %v1553, 4
      %v1556 = vshll.u32 %v1476, 16
      %v1558 = vrot.slane %v1556, 5
      %v1559 = vor.u32 %v1555, %v1558
      %v1560 = vrot.slane %v1559, 4
      %v1562 = vshll.u32 %v1477, 16
      %v1564 = vrot.slane %v1562, 5
      %v1565 = vsel %vm831, %v1560, %v1564
      %v1567 = vshrl.u32 %v1478, 16
      %v1569 = vrot.slane %v1567, 4
      %v1570 = vshll.u32 %v1478, 16
      %v1572 = vrot.slane %v1570, 5
      %v1573 = vor.u32 %v1569, %v1572
      %v1574 = vrot.slane %v1573, 4
      %v1576 = vshll.u32 %v1479, 16
      %v1578 = vrot.slane %v1576, 5
      %v1579 = vsel %vm831, %v1574, %v1578
      %v1581 = vshrl.u32 %v1480, 16
      %v1583 = vrot.slane %v1581, 4
      %v1584 = vshll.u32 %v1480, 16
      %v1586 = vrot.slane %v1584, 5
      %v1587 = vor.u32 %v1583, %v1586
      %v1588 = vrot.slane %v1587, 4
      %v1590 = vshll.u32 %v1481, 16
      %v1592 = vrot.slane %v1590, 5
      %v1593 = vsel %vm831, %v1588, %v1592
      %s1594 = scalar_lea.vmem %s3, 256
      %v1595 = vld [vmem:[%s1594] sm:$0xf]
      %v1596 = vld [vmem:[%s1594 + $0x4] sm:$0xf]
      %v1597 = vld [vmem:[%s1594 + $0x8] sm:$0xf]
      %v1598 = vld [vmem:[%s1594 + $0xc] sm:$0xf]
      %v1599 = vld [vmem:[%s1594 + $0x10] sm:$0xf]
      %v1600 = vld [vmem:[%s1594 + $0x14] sm:$0xf]
      %v1601 = vld [vmem:[%s1594 + $0x18] sm:$0xf]
      %v1602 = vld [vmem:[%s1594 + $0x1c] sm:$0xf]
      %v1603 = vld [vmem:[%s1594 + $0x20] sm:$0xf]
      %v1604 = vld [vmem:[%s1594 + $0x24] sm:$0xf]
      %v1605 = vld [vmem:[%s1594 + $0x28] sm:$0xf]
      %v1606 = vld [vmem:[%s1594 + $0x2c] sm:$0xf]
      %v1607 = vld [vmem:[%s1594 + $0x30] sm:$0xf]
      %v1608 = vld [vmem:[%s1594 + $0x34] sm:$0xf]
      %v1609 = vld [vmem:[%s1594 + $0x38] sm:$0xf]
      %v1610 = vld [vmem:[%s1594 + $0x3c] sm:$0xf]
      %v1611 = vunpack.c.l.b16 %v1495
      %v1612 = vunpack.c.l.b16 %v1509
      %v1613 = vunpack.c.l.b16 %v1523
      %v1614 = vunpack.c.l.b16 %v1537
      %v1615 = vunpack.c.l.b16 %v1551
      %v1616 = vunpack.c.l.b16 %v1565
      %v1617 = vunpack.c.l.b16 %v1579
      %v1618 = vunpack.c.l.b16 %v1593
      %v1619 = vpack.c.b16 %v1612, %v1611
      %v1620 = vpack.c.b16 %v1614, %v1613
      %v1621 = vpack.c.b16 %v1616, %v1615
      %v1622 = vpack.c.b16 %v1618, %v1617
      %v1643 = vunpack.c.l.b16 %v1595
      %v1644 = vunpack.c.l.b16 %v1596
      %v1645 = vunpack.c.l.b16 %v1597
      %v1646 = vunpack.c.l.b16 %v1598
      %v1647 = vunpack.c.l.b16 %v1599
      %v1648 = vunpack.c.l.b16 %v1600
      %v1649 = vunpack.c.l.b16 %v1601
      %v1650 = vunpack.c.l.b16 %v1602
      %v1651 = vunpack.c.l.b16 %v1603
      %v1652 = vunpack.c.l.b16 %v1604
      %v1653 = vunpack.c.l.b16 %v1605
      %v1654 = vunpack.c.l.b16 %v1606
      %v1655 = vunpack.c.l.b16 %v1607
      %v1656 = vunpack.c.l.b16 %v1608
      %v1657 = vunpack.c.l.b16 %v1609
      %v1658 = vunpack.c.l.b16 %v1610
      %v1659 = vpack.c.b16 %v1644, %v1643
      %v1660 = vpack.c.b16 %v1646, %v1645
      %v1661 = vpack.c.b16 %v1648, %v1647
      %v1662 = vpack.c.b16 %v1650, %v1649
      %v1663 = vpack.c.b16 %v1652, %v1651
      %v1664 = vpack.c.b16 %v1654, %v1653
      %v1665 = vpack.c.b16 %v1656, %v1655
      %v1666 = vpack.c.b16 %v1658, %v1657
      %1675 = vmatpush.bf16.msra.mxu0 %v1666
      %1676 = vmatpush.bf16.msra.mxu0 %v1665
      %1677 = vmatpush.bf16.msra.mxu0 %v1664
      %1678 = vmatpush.bf16.msra.mxu0 %v1663
      %1679 = vmatpush.bf16.msra.mxu0 %v1662
      %1680 = vmatpush.bf16.msra.mxu0 %v1661
      %1681 = vmatpush.bf16.msra.mxu0 %v1660
      %1682 = vmatpush.bf16.msra.mxu0 %v1659
      %1683 = vmatmul.bf16.gmra.mxu0 %v1619
      %v1684 = vpop.f32.mrf.mxu0
      %v1685 = vadd.f32 0.0, %v1684
      %v1686 = vpop.f32.mrf.mxu0
      %v1687 = vadd.f32 0.0, %v1686
      %1688 = vmatmul.bf16.gmra.mxu0 %v1620
      %v1689 = vpop.f32.mrf.mxu0
      %v1690 = vadd.f32 0.0, %v1689
      %v1691 = vpop.f32.mrf.mxu0
      %v1692 = vadd.f32 0.0, %v1691
      %1693 = vmatmul.bf16.gmra.mxu0 %v1621
      %v1694 = vpop.f32.mrf.mxu0
      %v1695 = vadd.f32 0.0, %v1694
      %v1696 = vpop.f32.mrf.mxu0
      %v1697 = vadd.f32 0.0, %v1696
      %1698 = vmatmul.bf16.gmra.mxu0 %v1622
      %v1699 = vpop.f32.mrf.mxu0
      %v1700 = vadd.f32 0.0, %v1699
      %v1701 = vpop.f32.mrf.mxu0
      %v1702 = vadd.f32 0.0, %v1701
      %1703 = vdwg.mxu0
      %v1704 = vadd.f32 %v1458, %v1685
      %v1705 = vadd.f32 %v1459, %v1687
      %v1706 = vadd.f32 %v1460, %v1690
      %v1707 = vadd.f32 %v1461, %v1692
      %v1708 = vadd.f32 %v1462, %v1695
      %v1709 = vadd.f32 %v1463, %v1697
      %v1710 = vadd.f32 %v1464, %v1700
      %v1711 = vadd.f32 %v1465, %v1702
      %v1712 = vld [vmem:[%s657] sm:$0xe]
      %v1713 = vld [vmem:[%s657 + $0x8] sm:$0xe]
      %v1714 = vld [vmem:[%s657 + $0x10] sm:$0xe]
      %v1715 = vld [vmem:[%s657 + $0x18] sm:$0xe]
      %v1716 = vld [vmem:[%s657 + $0x20] sm:$0xe]
      %v1717 = vld [vmem:[%s657 + $0x28] sm:$0xe]
      %v1718 = vld [vmem:[%s657 + $0x30] sm:$0xe]
      %v1719 = vld [vmem:[%s657 + $0x38] sm:$0xe]
      %v1736 = vrot.slane %v1712, 5
      %v1737 = vrot.slane %v1736, 4
      %v1738 = vrot.slane %v1467, 5
      %v1739 = vsel %vm1181, %v1737, %v1738
      %v1740 = vrot.slane %v1713, 5
      %v1741 = vrot.slane %v1740, 4
      %v1742 = vrot.slane %v1469, 5
      %v1743 = vsel %vm1181, %v1741, %v1742
      %v1744 = vrot.slane %v1714, 5
      %v1745 = vrot.slane %v1744, 4
      %v1746 = vrot.slane %v1471, 5
      %v1747 = vsel %vm1181, %v1745, %v1746
      %v1748 = vrot.slane %v1715, 5
      %v1749 = vrot.slane %v1748, 4
      %v1750 = vrot.slane %v1473, 5
      %v1751 = vsel %vm1181, %v1749, %v1750
      %v1752 = vrot.slane %v1716, 5
      %v1753 = vrot.slane %v1752, 4
      %v1754 = vrot.slane %v1475, 5
      %v1755 = vsel %vm1181, %v1753, %v1754
      %v1756 = vrot.slane %v1717, 5
      %v1757 = vrot.slane %v1756, 4
      %v1758 = vrot.slane %v1477, 5
      %v1759 = vsel %vm1181, %v1757, %v1758
      %v1760 = vrot.slane %v1718, 5
      %v1761 = vrot.slane %v1760, 4
      %v1762 = vrot.slane %v1479, 5
      %v1763 = vsel %vm1181, %v1761, %v1762
      %v1764 = vrot.slane %v1719, 5
      %v1765 = vrot.slane %v1764, 4
      %v1766 = vrot.slane %v1481, 5
      %v1767 = vsel %vm1181, %v1765, %v1766
      %s1768 = scalar_lea.vmem %s3, 320
      %v1769 = vld [vmem:[%s1768] sm:$0xf]
      %v1770 = vld [vmem:[%s1768 + $0x4] sm:$0xf]
      %v1771 = vld [vmem:[%s1768 + $0x8] sm:$0xf]
      %v1772 = vld [vmem:[%s1768 + $0xc] sm:$0xf]
      %v1773 = vld [vmem:[%s1768 + $0x10] sm:$0xf]
      %v1774 = vld [vmem:[%s1768 + $0x14] sm:$0xf]
      %v1775 = vld [vmem:[%s1768 + $0x18] sm:$0xf]
      %v1776 = vld [vmem:[%s1768 + $0x1c] sm:$0xf]
      %v1777 = vld [vmem:[%s1768 + $0x20] sm:$0xf]
      %v1778 = vld [vmem:[%s1768 + $0x24] sm:$0xf]
      %v1779 = vld [vmem:[%s1768 + $0x28] sm:$0xf]
      %v1780 = vld [vmem:[%s1768 + $0x2c] sm:$0xf]
      %v1781 = vld [vmem:[%s1768 + $0x30] sm:$0xf]
      %v1782 = vld [vmem:[%s1768 + $0x34] sm:$0xf]
      %v1783 = vld [vmem:[%s1768 + $0x38] sm:$0xf]
      %v1784 = vld [vmem:[%s1768 + $0x3c] sm:$0xf]
      %v1785 = vunpack.c.l.b16 %v1739
      %v1786 = vunpack.c.l.b16 %v1743
      %v1787 = vunpack.c.l.b16 %v1747
      %v1788 = vunpack.c.l.b16 %v1751
      %v1789 = vunpack.c.l.b16 %v1755
      %v1790 = vunpack.c.l.b16 %v1759
      %v1791 = vunpack.c.l.b16 %v1763
      %v1792 = vunpack.c.l.b16 %v1767
      %v1793 = vpack.c.b16 %v1786, %v1785
      %v1794 = vpack.c.b16 %v1788, %v1787
      %v1795 = vpack.c.b16 %v1790, %v1789
      %v1796 = vpack.c.b16 %v1792, %v1791
      %v1817 = vunpack.c.l.b16 %v1769
      %v1818 = vunpack.c.l.b16 %v1770
      %v1819 = vunpack.c.l.b16 %v1771
      %v1820 = vunpack.c.l.b16 %v1772
      %v1821 = vunpack.c.l.b16 %v1773
      %v1822 = vunpack.c.l.b16 %v1774
      %v1823 = vunpack.c.l.b16 %v1775
      %v1824 = vunpack.c.l.b16 %v1776
      %v1825 = vunpack.c.l.b16 %v1777
      %v1826 = vunpack.c.l.b16 %v1778
      %v1827 = vunpack.c.l.b16 %v1779
      %v1828 = vunpack.c.l.b16 %v1780
      %v1829 = vunpack.c.l.b16 %v1781
      %v1830 = vunpack.c.l.b16 %v1782
      %v1831 = vunpack.c.l.b16 %v1783
      %v1832 = vunpack.c.l.b16 %v1784
      %v1833 = vpack.c.b16 %v1818, %v1817
      %v1834 = vpack.c.b16 %v1820, %v1819
      %v1835 = vpack.c.b16 %v1822, %v1821
      %v1836 = vpack.c.b16 %v1824, %v1823
      %v1837 = vpack.c.b16 %v1826, %v1825
      %v1838 = vpack.c.b16 %v1828, %v1827
      %v1839 = vpack.c.b16 %v1830, %v1829
      %v1840 = vpack.c.b16 %v1832, %v1831
      %1849 = vmatpush.bf16.msra.mxu0 %v1840
      %1850 = vmatpush.bf16.msra.mxu0 %v1839
      %1851 = vmatpush.bf16.msra.mxu0 %v1838
      %1852 = vmatpush.bf16.msra.mxu0 %v1837
      %1853 = vmatpush.bf16.msra.mxu0 %v1836
      %1854 = vmatpush.bf16.msra.mxu0 %v1835
      %1855 = vmatpush.bf16.msra.mxu0 %v1834
      %1856 = vmatpush.bf16.msra.mxu0 %v1833
      %1857 = vmatmul.bf16.gmra.mxu0 %v1793
      %v1858 = vpop.f32.mrf.mxu0
      %v1859 = vadd.f32 0.0, %v1858
      %v1860 = vpop.f32.mrf.mxu0
      %v1861 = vadd.f32 0.0, %v1860
      %1862 = vmatmul.bf16.gmra.mxu0 %v1794
      %v1863 = vpop.f32.mrf.mxu0
      %v1864 = vadd.f32 0.0, %v1863
      %v1865 = vpop.f32.mrf.mxu0
      %v1866 = vadd.f32 0.0, %v1865
      %1867 = vmatmul.bf16.gmra.mxu0 %v1795
      %v1868 = vpop.f32.mrf.mxu0
      %v1869 = vadd.f32 0.0, %v1868
      %v1870 = vpop.f32.mrf.mxu0
      %v1871 = vadd.f32 0.0, %v1870
      %1872 = vmatmul.bf16.gmra.mxu0 %v1796
      %v1873 = vpop.f32.mrf.mxu0
      %v1874 = vadd.f32 0.0, %v1873
      %v1875 = vpop.f32.mrf.mxu0
      %v1876 = vadd.f32 0.0, %v1875
      %1877 = vdwg.mxu0
      %v1878 = vadd.f32 %v1704, %v1859
      %v1879 = vadd.f32 %v1705, %v1861
      %v1880 = vadd.f32 %v1706, %v1864
      %v1881 = vadd.f32 %v1707, %v1866
      %v1882 = vadd.f32 %v1708, %v1869
      %v1883 = vadd.f32 %v1709, %v1871
      %v1884 = vadd.f32 %v1710, %v1874
      %v1885 = vadd.f32 %v1711, %v1876
      %s1886 = scalar_lea.vmem [#allocation2], 16
      %v1887 = vld [vmem:[%s1886] sm:$0xf]
      %v1888 = vld [vmem:[%s1886 + $0x8] sm:$0xf]
      %v1889 = vld [vmem:[%s1886 + $0x10] sm:$0xf]
      %v1890 = vld [vmem:[%s1886 + $0x18] sm:$0xf]
      %v1891 = vld [vmem:[%s1886 + $0x20] sm:$0xf]
      %v1892 = vld [vmem:[%s1886 + $0x28] sm:$0xf]
      %v1893 = vld [vmem:[%s1886 + $0x30] sm:$0xf]
      %v1894 = vld [vmem:[%s1886 + $0x38] sm:$0xf]
      %s1895 = scalar_lea.vmem %s3, 384
      %v1896 = vld [vmem:[%s1895] sm:$0xf]
      %v1897 = vld [vmem:[%s1895 + $0x4] sm:$0xf]
      %v1898 = vld [vmem:[%s1895 + $0x8] sm:$0xf]
      %v1899 = vld [vmem:[%s1895 + $0xc] sm:$0xf]
      %v1900 = vld [vmem:[%s1895 + $0x10] sm:$0xf]
      %v1901 = vld [vmem:[%s1895 + $0x14] sm:$0xf]
      %v1902 = vld [vmem:[%s1895 + $0x18] sm:$0xf]
      %v1903 = vld [vmem:[%s1895 + $0x1c] sm:$0xf]
      %v1904 = vld [vmem:[%s1895 + $0x20] sm:$0xf]
      %v1905 = vld [vmem:[%s1895 + $0x24] sm:$0xf]
      %v1906 = vld [vmem:[%s1895 + $0x28] sm:$0xf]
      %v1907 = vld [vmem:[%s1895 + $0x2c] sm:$0xf]
      %v1908 = vld [vmem:[%s1895 + $0x30] sm:$0xf]
      %v1909 = vld [vmem:[%s1895 + $0x34] sm:$0xf]
      %v1910 = vld [vmem:[%s1895 + $0x38] sm:$0xf]
      %v1911 = vld [vmem:[%s1895 + $0x3c] sm:$0xf]
      %v1920 = vunpack.c.l.b16 %v1887
      %v1921 = vunpack.c.l.b16 %v1888
      %v1922 = vunpack.c.l.b16 %v1889
      %v1923 = vunpack.c.l.b16 %v1890
      %v1924 = vunpack.c.l.b16 %v1891
      %v1925 = vunpack.c.l.b16 %v1892
      %v1926 = vunpack.c.l.b16 %v1893
      %v1927 = vunpack.c.l.b16 %v1894
      %v1928 = vpack.c.b16 %v1921, %v1920
      %v1929 = vpack.c.b16 %v1923, %v1922
      %v1930 = vpack.c.b16 %v1925, %v1924
      %v1931 = vpack.c.b16 %v1927, %v1926
      %v1952 = vunpack.c.l.b16 %v1896
      %v1953 = vunpack.c.l.b16 %v1897
      %v1954 = vunpack.c.l.b16 %v1898
      %v1955 = vunpack.c.l.b16 %v1899
      %v1956 = vunpack.c.l.b16 %v1900
      %v1957 = vunpack.c.l.b16 %v1901
      %v1958 = vunpack.c.l.b16 %v1902
      %v1959 = vunpack.c.l.b16 %v1903
      %v1960 = vunpack.c.l.b16 %v1904
      %v1961 = vunpack.c.l.b16 %v1905
      %v1962 = vunpack.c.l.b16 %v1906
      %v1963 = vunpack.c.l.b16 %v1907
      %v1964 = vunpack.c.l.b16 %v1908
      %v1965 = vunpack.c.l.b16 %v1909
      %v1966 = vunpack.c.l.b16 %v1910
      %v1967 = vunpack.c.l.b16 %v1911
      %v1968 = vpack.c.b16 %v1953, %v1952
      %v1969 = vpack.c.b16 %v1955, %v1954
      %v1970 = vpack.c.b16 %v1957, %v1956
      %v1971 = vpack.c.b16 %v1959, %v1958
      %v1972 = vpack.c.b16 %v1961, %v1960
      %v1973 = vpack.c.b16 %v1963, %v1962
      %v1974 = vpack.c.b16 %v1965, %v1964
      %v1975 = vpack.c.b16 %v1967, %v1966
      %1984 = vmatpush.bf16.msra.mxu0 %v1975
      %1985 = vmatpush.bf16.msra.mxu0 %v1974
      %1986 = vmatpush.bf16.msra.mxu0 %v1973
      %1987 = vmatpush.bf16.msra.mxu0 %v1972
      %1988 = vmatpush.bf16.msra.mxu0 %v1971
      %1989 = vmatpush.bf16.msra.mxu0 %v1970
      %1990 = vmatpush.bf16.msra.mxu0 %v1969
      %1991 = vmatpush.bf16.msra.mxu0 %v1968
      %1992 = vmatmul.bf16.gmra.mxu0 %v1928
      %v1993 = vpop.f32.mrf.mxu0
      %v1994 = vadd.f32 0.0, %v1993
      %v1995 = vpop.f32.mrf.mxu0
      %v1996 = vadd.f32 0.0, %v1995
      %1997 = vmatmul.bf16.gmra.mxu0 %v1929
      %v1998 = vpop.f32.mrf.mxu0
      %v1999 = vadd.f32 0.0, %v1998
      %v2000 = vpop.f32.mrf.mxu0
      %v2001 = vadd.f32 0.0, %v2000
      %2002 = vmatmul.bf16.gmra.mxu0 %v1930
      %v2003 = vpop.f32.mrf.mxu0
      %v2004 = vadd.f32 0.0, %v2003
      %v2005 = vpop.f32.mrf.mxu0
      %v2006 = vadd.f32 0.0, %v2005
      %2007 = vmatmul.bf16.gmra.mxu0 %v1931
      %v2008 = vpop.f32.mrf.mxu0
      %v2009 = vadd.f32 0.0, %v2008
      %v2010 = vpop.f32.mrf.mxu0
      %v2011 = vadd.f32 0.0, %v2010
      %2012 = vdwg.mxu0
      %v2013 = vadd.f32 %v1878, %v1994
      %v2014 = vadd.f32 %v1879, %v1996
      %v2015 = vadd.f32 %v1880, %v1999
      %v2016 = vadd.f32 %v1881, %v2001
      %v2017 = vadd.f32 %v1882, %v2004
      %v2018 = vadd.f32 %v1883, %v2006
      %v2019 = vadd.f32 %v1884, %v2009
      %v2020 = vadd.f32 %v1885, %v2011
      %v2021 = vld [vmem:[%s1886] sm:$0xf]
      %v2022 = vld [vmem:[%s1886 + $0x4] sm:$0x1]
      %v2023 = vld [vmem:[%s1886 + $0x8] sm:$0xf]
      %v2024 = vld [vmem:[%s1886 + $0xc] sm:$0x1]
      %v2025 = vld [vmem:[%s1886 + $0x10] sm:$0xf]
      %v2026 = vld [vmem:[%s1886 + $0x14] sm:$0x1]
      %v2027 = vld [vmem:[%s1886 + $0x18] sm:$0xf]
      %v2028 = vld [vmem:[%s1886 + $0x1c] sm:$0x1]
      %v2029 = vld [vmem:[%s1886 + $0x20] sm:$0xf]
      %v2030 = vld [vmem:[%s1886 + $0x24] sm:$0x1]
      %v2031 = vld [vmem:[%s1886 + $0x28] sm:$0xf]
      %v2032 = vld [vmem:[%s1886 + $0x2c] sm:$0x1]
      %v2033 = vld [vmem:[%s1886 + $0x30] sm:$0xf]
      %v2034 = vld [vmem:[%s1886 + $0x34] sm:$0x1]
      %v2035 = vld [vmem:[%s1886 + $0x38] sm:$0xf]
      %v2036 = vld [vmem:[%s1886 + $0x3c] sm:$0x1]
      %v2038 = vshrl.u32 %v2021, 16
      %v2040 = vrot.slane %v2038, 4
      %v2041 = vshll.u32 %v2021, 16
      %v2043 = vrot.slane %v2041, 5
      %v2044 = vor.u32 %v2040, %v2043
      %v2045 = vrot.slane %v2044, 4
      %v2047 = vshll.u32 %v2022, 16
      %v2049 = vrot.slane %v2047, 5
      %v2050 = vsel %vm831, %v2045, %v2049
      %v2052 = vshrl.u32 %v2023, 16
      %v2054 = vrot.slane %v2052, 4
      %v2055 = vshll.u32 %v2023, 16
      %v2057 = vrot.slane %v2055, 5
      %v2058 = vor.u32 %v2054, %v2057
      %v2059 = vrot.slane %v2058, 4
      %v2061 = vshll.u32 %v2024, 16
      %v2063 = vrot.slane %v2061, 5
      %v2064 = vsel %vm831, %v2059, %v2063
      %v2066 = vshrl.u32 %v2025, 16
      %v2068 = vrot.slane %v2066, 4
      %v2069 = vshll.u32 %v2025, 16
      %v2071 = vrot.slane %v2069, 5
      %v2072 = vor.u32 %v2068, %v2071
      %v2073 = vrot.slane %v2072, 4
      %v2075 = vshll.u32 %v2026, 16
      %v2077 = vrot.slane %v2075, 5
      %v2078 = vsel %vm831, %v2073, %v2077
      %v2080 = vshrl.u32 %v2027, 16
      %v2082 = vrot.slane %v2080, 4
      %v2083 = vshll.u32 %v2027, 16
      %v2085 = vrot.slane %v2083, 5
      %v2086 = vor.u32 %v2082, %v2085
      %v2087 = vrot.slane %v2086, 4
      %v2089 = vshll.u32 %v2028, 16
      %v2091 = vrot.slane %v2089, 5
      %v2092 = vsel %vm831, %v2087, %v2091
      %v2094 = vshrl.u32 %v2029, 16
      %v2096 = vrot.slane %v2094, 4
      %v2097 = vshll.u32 %v2029, 16
      %v2099 = vrot.slane %v2097, 5
      %v2100 = vor.u32 %v2096, %v2099
      %v2101 = vrot.slane %v2100, 4
      %v2103 = vshll.u32 %v2030, 16
      %v2105 = vrot.slane %v2103, 5
      %v2106 = vsel %vm831, %v2101, %v2105
      %v2108 = vshrl.u32 %v2031, 16
      %v2110 = vrot.slane %v2108, 4
      %v2111 = vshll.u32 %v2031, 16
      %v2113 = vrot.slane %v2111, 5
      %v2114 = vor.u32 %v2110, %v2113
      %v2115 = vrot.slane %v2114, 4
      %v2117 = vshll.u32 %v2032, 16
      %v2119 = vrot.slane %v2117, 5
      %v2120 = vsel %vm831, %v2115, %v2119
      %v2122 = vshrl.u32 %v2033, 16
      %v2124 = vrot.slane %v2122, 4
      %v2125 = vshll.u32 %v2033, 16
      %v2127 = vrot.slane %v2125, 5
      %v2128 = vor.u32 %v2124, %v2127
      %v2129 = vrot.slane %v2128, 4
      %v2131 = vshll.u32 %v2034, 16
      %v2133 = vrot.slane %v2131, 5
      %v2134 = vsel %vm831, %v2129, %v2133
      %v2136 = vshrl.u32 %v2035, 16
      %v2138 = vrot.slane %v2136, 4
      %v2139 = vshll.u32 %v2035, 16
      %v2141 = vrot.slane %v2139, 5
      %v2142 = vor.u32 %v2138, %v2141
      %v2143 = vrot.slane %v2142, 4
      %v2145 = vshll.u32 %v2036, 16
      %v2147 = vrot.slane %v2145, 5
      %v2148 = vsel %vm831, %v2143, %v2147
      %s2149 = scalar_lea.vmem %s3, 448
      %v2150 = vld [vmem:[%s2149] sm:$0xf]
      %v2151 = vld [vmem:[%s2149 + $0x4] sm:$0xf]
      %v2152 = vld [vmem:[%s2149 + $0x8] sm:$0xf]
      %v2153 = vld [vmem:[%s2149 + $0xc] sm:$0xf]
      %v2154 = vld [vmem:[%s2149 + $0x10] sm:$0xf]
      %v2155 = vld [vmem:[%s2149 + $0x14] sm:$0xf]
      %v2156 = vld [vmem:[%s2149 + $0x18] sm:$0xf]
      %v2157 = vld [vmem:[%s2149 + $0x1c] sm:$0xf]
      %v2158 = vld [vmem:[%s2149 + $0x20] sm:$0xf]
      %v2159 = vld [vmem:[%s2149 + $0x24] sm:$0xf]
      %v2160 = vld [vmem:[%s2149 + $0x28] sm:$0xf]
      %v2161 = vld [vmem:[%s2149 + $0x2c] sm:$0xf]
      %v2162 = vld [vmem:[%s2149 + $0x30] sm:$0xf]
      %v2163 = vld [vmem:[%s2149 + $0x34] sm:$0xf]
      %v2164 = vld [vmem:[%s2149 + $0x38] sm:$0xf]
      %v2165 = vld [vmem:[%s2149 + $0x3c] sm:$0xf]
      %v2166 = vunpack.c.l.b16 %v2050
      %v2167 = vunpack.c.l.b16 %v2064
      %v2168 = vunpack.c.l.b16 %v2078
      %v2169 = vunpack.c.l.b16 %v2092
      %v2170 = vunpack.c.l.b16 %v2106
      %v2171 = vunpack.c.l.b16 %v2120
      %v2172 = vunpack.c.l.b16 %v2134
      %v2173 = vunpack.c.l.b16 %v2148
      %v2174 = vpack.c.b16 %v2167, %v2166
      %v2175 = vpack.c.b16 %v2169, %v2168
      %v2176 = vpack.c.b16 %v2171, %v2170
      %v2177 = vpack.c.b16 %v2173, %v2172
      %v2198 = vunpack.c.l.b16 %v2150
      %v2199 = vunpack.c.l.b16 %v2151
      %v2200 = vunpack.c.l.b16 %v2152
      %v2201 = vunpack.c.l.b16 %v2153
      %v2202 = vunpack.c.l.b16 %v2154
      %v2203 = vunpack.c.l.b16 %v2155
      %v2204 = vunpack.c.l.b16 %v2156
      %v2205 = vunpack.c.l.b16 %v2157
      %v2206 = vunpack.c.l.b16 %v2158
      %v2207 = vunpack.c.l.b16 %v2159
      %v2208 = vunpack.c.l.b16 %v2160
      %v2209 = vunpack.c.l.b16 %v2161
      %v2210 = vunpack.c.l.b16 %v2162
      %v2211 = vunpack.c.l.b16 %v2163
      %v2212 = vunpack.c.l.b16 %v2164
      %v2213 = vunpack.c.l.b16 %v2165
      %v2214 = vpack.c.b16 %v2199, %v2198
      %v2215 = vpack.c.b16 %v2201, %v2200
      %v2216 = vpack.c.b16 %v2203, %v2202
      %v2217 = vpack.c.b16 %v2205, %v2204
      %v2218 = vpack.c.b16 %v2207, %v2206
      %v2219 = vpack.c.b16 %v2209, %v2208
      %v2220 = vpack.c.b16 %v2211, %v2210
      %v2221 = vpack.c.b16 %v2213, %v2212
      %2230 = vmatpush.bf16.msra.mxu0 %v2221
      %2231 = vmatpush.bf16.msra.mxu0 %v2220
      %2232 = vmatpush.bf16.msra.mxu0 %v2219
      %2233 = vmatpush.bf16.msra.mxu0 %v2218
      %2234 = vmatpush.bf16.msra.mxu0 %v2217
      %2235 = vmatpush.bf16.msra.mxu0 %v2216
      %2236 = vmatpush.bf16.msra.mxu0 %v2215
      %2237 = vmatpush.bf16.msra.mxu0 %v2214
      %2238 = vmatmul.bf16.gmra.mxu0 %v2174
      %v2239 = vpop.f32.mrf.mxu0
      %v2240 = vadd.f32 0.0, %v2239
      %v2241 = vpop.f32.mrf.mxu0
      %v2242 = vadd.f32 0.0, %v2241
      %2243 = vmatmul.bf16.gmra.mxu0 %v2175
      %v2244 = vpop.f32.mrf.mxu0
      %v2245 = vadd.f32 0.0, %v2244
      %v2246 = vpop.f32.mrf.mxu0
      %v2247 = vadd.f32 0.0, %v2246
      %2248 = vmatmul.bf16.gmra.mxu0 %v2176
      %v2249 = vpop.f32.mrf.mxu0
      %v2250 = vadd.f32 0.0, %v2249
      %v2251 = vpop.f32.mrf.mxu0
      %v2252 = vadd.f32 0.0, %v2251
      %2253 = vmatmul.bf16.gmra.mxu0 %v2177
      %v2254 = vpop.f32.mrf.mxu0
      %v2255 = vadd.f32 0.0, %v2254
      %v2256 = vpop.f32.mrf.mxu0
      %v2257 = vadd.f32 0.0, %v2256
      %2258 = vdwg.mxu0
      %v2259 = vadd.f32 %v2013, %v2240
      %v2260 = vadd.f32 %v2014, %v2242
      %v2261 = vadd.f32 %v2015, %v2245
      %v2262 = vadd.f32 %v2016, %v2247
      %v2263 = vadd.f32 %v2017, %v2250
      %v2264 = vadd.f32 %v2018, %v2252
      %v2265 = vadd.f32 %v2019, %v2255
      %v2266 = vadd.f32 %v2020, %v2257
      %v2267 = vld [vmem:[%s1886] sm:$0xe]
      %v2268 = vld [vmem:[%s1886 + $0x8] sm:$0xe]
      %v2269 = vld [vmem:[%s1886 + $0x10] sm:$0xe]
      %v2270 = vld [vmem:[%s1886 + $0x18] sm:$0xe]
      %v2271 = vld [vmem:[%s1886 + $0x20] sm:$0xe]
      %v2272 = vld [vmem:[%s1886 + $0x28] sm:$0xe]
      %v2273 = vld [vmem:[%s1886 + $0x30] sm:$0xe]
      %v2274 = vld [vmem:[%s1886 + $0x38] sm:$0xe]
      %v2291 = vrot.slane %v2267, 5
      %v2292 = vrot.slane %v2291, 4
      %v2293 = vrot.slane %v2022, 5
      %v2294 = vsel %vm1181, %v2292, %v2293
      %v2295 = vrot.slane %v2268, 5
      %v2296 = vrot.slane %v2295, 4
      %v2297 = vrot.slane %v2024, 5
      %v2298 = vsel %vm1181, %v2296, %v2297
      %v2299 = vrot.slane %v2269, 5
      %v2300 = vrot.slane %v2299, 4
      %v2301 = vrot.slane %v2026, 5
      %v2302 = vsel %vm1181, %v2300, %v2301
      %v2303 = vrot.slane %v2270, 5
      %v2304 = vrot.slane %v2303, 4
      %v2305 = vrot.slane %v2028, 5
      %v2306 = vsel %vm1181, %v2304, %v2305
      %v2307 = vrot.slane %v2271, 5
      %v2308 = vrot.slane %v2307, 4
      %v2309 = vrot.slane %v2030, 5
      %v2310 = vsel %vm1181, %v2308, %v2309
      %v2311 = vrot.slane %v2272, 5
      %v2312 = vrot.slane %v2311, 4
      %v2313 = vrot.slane %v2032, 5
      %v2314 = vsel %vm1181, %v2312, %v2313
      %v2315 = vrot.slane %v2273, 5
      %v2316 = vrot.slane %v2315, 4
      %v2317 = vrot.slane %v2034, 5
      %v2318 = vsel %vm1181, %v2316, %v2317
      %v2319 = vrot.slane %v2274, 5
      %v2320 = vrot.slane %v2319, 4
      %v2321 = vrot.slane %v2036, 5
      %v2322 = vsel %vm1181, %v2320, %v2321
      %s2323 = scalar_lea.vmem %s3, 512
      %v2324 = vld [vmem:[%s2323] sm:$0xf]
      %v2325 = vld [vmem:[%s2323 + $0x4] sm:$0xf]
      %v2326 = vld [vmem:[%s2323 + $0x8] sm:$0xf]
      %v2327 = vld [vmem:[%s2323 + $0xc] sm:$0xf]
      %v2328 = vld [vmem:[%s2323 + $0x10] sm:$0xf]
      %v2329 = vld [vmem:[%s2323 + $0x14] sm:$0xf]
      %v2330 = vld [vmem:[%s2323 + $0x18] sm:$0xf]
      %v2331 = vld [vmem:[%s2323 + $0x1c] sm:$0xf]
      %v2332 = vld [vmem:[%s2323 + $0x20] sm:$0xf]
      %v2333 = vld [vmem:[%s2323 + $0x24] sm:$0xf]
      %v2334 = vld [vmem:[%s2323 + $0x28] sm:$0xf]
      %v2335 = vld [vmem:[%s2323 + $0x2c] sm:$0xf]
      %v2336 = vld [vmem:[%s2323 + $0x30] sm:$0xf]
      %v2337 = vld [vmem:[%s2323 + $0x34] sm:$0xf]
      %v2338 = vld [vmem:[%s2323 + $0x38] sm:$0xf]
      %v2339 = vld [vmem:[%s2323 + $0x3c] sm:$0xf]
      %v2340 = vunpack.c.l.b16 %v2294
      %v2341 = vunpack.c.l.b16 %v2298
      %v2342 = vunpack.c.l.b16 %v2302
      %v2343 = vunpack.c.l.b16 %v2306
      %v2344 = vunpack.c.l.b16 %v2310
      %v2345 = vunpack.c.l.b16 %v2314
      %v2346 = vunpack.c.l.b16 %v2318
      %v2347 = vunpack.c.l.b16 %v2322
      %v2348 = vpack.c.b16 %v2341, %v2340
      %v2349 = vpack.c.b16 %v2343, %v2342
      %v2350 = vpack.c.b16 %v2345, %v2344
      %v2351 = vpack.c.b16 %v2347, %v2346
      %v2372 = vunpack.c.l.b16 %v2324
      %v2373 = vunpack.c.l.b16 %v2325
      %v2374 = vunpack.c.l.b16 %v2326
      %v2375 = vunpack.c.l.b16 %v2327
      %v2376 = vunpack.c.l.b16 %v2328
      %v2377 = vunpack.c.l.b16 %v2329
      %v2378 = vunpack.c.l.b16 %v2330
      %v2379 = vunpack.c.l.b16 %v2331
      %v2380 = vunpack.c.l.b16 %v2332
      %v2381 = vunpack.c.l.b16 %v2333
      %v2382 = vunpack.c.l.b16 %v2334
      %v2383 = vunpack.c.l.b16 %v2335
      %v2384 = vunpack.c.l.b16 %v2336
      %v2385 = vunpack.c.l.b16 %v2337
      %v2386 = vunpack.c.l.b16 %v2338
      %v2387 = vunpack.c.l.b16 %v2339
      %v2388 = vpack.c.b16 %v2373, %v2372
      %v2389 = vpack.c.b16 %v2375, %v2374
      %v2390 = vpack.c.b16 %v2377, %v2376
      %v2391 = vpack.c.b16 %v2379, %v2378
      %v2392 = vpack.c.b16 %v2381, %v2380
      %v2393 = vpack.c.b16 %v2383, %v2382
      %v2394 = vpack.c.b16 %v2385, %v2384
      %v2395 = vpack.c.b16 %v2387, %v2386
      %2404 = vmatpush.bf16.msra.mxu0 %v2395
      %2405 = vmatpush.bf16.msra.mxu0 %v2394
      %2406 = vmatpush.bf16.msra.mxu0 %v2393
      %2407 = vmatpush.bf16.msra.mxu0 %v2392
      %2408 = vmatpush.bf16.msra.mxu0 %v2391
      %2409 = vmatpush.bf16.msra.mxu0 %v2390
      %2410 = vmatpush.bf16.msra.mxu0 %v2389
      %2411 = vmatpush.bf16.msra.mxu0 %v2388
      %2412 = vmatmul.bf16.gmra.mxu0 %v2348
      %v2413 = vpop.f32.mrf.mxu0
      %v2414 = vadd.f32 0.0, %v2413
      %v2415 = vpop.f32.mrf.mxu0
      %v2416 = vadd.f32 0.0, %v2415
      %2417 = vmatmul.bf16.gmra.mxu0 %v2349
      %v2418 = vpop.f32.mrf.mxu0
      %v2419 = vadd.f32 0.0, %v2418
      %v2420 = vpop.f32.mrf.mxu0
      %v2421 = vadd.f32 0.0, %v2420
      %2422 = vmatmul.bf16.gmra.mxu0 %v2350
      %v2423 = vpop.f32.mrf.mxu0
      %v2424 = vadd.f32 0.0, %v2423
      %v2425 = vpop.f32.mrf.mxu0
      %v2426 = vadd.f32 0.0, %v2425
      %2427 = vmatmul.bf16.gmra.mxu0 %v2351
      %v2428 = vpop.f32.mrf.mxu0
      %v2429 = vadd.f32 0.0, %v2428
      %v2430 = vpop.f32.mrf.mxu0
      %v2431 = vadd.f32 0.0, %v2430
      %2432 = vdwg.mxu0
      %v2433 = vadd.f32 %v2259, %v2414
      %v2434 = vadd.f32 %v2260, %v2416
      %v2435 = vadd.f32 %v2261, %v2419
      %v2436 = vadd.f32 %v2262, %v2421
      %v2437 = vadd.f32 %v2263, %v2424
      %v2438 = vadd.f32 %v2264, %v2426
      %v2439 = vadd.f32 %v2265, %v2429
      %v2440 = vadd.f32 %v2266, %v2431
      %v2441 = vpack.c.bf16 %v2433, %v2433
      %v2442 = vpack.c.bf16 %v2434, %v2434
      %v2443 = vpack.c.bf16 %v2435, %v2435
      %v2444 = vpack.c.bf16 %v2436, %v2436
      %v2445 = vpack.c.bf16 %v2437, %v2437
      %v2446 = vpack.c.bf16 %v2438, %v2438
      %v2447 = vpack.c.bf16 %v2439, %v2439
      %v2448 = vpack.c.bf16 %v2440, %v2440
      %2449 = vst [vmem:[%s446] sm:$0xf] %v2441
      %2450 = vst [vmem:[%s446 + $0x4] sm:$0xf] %v2442
      %2451 = vst [vmem:[%s446 + $0x8] sm:$0xf] %v2443
      %2452 = vst [vmem:[%s446 + $0xc] sm:$0xf] %v2444
      %2453 = vst [vmem:[%s446 + $0x10] sm:$0xf] %v2445
      %2454 = vst [vmem:[%s446 + $0x14] sm:$0xf] %v2446
      %2455 = vst [vmem:[%s446 + $0x18] sm:$0xf] %v2447
      %2456 = vst [vmem:[%s446 + $0x1c] sm:$0xf] %v2448
      %v2457 = vadd.f32 %v2433, %v2434
      %v2458 = vadd.f32 %v2457, %v2435
      %v2459 = vadd.f32 %v2458, %v2436
      %v2460 = vadd.f32 %v2459, %v2437
      %v2461 = vadd.f32 %v2460, %v2438
      %v2462 = vadd.f32 %v2461, %v2439
      %v2463 = vadd.f32 %v2462, %v2440
      %v2464 = vrot.slane %v2463, 4
      %v2465 = vadd.f32 %v2463, %v2464
      %v2466 = vrot.slane %v2465, 2
      %v2467 = vadd.f32 %v2465, %v2466
      %v2468 = vrot.slane %v2467, 1
      %v2469 = vadd.f32 %v2467, %v2468
      %2470 = vst [vmem:[%s454] sm:$0x1] %v2469
      %v2471 = vmul.f32 %v2433, %v2433
      %v2472 = vmul.f32 %v2434, %v2434
      %v2473 = vmul.f32 %v2435, %v2435
      %v2474 = vmul.f32 %v2436, %v2436
      %v2475 = vmul.f32 %v2437, %v2437
      %v2476 = vmul.f32 %v2438, %v2438
      %v2477 = vmul.f32 %v2439, %v2439
      %v2478 = vmul.f32 %v2440, %v2440
      %v2479 = vadd.f32 %v2471, %v2472
      %v2480 = vadd.f32 %v2479, %v2473
      %v2481 = vadd.f32 %v2480, %v2474
      %v2482 = vadd.f32 %v2481, %v2475
      %v2483 = vadd.f32 %v2482, %v2476
      %v2484 = vadd.f32 %v2483, %v2477
      %v2485 = vadd.f32 %v2484, %v2478
      %v2486 = vrot.slane %v2485, 4
      %v2487 = vadd.f32 %v2485, %v2486
      %v2488 = vrot.slane %v2487, 2
      %v2489 = vadd.f32 %v2487, %v2488
      %v2490 = vrot.slane %v2489, 1
      %v2491 = vadd.f32 %v2489, %v2490
      %2492 = vst [vmem:[%s454 + $0x1] sm:$0x1] %v2491
      %s2493 = smul.u32 8, %s24
      %p2494 = scmp.lt.s32.totalorder %s23, 1
      %s2495 = scalar_select %p2494, %s23, 1
      %p2496 = scmp.lt.s32.totalorder %s2493, 7
      %s2497 = scalar_select %p2496, %s2493, 7
      %s2498 = smul.addr %s2495, 8
      %s2499 = sadd.s32 %s2497, %s2498
      %s2500 = smul.addr %s2499, 4
      %s2501 = scalar_lea.vmem %s6, %s2500
      %p2502 = scmp.lt.s32.totalorder %s23, 1
      %s2503 = scalar_select %p2502, %s23, 1
      %p2504 = scmp.lt.s32.totalorder %s24, 0
      %s2505 = scalar_select %p2504, %s24, 0
      %s2506 = sadd.s32 %s2505, %s2503
      %s2507 = smul.addr %s2506, 2
      %s2508 = scalar_lea.vmem %s7, %s2507
      // Predicated region
      $region61: #{down_forward.4} parent=43 // pred_check
        %p2509 = pneg %p214
      $region62: #{down_forward.4} parent=43 // pred_check_branch
        %2511 = sbr.rel (%p2509) target = $region64
      $region63: #{down_forward.4} parent=43 // pred_region
        %s2512 = smul.u32 8, %s24
      $region64: #{down_forward.4} parent=43 // pred_fallthru
        _
      // Predicated region
      $region65: #{down_forward.4} parent=43 // pred_check
        %p2513 = pneg %p242
      $region66: #{down_forward.4} parent=43 // pred_check_branch
        %2515 = sbr.rel (%p2513) target = $region68
      $region67: #{down_forward.4} parent=43 // pred_region
        _
      $region68: #{down_forward.4} parent=43 // pred_fallthru
        _
    $region44: #{down_forward.4} parent=5 // pred_fallthru
      _
    %p2516 = scmp.le.s32.totalorder 2, %s14
    // Predicated region
    $region69: #{down_forward.4} parent=5 // pred_check
      %p2517 = pneg %p2516
    $region70: #{down_forward.4} parent=5 // pred_check_branch
      %2519 = sbr.rel (%p2517) target = $region72
    $region71: #{down_forward.4} parent=5 // pred_region
      %s2520 = ssub.s32 %s14, 2
      // Predicated region
      $region73: #{down_forward.4} parent=71 // pred_check
        %p2521 = pneg %p220
      $region74: #{down_forward.4} parent=71 // pred_check_branch
        %2523 = sbr.rel (%p2521) target = $region76
      $region75: #{down_forward.4} parent=71 // pred_region
        %s2524 = smul.u32 8, %s26
        %p2525 = scmp.lt.s32.totalorder %s25, 1
        %s2526 = scalar_select %p2525, %s25, 1
        %p2527 = scmp.lt.s32.totalorder %s2524, 7
        %s2528 = scalar_select %p2527, %s2524, 7
        %s2529 = smul.addr %s2526, 8
        %s2530 = sadd.s32 %s2528, %s2529
        %s2531 = smul.addr %s2530, 4
        %s2532 = scalar_lea.vmem %s6, %s2531
      $region76: #{down_forward.4} parent=71 // pred_fallthru
        _
      // Predicated region
      $region77: #{down_forward.4} parent=71 // pred_check
        %p2533 = pneg %p248
      $region78: #{down_forward.4} parent=71 // pred_check_branch
        %2535 = sbr.rel (%p2533) target = $region80
      $region79: #{down_forward.4} parent=71 // pred_region
        %p2536 = scmp.lt.s32.totalorder %s25, 1
        %s2537 = scalar_select %p2536, %s25, 1
        %p2538 = scmp.lt.s32.totalorder %s26, 0
        %s2539 = scalar_select %p2538, %s26, 0
        %s2540 = sadd.s32 %s2539, %s2537
        %s2541 = smul.addr %s2540, 2
        %s2542 = scalar_lea.vmem %s7, %s2541
      $region80: #{down_forward.4} parent=71 // pred_fallthru
        _
    $region72: #{down_forward.4} parent=5 // pred_fallthru
      _
  $region6: #{down_forward.4} parent=0 // loop_footer
    %s18 = sadd.s32 1, %s14
  $region7: #{down_forward.4} parent=0 // loop_footer_branch
    %13 = sbr.rel target = $region3
  $region8: #{down_forward.4} parent=0 // loop_exit
    _

</llo_original>
